<compile_context>
chip_gen: v5e
topology: v5e:2x2
jax: 0.10.0
libtpu: 0.0.40
codegen_flags: <defaults>
</compile_context>

<pallas_src>
import functools

import numpy as np
import jax
import jax.numpy as jnp
from jax.experimental import pallas as pl
from jax.experimental.pallas import tpu as pltpu


# ----------------------------- static shape plan -----------------------------

def _stage_dims(hin, win):
    """Conv2d(k=2, s=2, p=2) output extent, then MaxPool2d(2) output extent."""
    hc = (hin + 2) // 2 + 1
    wc = (win + 2) // 2 + 1
    return hc, wc, hc // 2, wc // 2


def _stage1_patch_quadrants(x_nhwc):
    """im2col for Conv2d(k=2,s=2,p=2), restricted to the conv positions MaxPool2d(2)
    keeps, grouped by pool-window quadrant -> (4, B*Hp*Wp, 4*Cin)."""
    B, H, W, C = x_nhwc.shape
    Hc, Wc, Hp, Wp = _stage_dims(H, W)
    xp = jnp.pad(x_nhwc, ((0, 0), (2, 2 * Hc - H - 2), (2, 2 * Wc - W - 2), (0, 0)))
    pt = xp.reshape(B, Hc, 2, Wc, 2, C).transpose(0, 1, 3, 2, 4, 5)   # (B,Hc,Wc,kh,kw,C)
    pt = pt[:, : 2 * Hp, : 2 * Wp]
    pt = pt.reshape(B, Hp, 2, Wp, 2, 2, 2, C).transpose(2, 4, 0, 1, 3, 5, 6, 7)
    return pt.reshape(4, B * Hp * Wp, 4 * C)


def _conv_select(B, Hin, Win, Hc, Wc):
    """S[t] (t=kh*2+kw): (B*Hc*Wc, B*Hin*Win) 0/1 matrix picking the (padding=2)
    input pixel feeding conv tap (kh,kw) at each conv output position (zero row if OOB)."""
    S = np.zeros((4, B * Hc * Wc, B * Hin * Win), np.float32)
    for kh in range(2):
        for kw in range(2):
            t = kh * 2 + kw
            for b in range(B):
                for ci in range(Hc):
                    for cj in range(Wc):
                        ii, jj = 2 * ci + kh - 2, 2 * cj + kw - 2
                        if 0 <= ii < Hin and 0 <= jj < Win:
                            S[t, (b * Hc + ci) * Wc + cj, (b * Hin + ii) * Win + jj] = 1.0
    return S


def _pool_select(B, Hc, Wc, Hp, Wp):
    """P[q] (q=di*2+dj): (B*Hp*Wp, B*Hc*Wc) 0/1 matrix picking pool-window member (di,dj)."""
    P = np.zeros((4, B * Hp * Wp, B * Hc * Wc), np.float32)
    for di in range(2):
        for dj in range(2):
            q = di * 2 + dj
            for b in range(B):
                for pi in range(Hp):
                    for pj in range(Wp):
                        r = (b * Hp + pi) * Wp + pj
                        c = (b * Hc + (2 * pi + di)) * Wc + (2 * pj + dj)
                        P[q, r, c] = 1.0
    return P


def _final_pool_select(B, Hc, Wc, Hp, Wp):
    """Final pool, split per final spatial position s = pi*Wp+pj (so the NCHW flatten
    can be folded into fc1): (Hp*Wp*4, B, B*Hc*Wc)."""
    P = np.zeros((Hp * Wp, 4, B, B * Hc * Wc), np.float32)
    for pi in range(Hp):
        for pj in range(Wp):
            s = pi * Wp + pj
            for di in range(2):
                for dj in range(2):
                    q = di * 2 + dj
                    for b in range(B):
                        c = (b * Hc + (2 * pi + di)) * Wc + (2 * pj + dj)
                        P[s, q, b, c] = 1.0
    return P.reshape(Hp * Wp * 4, B, B * Hc * Wc)


# ------------------------------- fused kernel --------------------------------

def _siamese_fused_kernel(
        patches_ref,                                           # (4, M, 4*Cin)
        w1_ref, b1_ref, s1_ref, t1_ref,                        # stage 1
        sel2_ref, w2_ref, b2_ref, pool2_ref, s2_ref, t2_ref,   # stage 2
        sel3_ref, w3_ref, b3_ref, pool3_ref, s3_ref, t3_ref,   # stage 3
        wf1_ref, bf1_ref, wf2_ref, bf2_ref, wf3_ref, bf3_ref,  # fc head
        out_ref,                                               # (B, 4)
        *, nsp):
    f32 = jnp.float32

    # ---- stage 1: Conv(22->16, k2 s2 p2) + ReLU, fused with MaxPool(2) + BN ----
    w1 = w1_ref[...]
    b1 = b1_ref[...]
    pooled = None
    for q in range(4):                       # 4 pool-window members = 4 conv positions
        c = jnp.dot(patches_ref[q], w1, preferred_element_type=f32) + b1
        c = jnp.maximum(c, 0.0)
        pooled = c if pooled is None else jnp.maximum(pooled, c)
    y = pooled * s1_ref[...] + t1_ref[...]   # (B*Hp1*Wp1, 16)

    # ---- stage 2: Conv(16->32) + ReLU + MaxPool(2) + BN (window gather via 0/1 matmuls) ----
    pre = b2_ref[...]
    for t in range(4):                       # 4 conv taps (kh, kw)
        g = jnp.dot(sel2_ref[t], y, preferred_element_type=f32)
        pre = pre + jnp.dot(g, w2_ref[t], preferred_element_type=f32)
    h = jnp.maximum(pre, 0.0)
    pooled = None
    for q in range(4):                       # elementwise max tree (VPU), no axis reduce
        v = jnp.dot(pool2_ref[q], h, preferred_element_type=f32)
        pooled = v if pooled is None else jnp.maximum(pooled, v)
    y = pooled * s2_ref[...] + t2_ref[...]   # (B*Hp2*Wp2, 32)

    # ---- stage 3: Conv(32->64) + ReLU ----
    pre = b3_ref[...]
    for t in range(4):
        g = jnp.dot(sel3_ref[t], y, preferred_element_type=f32)
        pre = pre + jnp.dot(g, w3_ref[t], preferred_element_type=f32)
    h = jnp.maximum(pre, 0.0)                # (B*Hc3*Wc3, 64)

    # ---- MaxPool(2) + BN + NCHW flatten folded into fc1 (Linear(128,100)) ----
    acc = bf1_ref[...]
    for s in range(nsp):
        pooled = None
        for q in range(4):
            v = jnp.dot(pool3_ref[s * 4 + q], h, preferred_element_type=f32)
            pooled = v if pooled is None else jnp.maximum(pooled, v)
        ys = pooled * s3_ref[...] + t3_ref[...]                    # (B, 64)
        acc = acc + jnp.dot(ys, wf1_ref[s], preferred_element_type=f32)
    h = jnp.maximum(acc, 0.0)                                      # ReLU
    # TODO(synk): nn.Dropout(p=0.5) is identity in eval mode; training-mode RNG dropout not implemented.
    h = jnp.dot(h, wf2_ref[...], preferred_element_type=f32) + bf2_ref[...]
    h = 1.0 / (1.0 + jnp.exp(-h))                                  # Sigmoid (exp -> EUP)
    out_ref[...] = jnp.dot(h, wf3_ref[...], preferred_element_type=f32) + bf3_ref[...]


# ------------------------------- full network --------------------------------

def siamese_forward(params, input1_nchw, input2_nchw):
    B, Cin, H, W = input1_nchw.shape

    # Both Siamese branches share weights -> single pass; branch axis = parallel grid axis.
    x = jnp.stack([input1_nchw, input2_nchw], axis=0).astype(jnp.float32)
    x = jnp.transpose(x, (0, 1, 3, 4, 2))                          # (2, B, H, W, Cin) NHWC
    patches = jax.vmap(_stage1_patch_quadrants)(x)                 # (2, 4, M, 4*Cin)
    _, _, M, K4 = patches.shape

    # Static shape plan.
    _, _, Hp1, Wp1 = _stage_dims(H, W)
    _, _, Hp2, Wp2 = _stage_dims(Hp1, Wp1)
    _, _, Hp3, Wp3 = _stage_dims(Hp2, Wp2)
    Hc2u, Wc2u, Hc3u, Wc3u = 2 * Hp2, 2 * Wp2, 2 * Hp3, 2 * Wp3
    nsp = Hp3 * Wp3
    assert params["fc_w1s"].shape[0] == nsp, "input spatial size incompatible with fc1 = Linear(128, 100)"

    # Trace-time 0/1 selection matrices (constants): conv-window gather w/ zero padding
    # and max-pool window membership expressed as tiny MXU matmuls inside the kernel.
    sel2 = jnp.asarray(_conv_select(B, Hp1, Wp1, Hc2u, Wc2u))
    pool2 = jnp.asarray(_pool_select(B, Hc2u, Wc2u, Hp2, Wp2))
    sel3 = jnp.asarray(_conv_select(B, Hp2, Wp2, Hc3u, Wc3u))
    pool3 = jnp.asarray(_final_pool_select(B, Hc3u, Wc3u, Hp3, Wp3))

    consts = (
        params["conv0_mat"], params["conv0_b"], params["bn0_scale"], params["bn0_shift"],
        sel2, params["conv1_taps"], params["conv1_b"], pool2, params["bn1_scale"], params["bn1_shift"],
        sel3, params["conv2_taps"], params["conv2_b"], pool3, params["bn2_scale"], params["bn2_shift"],
        params["fc_w1s"], params["fc_b1"], params["fc_w2T"], params["fc_b2"],
        params["fc_w3T"], params["fc_b3"],
    )

    def const_spec(a):
        # Full-array VMEM block; constant block index -> stays resident across grid steps.
        return pl.BlockSpec(a.shape, lambda i, nd=a.ndim: (0,) * nd)

    out = pl.pallas_call(
        functools.partial(_siamese_fused_kernel, nsp=nsp),
        out_shape=jax.ShapeDtypeStruct((2, B, 4), jnp.float32),
        grid=(2,),
        in_specs=[pl.BlockSpec((None, 4, M, K4), lambda i: (i, 0, 0, 0))]
                 + [const_spec(a) for a in consts],
        out_specs=pl.BlockSpec((None, B, 4), lambda i: (i, 0, 0)),
        compiler_params=pltpu.CompilerParams(dimension_semantics=("parallel",)),
    )(patches, *consts)
    return out[0], out[1]


# ------------------------------ parameter init -------------------------------

def init_params(key):
    """Random parameters in PyTorch layouts (Conv2d: (Cout,Cin,kh,kw); Linear: (out,in));
    BatchNorm is folded to eval-mode scale/shift."""
    keys = jax.random.split(key, 24)

    def n(k, shape, s=0.1):
        return (s * jax.random.normal(k, shape)).astype(jnp.float32)

    def u(k, shape, lo=0.5, hi=1.5):
        return jax.random.uniform(k, shape, jnp.float32, lo, hi)

    p = {}
    conv_dims = [(16, 22), (32, 16), (64, 32)]
    eps = 1e-5
    ki = 0
    for i, (co, ci) in enumerate(conv_dims):
        p[f"conv{i}_w"] = n(keys[ki], (co, ci, 2, 2)); ki += 1
        p[f"conv{i}_b"] = n(keys[ki], (co,), 0.01); ki += 1
        gamma = u(keys[ki], (co,)); ki += 1
        beta = n(keys[ki], (co,), 0.05); ki += 1
        rmean = n(keys[ki], (co,), 0.05); ki += 1
        rvar = u(keys[ki], (co,)); ki += 1
        scale = gamma / jnp.sqrt(rvar + eps)
        p[f"bn{i}_scale"] = scale
        p[f"bn{i}_shift"] = beta - rmean * scale
    p["fc_w1"] = n(keys[ki], (100, 128)); ki += 1
    p["fc_b1"] = n(keys[ki], (100,), 0.01); ki += 1
    p["fc_w2"] = n(keys[ki], (100, 100)); ki += 1
    p["fc_b2"] = n(keys[ki], (100,), 0.01); ki += 1
    p["fc_w3"] = n(keys[ki], (4, 100)); ki += 1
    p["fc_b3"] = n(keys[ki], (4,), 0.01); ki += 1
    return p


def prepare_params(p):
    """One-time layout prep (kept out of the traced forward): conv weights as im2col/tap
    matrices, fc weights pre-transposed, biases/BN as (1, C) rows, fc1 split per final
    spatial position so the NCHW flatten folds into fc1."""
    q = {}
    cin0, cout0 = p["conv0_w"].shape[1], p["conv0_w"].shape[0]
    q["conv0_mat"] = jnp.transpose(p["conv0_w"], (2, 3, 1, 0)).reshape(4 * cin0, cout0)
    for i in (1, 2):
        w = p[f"conv{i}_w"]
        q[f"conv{i}_taps"] = jnp.transpose(w, (2, 3, 1, 0)).reshape(4, w.shape[1], w.shape[0])
    for i in range(3):
        q[f"conv{i}_b"] = p[f"conv{i}_b"].reshape(1, -1)
        q[f"bn{i}_scale"] = p[f"bn{i}_scale"].reshape(1, -1)
        q[f"bn{i}_shift"] = p[f"bn{i}_shift"].reshape(1, -1)
    c_last = p["conv2_w"].shape[0]                       # 64 final channels
    w1t = p["fc_w1"].T                                   # (128, 100)
    nsp = w1t.shape[0] // c_last                         # final spatial positions (= 2)
    q["fc_w1s"] = w1t.reshape(c_last, nsp, w1t.shape[1]).transpose(1, 0, 2)
    q["fc_b1"] = p["fc_b1"].reshape(1, -1)
    q["fc_w2T"] = p["fc_w2"].T
    q["fc_b2"] = p["fc_b2"].reshape(1, -1)
    q["fc_w3T"] = p["fc_w3"].T
    q["fc_b3"] = p["fc_b3"].reshape(1, -1)
    return q


if __name__ == "__main__":
    key = jax.random.PRNGKey(0)
    pkey, k1, k2 = jax.random.split(key, 3)
    params = prepare_params(init_params(pkey))

    # Input spatial size chosen so the flattened CNN output is exactly 128 features,
    # as required by fc1 = Linear(128, 100):
    # (H, W) = (16, 44): 10x24 -> 5x12 -> 4x8 -> 2x4 -> 3x4 -> 1x2 ; 64*1*2 = 128.
    x1 = jax.random.normal(k1, (2, 22, 16, 44), jnp.float32)
    x2 = jax.random.normal(k2, (2, 22, 16, 44), jnp.float32)

    out1, out2 = jax.jit(siamese_forward)(params, x1, x2)
    jax.block_until_ready((out1, out2))
    assert out1.shape == (2, 4) and out2.shape == (2, 4)
    assert out1.dtype == jnp.float32 and out2.dtype == jnp.float32
    print("KERNEL_OK")
</pallas_src>

<mosaic_0001>
module attributes {stable_mosaic.version = 11 : i64} {
  func.func @_siamese_fused_kernel(%arg0: i32, %arg1: memref<1x4x120x88xf32, #tpu.memory_space<vmem>>, %arg2: memref<88x16xf32, #tpu.memory_space<vmem>>, %arg3: memref<1x16xf32, #tpu.memory_space<vmem>>, %arg4: memref<1x16xf32, #tpu.memory_space<vmem>>, %arg5: memref<1x16xf32, #tpu.memory_space<vmem>>, %arg6: memref<4x64x120xf32, #tpu.memory_space<vmem>>, %arg7: memref<4x16x32xf32, #tpu.memory_space<vmem>>, %arg8: memref<1x32xf32, #tpu.memory_space<vmem>>, %arg9: memref<4x16x64xf32, #tpu.memory_space<vmem>>, %arg10: memref<1x32xf32, #tpu.memory_space<vmem>>, %arg11: memref<1x32xf32, #tpu.memory_space<vmem>>, %arg12: memref<4x16x16xf32, #tpu.memory_space<vmem>>, %arg13: memref<4x32x64xf32, #tpu.memory_space<vmem>>, %arg14: memref<1x64xf32, #tpu.memory_space<vmem>>, %arg15: memref<8x2x16xf32, #tpu.memory_space<vmem>>, %arg16: memref<1x64xf32, #tpu.memory_space<vmem>>, %arg17: memref<1x64xf32, #tpu.memory_space<vmem>>, %arg18: memref<2x64x100xf32, #tpu.memory_space<vmem>>, %arg19: memref<1x100xf32, #tpu.memory_space<vmem>>, %arg20: memref<100x100xf32, #tpu.memory_space<vmem>>, %arg21: memref<1x100xf32, #tpu.memory_space<vmem>>, %arg22: memref<100x4xf32, #tpu.memory_space<vmem>>, %arg23: memref<1x4xf32, #tpu.memory_space<vmem>>, %arg24: memref<1x2x4xf32, #tpu.memory_space<vmem>>) attributes {dimension_semantics = [#tpu.dimension_semantics<parallel>], iteration_bounds = array<i64: 2>, scalar_prefetch = 0 : i64, scratch_operands = 0 : i64, tpu.core_type = #tpu.core_type<tc>, window_params = [{transform_indices = @transform_0, window_bounds = array<i64: 1, 4, 120, 88>}, {pipeline_mode = #tpu.pipeline_mode<synchronous>, transform_indices = @transform_1, window_bounds = array<i64: 88, 16>}, {pipeline_mode = #tpu.pipeline_mode<synchronous>, transform_indices = @transform_2, window_bounds = array<i64: 1, 16>}, {pipeline_mode = #tpu.pipeline_mode<synchronous>, transform_indices = @transform_3, window_bounds = array<i64: 1, 16>}, {pipeline_mode = #tpu.pipeline_mode<synchronous>, transform_indices = @transform_4, window_bounds = array<i64: 1, 16>}, {pipeline_mode = #tpu.pipeline_mode<synchronous>, transform_indices = @transform_5, window_bounds = array<i64: 4, 64, 120>}, {pipeline_mode = #tpu.pipeline_mode<synchronous>, transform_indices = @transform_6, window_bounds = array<i64: 4, 16, 32>}, {pipeline_mode = #tpu.pipeline_mode<synchronous>, transform_indices = @transform_7, window_bounds = array<i64: 1, 32>}, {pipeline_mode = #tpu.pipeline_mode<synchronous>, transform_indices = @transform_8, window_bounds = array<i64: 4, 16, 64>}, {pipeline_mode = #tpu.pipeline_mode<synchronous>, transform_indices = @transform_9, window_bounds = array<i64: 1, 32>}, {pipeline_mode = #tpu.pipeline_mode<synchronous>, transform_indices = @transform_10, window_bounds = array<i64: 1, 32>}, {pipeline_mode = #tpu.pipeline_mode<synchronous>, transform_indices = @transform_11, window_bounds = array<i64: 4, 16, 16>}, {pipeline_mode = #tpu.pipeline_mode<synchronous>, transform_indices = @transform_12, window_bounds = array<i64: 4, 32, 64>}, {pipeline_mode = #tpu.pipeline_mode<synchronous>, transform_indices = @transform_13, window_bounds = array<i64: 1, 64>}, {pipeline_mode = #tpu.pipeline_mode<synchronous>, transform_indices = @transform_14, window_bounds = array<i64: 8, 2, 16>}, {pipeline_mode = #tpu.pipeline_mode<synchronous>, transform_indices = @transform_15, window_bounds = array<i64: 1, 64>}, {pipeline_mode = #tpu.pipeline_mode<synchronous>, transform_indices = @transform_16, window_bounds = array<i64: 1, 64>}, {pipeline_mode = #tpu.pipeline_mode<synchronous>, transform_indices = @transform_17, window_bounds = array<i64: 2, 64, 100>}, {pipeline_mode = #tpu.pipeline_mode<synchronous>, transform_indices = @transform_18, window_bounds = array<i64: 1, 100>}, {pipeline_mode = #tpu.pipeline_mode<synchronous>, transform_indices = @transform_19, window_bounds = array<i64: 100, 100>}, {pipeline_mode = #tpu.pipeline_mode<synchronous>, transform_indices = @transform_20, window_bounds = array<i64: 1, 100>}, {pipeline_mode = #tpu.pipeline_mode<synchronous>, transform_indices = @transform_21, window_bounds = array<i64: 100, 4>}, {pipeline_mode = #tpu.pipeline_mode<synchronous>, transform_indices = @transform_22, window_bounds = array<i64: 1, 4>}, {transform_indices = @transform_23, window_bounds = array<i64: 1, 2, 4>}]} {
    %c0 = arith.constant 0 : index
    %c0_0 = arith.constant 0 : index
    %0 = vector.load %arg2[%c0, %c0_0] : memref<88x16xf32, #tpu.memory_space<vmem>>, vector<88x16xf32>
    %c0_1 = arith.constant 0 : index
    %c0_2 = arith.constant 0 : index
    %1 = vector.load %arg3[%c0_1, %c0_2] : memref<1x16xf32, #tpu.memory_space<vmem>>, vector<1x16xf32>
    %c0_3 = arith.constant 0 : index
    %c0_4 = arith.constant 0 : index
    %c0_5 = arith.constant 0 : index
    %c0_6 = arith.constant 0 : index
    %2 = vector.load %arg1[%c0_3, %c0_4, %c0_5, %c0_6] : memref<1x4x120x88xf32, #tpu.memory_space<vmem>>, vector<1x1x120x88xf32>
    %3 = vector.shape_cast %2 : vector<1x1x120x88xf32> to vector<120x88xf32>
    %cst = arith.constant dense<0.000000e+00> : vector<120x16xf32>
    %4 = tpu.matmul %3, %0, %cst {dimension_numbers = #tpu.dot_dimension_numbers<[1], [0], [0], [1], [0, 0, 1, 1], [], []>} : vector<120x88xf32>, vector<88x16xf32>, vector<120x16xf32> -> vector<120x16xf32>
    %5 = vector.broadcast %1 : vector<1x16xf32> to vector<120x16xf32>
    %6 = arith.addf %4, %5 : vector<120x16xf32>
    %cst_7 = arith.constant 0.000000e+00 : f32
    %7 = vector.broadcast %cst_7 : f32 to vector<120x16xf32>
    %8 = arith.maximumf %6, %7 : vector<120x16xf32>
    %c0_8 = arith.constant 0 : index
    %c1 = arith.constant 1 : index
    %c0_9 = arith.constant 0 : index
    %c0_10 = arith.constant 0 : index
    %9 = vector.load %arg1[%c0_8, %c1, %c0_9, %c0_10] : memref<1x4x120x88xf32, #tpu.memory_space<vmem>>, vector<1x1x120x88xf32>
    %10 = vector.shape_cast %9 : vector<1x1x120x88xf32> to vector<120x88xf32>
    %cst_11 = arith.constant dense<0.000000e+00> : vector<120x16xf32>
    %11 = tpu.matmul %10, %0, %cst_11 {dimension_numbers = #tpu.dot_dimension_numbers<[1], [0], [0], [1], [0, 0, 1, 1], [], []>} : vector<120x88xf32>, vector<88x16xf32>, vector<120x16xf32> -> vector<120x16xf32>
    %12 = vector.broadcast %1 : vector<1x16xf32> to vector<120x16xf32>
    %13 = arith.addf %11, %12 : vector<120x16xf32>
    %cst_12 = arith.constant 0.000000e+00 : f32
    %14 = vector.broadcast %cst_12 : f32 to vector<120x16xf32>
    %15 = arith.maximumf %13, %14 : vector<120x16xf32>
    %16 = arith.maximumf %8, %15 : vector<120x16xf32>
    %c0_13 = arith.constant 0 : index
    %c2 = arith.constant 2 : index
    %c0_14 = arith.constant 0 : index
    %c0_15 = arith.constant 0 : index
    %17 = vector.load %arg1[%c0_13, %c2, %c0_14, %c0_15] : memref<1x4x120x88xf32, #tpu.memory_space<vmem>>, vector<1x1x120x88xf32>
    %18 = vector.shape_cast %17 : vector<1x1x120x88xf32> to vector<120x88xf32>
    %cst_16 = arith.constant dense<0.000000e+00> : vector<120x16xf32>
    %19 = tpu.matmul %18, %0, %cst_16 {dimension_numbers = #tpu.dot_dimension_numbers<[1], [0], [0], [1], [0, 0, 1, 1], [], []>} : vector<120x88xf32>, vector<88x16xf32>, vector<120x16xf32> -> vector<120x16xf32>
    %20 = vector.broadcast %1 : vector<1x16xf32> to vector<120x16xf32>
    %21 = arith.addf %19, %20 : vector<120x16xf32>
    %cst_17 = arith.constant 0.000000e+00 : f32
    %22 = vector.broadcast %cst_17 : f32 to vector<120x16xf32>
    %23 = arith.maximumf %21, %22 : vector<120x16xf32>
    %24 = arith.maximumf %16, %23 : vector<120x16xf32>
    %c0_18 = arith.constant 0 : index
    %c3 = arith.constant 3 : index
    %c0_19 = arith.constant 0 : index
    %c0_20 = arith.constant 0 : index
    %25 = vector.load %arg1[%c0_18, %c3, %c0_19, %c0_20] : memref<1x4x120x88xf32, #tpu.memory_space<vmem>>, vector<1x1x120x88xf32>
    %26 = vector.shape_cast %25 : vector<1x1x120x88xf32> to vector<120x88xf32>
    %cst_21 = arith.constant dense<0.000000e+00> : vector<120x16xf32>
    %27 = tpu.matmul %26, %0, %cst_21 {dimension_numbers = #tpu.dot_dimension_numbers<[1], [0], [0], [1], [0, 0, 1, 1], [], []>} : vector<120x88xf32>, vector<88x16xf32>, vector<120x16xf32> -> vector<120x16xf32>
    %28 = vector.broadcast %1 : vector<1x16xf32> to vector<120x16xf32>
    %29 = arith.addf %27, %28 : vector<120x16xf32>
    %cst_22 = arith.constant 0.000000e+00 : f32
    %30 = vector.broadcast %cst_22 : f32 to vector<120x16xf32>
    %31 = arith.maximumf %29, %30 : vector<120x16xf32>
    %32 = arith.maximumf %24, %31 : vector<120x16xf32>
    %c0_23 = arith.constant 0 : index
    %c0_24 = arith.constant 0 : index
    %33 = vector.load %arg4[%c0_23, %c0_24] : memref<1x16xf32, #tpu.memory_space<vmem>>, vector<1x16xf32>
    %34 = vector.broadcast %33 : vector<1x16xf32> to vector<120x16xf32>
    %35 = arith.mulf %32, %34 : vector<120x16xf32>
    %c0_25 = arith.constant 0 : index
    %c0_26 = arith.constant 0 : index
    %36 = vector.load %arg5[%c0_25, %c0_26] : memref<1x16xf32, #tpu.memory_space<vmem>>, vector<1x16xf32>
    %37 = vector.broadcast %36 : vector<1x16xf32> to vector<120x16xf32>
    %38 = arith.addf %35, %37 : vector<120x16xf32>
    %c0_27 = arith.constant 0 : index
    %c0_28 = arith.constant 0 : index
    %39 = vector.load %arg8[%c0_27, %c0_28] : memref<1x32xf32, #tpu.memory_space<vmem>>, vector<1x32xf32>
    %c0_29 = arith.constant 0 : index
    %c0_30 = arith.constant 0 : index
    %c0_31 = arith.constant 0 : index
    %40 = vector.load %arg6[%c0_29, %c0_30, %c0_31] : memref<4x64x120xf32, #tpu.memory_space<vmem>>, vector<1x64x120xf32>
    %41 = vector.shape_cast %40 : vector<1x64x120xf32> to vector<64x120xf32>
    %cst_32 = arith.constant dense<0.000000e+00> : vector<64x16xf32>
    %42 = tpu.matmul %41, %38, %cst_32 {dimension_numbers = #tpu.dot_dimension_numbers<[1], [0], [0], [1], [0, 0, 1, 1], [], []>} : vector<64x120xf32>, vector<120x16xf32>, vector<64x16xf32> -> vector<64x16xf32>
    %c0_33 = arith.constant 0 : index
    %c0_34 = arith.constant 0 : index
    %c0_35 = arith.constant 0 : index
    %43 = vector.load %arg7[%c0_33, %c0_34, %c0_35] : memref<4x16x32xf32, #tpu.memory_space<vmem>>, vector<1x16x32xf32>
    %44 = vector.shape_cast %43 : vector<1x16x32xf32> to vector<16x32xf32>
    %cst_36 = arith.constant dense<0.000000e+00> : vector<64x32xf32>
    %45 = tpu.matmul %42, %44, %cst_36 {dimension_numbers = #tpu.dot_dimension_numbers<[1], [0], [0], [1], [0, 0, 1, 1], [], []>} : vector<64x16xf32>, vector<16x32xf32>, vector<64x32xf32> -> vector<64x32xf32>
    %46 = vector.broadcast %39 : vector<1x32xf32> to vector<64x32xf32>
    %47 = arith.addf %46, %45 : vector<64x32xf32>
    %c1_37 = arith.constant 1 : index
    %c0_38 = arith.constant 0 : index
    %c0_39 = arith.constant 0 : index
    %48 = vector.load %arg6[%c1_37, %c0_38, %c0_39] : memref<4x64x120xf32, #tpu.memory_space<vmem>>, vector<1x64x120xf32>
    %49 = vector.shape_cast %48 : vector<1x64x120xf32> to vector<64x120xf32>
    %cst_40 = arith.constant dense<0.000000e+00> : vector<64x16xf32>
    %50 = tpu.matmul %49, %38, %cst_40 {dimension_numbers = #tpu.dot_dimension_numbers<[1], [0], [0], [1], [0, 0, 1, 1], [], []>} : vector<64x120xf32>, vector<120x16xf32>, vector<64x16xf32> -> vector<64x16xf32>
    %c1_41 = arith.constant 1 : index
    %c0_42 = arith.constant 0 : index
    %c0_43 = arith.constant 0 : index
    %51 = vector.load %arg7[%c1_41, %c0_42, %c0_43] : memref<4x16x32xf32, #tpu.memory_space<vmem>>, vector<1x16x32xf32>
    %52 = vector.shape_cast %51 : vector<1x16x32xf32> to vector<16x32xf32>
    %cst_44 = arith.constant dense<0.000000e+00> : vector<64x32xf32>
    %53 = tpu.matmul %50, %52, %cst_44 {dimension_numbers = #tpu.dot_dimension_numbers<[1], [0], [0], [1], [0, 0, 1, 1], [], []>} : vector<64x16xf32>, vector<16x32xf32>, vector<64x32xf32> -> vector<64x32xf32>
    %54 = arith.addf %47, %53 : vector<64x32xf32>
    %c2_45 = arith.constant 2 : index
    %c0_46 = arith.constant 0 : index
    %c0_47 = arith.constant 0 : index
    %55 = vector.load %arg6[%c2_45, %c0_46, %c0_47] : memref<4x64x120xf32, #tpu.memory_space<vmem>>, vector<1x64x120xf32>
    %56 = vector.shape_cast %55 : vector<1x64x120xf32> to vector<64x120xf32>
    %cst_48 = arith.constant dense<0.000000e+00> : vector<64x16xf32>
    %57 = tpu.matmul %56, %38, %cst_48 {dimension_numbers = #tpu.dot_dimension_numbers<[1], [0], [0], [1], [0, 0, 1, 1], [], []>} : vector<64x120xf32>, vector<120x16xf32>, vector<64x16xf32> -> vector<64x16xf32>
    %c2_49 = arith.constant 2 : index
    %c0_50 = arith.constant 0 : index
    %c0_51 = arith.constant 0 : index
    %58 = vector.load %arg7[%c2_49, %c0_50, %c0_51] : memref<4x16x32xf32, #tpu.memory_space<vmem>>, vector<1x16x32xf32>
    %59 = vector.shape_cast %58 : vector<1x16x32xf32> to vector<16x32xf32>
    %cst_52 = arith.constant dense<0.000000e+00> : vector<64x32xf32>
    %60 = tpu.matmul %57, %59, %cst_52 {dimension_numbers = #tpu.dot_dimension_numbers<[1], [0], [0], [1], [0, 0, 1, 1], [], []>} : vector<64x16xf32>, vector<16x32xf32>, vector<64x32xf32> -> vector<64x32xf32>
    %61 = arith.addf %54, %60 : vector<64x32xf32>
    %c3_53 = arith.constant 3 : index
    %c0_54 = arith.constant 0 : index
    %c0_55 = arith.constant 0 : index
    %62 = vector.load %arg6[%c3_53, %c0_54, %c0_55] : memref<4x64x120xf32, #tpu.memory_space<vmem>>, vector<1x64x120xf32>
    %63 = vector.shape_cast %62 : vector<1x64x120xf32> to vector<64x120xf32>
    %cst_56 = arith.constant dense<0.000000e+00> : vector<64x16xf32>
    %64 = tpu.matmul %63, %38, %cst_56 {dimension_numbers = #tpu.dot_dimension_numbers<[1], [0], [0], [1], [0, 0, 1, 1], [], []>} : vector<64x120xf32>, vector<120x16xf32>, vector<64x16xf32> -> vector<64x16xf32>
    %c3_57 = arith.constant 3 : index
    %c0_58 = arith.constant 0 : index
    %c0_59 = arith.constant 0 : index
    %65 = vector.load %arg7[%c3_57, %c0_58, %c0_59] : memref<4x16x32xf32, #tpu.memory_space<vmem>>, vector<1x16x32xf32>
    %66 = vector.shape_cast %65 : vector<1x16x32xf32> to vector<16x32xf32>
    %cst_60 = arith.constant dense<0.000000e+00> : vector<64x32xf32>
    %67 = tpu.matmul %64, %66, %cst_60 {dimension_numbers = #tpu.dot_dimension_numbers<[1], [0], [0], [1], [0, 0, 1, 1], [], []>} : vector<64x16xf32>, vector<16x32xf32>, vector<64x32xf32> -> vector<64x32xf32>
    %68 = arith.addf %61, %67 : vector<64x32xf32>
    %cst_61 = arith.constant 0.000000e+00 : f32
    %69 = vector.broadcast %cst_61 : f32 to vector<64x32xf32>
    %70 = arith.maximumf %68, %69 : vector<64x32xf32>
    %c0_62 = arith.constant 0 : index
    %c0_63 = arith.constant 0 : index
    %c0_64 = arith.constant 0 : index
    %71 = vector.load %arg9[%c0_62, %c0_63, %c0_64] : memref<4x16x64xf32, #tpu.memory_space<vmem>>, vector<1x16x64xf32>
    %72 = vector.shape_cast %71 : vector<1x16x64xf32> to vector<16x64xf32>
    %cst_65 = arith.constant dense<0.000000e+00> : vector<16x32xf32>
    %73 = tpu.matmul %72, %70, %cst_65 {dimension_numbers = #tpu.dot_dimension_numbers<[1], [0], [0], [1], [0, 0, 1, 1], [], []>} : vector<16x64xf32>, vector<64x32xf32>, vector<16x32xf32> -> vector<16x32xf32>
    %c1_66 = arith.constant 1 : index
    %c0_67 = arith.constant 0 : index
    %c0_68 = arith.constant 0 : index
    %74 = vector.load %arg9[%c1_66, %c0_67, %c0_68] : memref<4x16x64xf32, #tpu.memory_space<vmem>>, vector<1x16x64xf32>
    %75 = vector.shape_cast %74 : vector<1x16x64xf32> to vector<16x64xf32>
    %cst_69 = arith.constant dense<0.000000e+00> : vector<16x32xf32>
    %76 = tpu.matmul %75, %70, %cst_69 {dimension_numbers = #tpu.dot_dimension_numbers<[1], [0], [0], [1], [0, 0, 1, 1], [], []>} : vector<16x64xf32>, vector<64x32xf32>, vector<16x32xf32> -> vector<16x32xf32>
    %77 = arith.maximumf %73, %76 : vector<16x32xf32>
    %c2_70 = arith.constant 2 : index
    %c0_71 = arith.constant 0 : index
    %c0_72 = arith.constant 0 : index
    %78 = vector.load %arg9[%c2_70, %c0_71, %c0_72] : memref<4x16x64xf32, #tpu.memory_space<vmem>>, vector<1x16x64xf32>
    %79 = vector.shape_cast %78 : vector<1x16x64xf32> to vector<16x64xf32>
    %cst_73 = arith.constant dense<0.000000e+00> : vector<16x32xf32>
    %80 = tpu.matmul %79, %70, %cst_73 {dimension_numbers = #tpu.dot_dimension_numbers<[1], [0], [0], [1], [0, 0, 1, 1], [], []>} : vector<16x64xf32>, vector<64x32xf32>, vector<16x32xf32> -> vector<16x32xf32>
    %81 = arith.maximumf %77, %80 : vector<16x32xf32>
    %c3_74 = arith.constant 3 : index
    %c0_75 = arith.constant 0 : index
    %c0_76 = arith.constant 0 : index
    %82 = vector.load %arg9[%c3_74, %c0_75, %c0_76] : memref<4x16x64xf32, #tpu.memory_space<vmem>>, vector<1x16x64xf32>
    %83 = vector.shape_cast %82 : vector<1x16x64xf32> to vector<16x64xf32>
    %cst_77 = arith.constant dense<0.000000e+00> : vector<16x32xf32>
    %84 = tpu.matmul %83, %70, %cst_77 {dimension_numbers = #tpu.dot_dimension_numbers<[1], [0], [0], [1], [0, 0, 1, 1], [], []>} : vector<16x64xf32>, vector<64x32xf32>, vector<16x32xf32> -> vector<16x32xf32>
    %85 = arith.maximumf %81, %84 : vector<16x32xf32>
    %c0_78 = arith.constant 0 : index
    %c0_79 = arith.constant 0 : index
    %86 = vector.load %arg10[%c0_78, %c0_79] : memref<1x32xf32, #tpu.memory_space<vmem>>, vector<1x32xf32>
    %87 = vector.broadcast %86 : vector<1x32xf32> to vector<16x32xf32>
    %88 = arith.mulf %85, %87 : vector<16x32xf32>
    %c0_80 = arith.constant 0 : index
    %c0_81 = arith.constant 0 : index
    %89 = vector.load %arg11[%c0_80, %c0_81] : memref<1x32xf32, #tpu.memory_space<vmem>>, vector<1x32xf32>
    %90 = vector.broadcast %89 : vector<1x32xf32> to vector<16x32xf32>
    %91 = arith.addf %88, %90 : vector<16x32xf32>
    %c0_82 = arith.constant 0 : index
    %c0_83 = arith.constant 0 : index
    %92 = vector.load %arg14[%c0_82, %c0_83] : memref<1x64xf32, #tpu.memory_space<vmem>>, vector<1x64xf32>
    %c0_84 = arith.constant 0 : index
    %c0_85 = arith.constant 0 : index
    %c0_86 = arith.constant 0 : index
    %93 = vector.load %arg12[%c0_84, %c0_85, %c0_86] : memref<4x16x16xf32, #tpu.memory_space<vmem>>, vector<1x16x16xf32>
    %94 = vector.shape_cast %93 : vector<1x16x16xf32> to vector<16x16xf32>
    %cst_87 = arith.constant dense<0.000000e+00> : vector<16x32xf32>
    %95 = tpu.matmul %94, %91, %cst_87 {dimension_numbers = #tpu.dot_dimension_numbers<[1], [0], [0], [1], [0, 0, 1, 1], [], []>} : vector<16x16xf32>, vector<16x32xf32>, vector<16x32xf32> -> vector<16x32xf32>
    %c0_88 = arith.constant 0 : index
    %c0_89 = arith.constant 0 : index
    %c0_90 = arith.constant 0 : index
    %96 = vector.load %arg13[%c0_88, %c0_89, %c0_90] : memref<4x32x64xf32, #tpu.memory_space<vmem>>, vector<1x32x64xf32>
    %97 = vector.shape_cast %96 : vector<1x32x64xf32> to vector<32x64xf32>
    %cst_91 = arith.constant dense<0.000000e+00> : vector<16x64xf32>
    %98 = tpu.matmul %95, %97, %cst_91 {dimension_numbers = #tpu.dot_dimension_numbers<[1], [0], [0], [1], [0, 0, 1, 1], [], []>} : vector<16x32xf32>, vector<32x64xf32>, vector<16x64xf32> -> vector<16x64xf32>
    %99 = vector.broadcast %92 : vector<1x64xf32> to vector<16x64xf32>
    %100 = arith.addf %99, %98 : vector<16x64xf32>
    %c1_92 = arith.constant 1 : index
    %c0_93 = arith.constant 0 : index
    %c0_94 = arith.constant 0 : index
    %101 = vector.load %arg12[%c1_92, %c0_93, %c0_94] : memref<4x16x16xf32, #tpu.memory_space<vmem>>, vector<1x16x16xf32>
    %102 = vector.shape_cast %101 : vector<1x16x16xf32> to vector<16x16xf32>
    %cst_95 = arith.constant dense<0.000000e+00> : vector<16x32xf32>
    %103 = tpu.matmul %102, %91, %cst_95 {dimension_numbers = #tpu.dot_dimension_numbers<[1], [0], [0], [1], [0, 0, 1, 1], [], []>} : vector<16x16xf32>, vector<16x32xf32>, vector<16x32xf32> -> vector<16x32xf32>
    %c1_96 = arith.constant 1 : index
    %c0_97 = arith.constant 0 : index
    %c0_98 = arith.constant 0 : index
    %104 = vector.load %arg13[%c1_96, %c0_97, %c0_98] : memref<4x32x64xf32, #tpu.memory_space<vmem>>, vector<1x32x64xf32>
    %105 = vector.shape_cast %104 : vector<1x32x64xf32> to vector<32x64xf32>
    %cst_99 = arith.constant dense<0.000000e+00> : vector<16x64xf32>
    %106 = tpu.matmul %103, %105, %cst_99 {dimension_numbers = #tpu.dot_dimension_numbers<[1], [0], [0], [1], [0, 0, 1, 1], [], []>} : vector<16x32xf32>, vector<32x64xf32>, vector<16x64xf32> -> vector<16x64xf32>
    %107 = arith.addf %100, %106 : vector<16x64xf32>
    %c2_100 = arith.constant 2 : index
    %c0_101 = arith.constant 0 : index
    %c0_102 = arith.constant 0 : index
    %108 = vector.load %arg12[%c2_100, %c0_101, %c0_102] : memref<4x16x16xf32, #tpu.memory_space<vmem>>, vector<1x16x16xf32>
    %109 = vector.shape_cast %108 : vector<1x16x16xf32> to vector<16x16xf32>
    %cst_103 = arith.constant dense<0.000000e+00> : vector<16x32xf32>
    %110 = tpu.matmul %109, %91, %cst_103 {dimension_numbers = #tpu.dot_dimension_numbers<[1], [0], [0], [1], [0, 0, 1, 1], [], []>} : vector<16x16xf32>, vector<16x32xf32>, vector<16x32xf32> -> vector<16x32xf32>
    %c2_104 = arith.constant 2 : index
    %c0_105 = arith.constant 0 : index
    %c0_106 = arith.constant 0 : index
    %111 = vector.load %arg13[%c2_104, %c0_105, %c0_106] : memref<4x32x64xf32, #tpu.memory_space<vmem>>, vector<1x32x64xf32>
    %112 = vector.shape_cast %111 : vector<1x32x64xf32> to vector<32x64xf32>
    %cst_107 = arith.constant dense<0.000000e+00> : vector<16x64xf32>
    %113 = tpu.matmul %110, %112, %cst_107 {dimension_numbers = #tpu.dot_dimension_numbers<[1], [0], [0], [1], [0, 0, 1, 1], [], []>} : vector<16x32xf32>, vector<32x64xf32>, vector<16x64xf32> -> vector<16x64xf32>
    %114 = arith.addf %107, %113 : vector<16x64xf32>
    %c3_108 = arith.constant 3 : index
    %c0_109 = arith.constant 0 : index
    %c0_110 = arith.constant 0 : index
    %115 = vector.load %arg12[%c3_108, %c0_109, %c0_110] : memref<4x16x16xf32, #tpu.memory_space<vmem>>, vector<1x16x16xf32>
    %116 = vector.shape_cast %115 : vector<1x16x16xf32> to vector<16x16xf32>
    %cst_111 = arith.constant dense<0.000000e+00> : vector<16x32xf32>
    %117 = tpu.matmul %116, %91, %cst_111 {dimension_numbers = #tpu.dot_dimension_numbers<[1], [0], [0], [1], [0, 0, 1, 1], [], []>} : vector<16x16xf32>, vector<16x32xf32>, vector<16x32xf32> -> vector<16x32xf32>
    %c3_112 = arith.constant 3 : index
    %c0_113 = arith.constant 0 : index
    %c0_114 = arith.constant 0 : index
    %118 = vector.load %arg13[%c3_112, %c0_113, %c0_114] : memref<4x32x64xf32, #tpu.memory_space<vmem>>, vector<1x32x64xf32>
    %119 = vector.shape_cast %118 : vector<1x32x64xf32> to vector<32x64xf32>
    %cst_115 = arith.constant dense<0.000000e+00> : vector<16x64xf32>
    %120 = tpu.matmul %117, %119, %cst_115 {dimension_numbers = #tpu.dot_dimension_numbers<[1], [0], [0], [1], [0, 0, 1, 1], [], []>} : vector<16x32xf32>, vector<32x64xf32>, vector<16x64xf32> -> vector<16x64xf32>
    %121 = arith.addf %114, %120 : vector<16x64xf32>
    %cst_116 = arith.constant 0.000000e+00 : f32
    %122 = vector.broadcast %cst_116 : f32 to vector<16x64xf32>
    %123 = arith.maximumf %121, %122 : vector<16x64xf32>
    %c0_117 = arith.constant 0 : index
    %c0_118 = arith.constant 0 : index
    %124 = vector.load %arg19[%c0_117, %c0_118] : memref<1x100xf32, #tpu.memory_space<vmem>>, vector<1x100xf32>
    %c0_119 = arith.constant 0 : index
    %c0_120 = arith.constant 0 : index
    %c0_121 = arith.constant 0 : index
    %125 = vector.load %arg15[%c0_119, %c0_120, %c0_121] : memref<8x2x16xf32, #tpu.memory_space<vmem>>, vector<1x2x16xf32>
    %126 = vector.shape_cast %125 : vector<1x2x16xf32> to vector<2x16xf32>
    %cst_122 = arith.constant dense<0.000000e+00> : vector<2x64xf32>
    %127 = tpu.matmul %126, %123, %cst_122 {dimension_numbers = #tpu.dot_dimension_numbers<[1], [0], [0], [1], [0, 0, 1, 1], [], []>} : vector<2x16xf32>, vector<16x64xf32>, vector<2x64xf32> -> vector<2x64xf32>
    %c1_123 = arith.constant 1 : index
    %c0_124 = arith.constant 0 : index
    %c0_125 = arith.constant 0 : index
    %128 = vector.load %arg15[%c1_123, %c0_124, %c0_125] : memref<8x2x16xf32, #tpu.memory_space<vmem>>, vector<1x2x16xf32>
    %129 = vector.shape_cast %128 : vector<1x2x16xf32> to vector<2x16xf32>
    %cst_126 = arith.constant dense<0.000000e+00> : vector<2x64xf32>
    %130 = tpu.matmul %129, %123, %cst_126 {dimension_numbers = #tpu.dot_dimension_numbers<[1], [0], [0], [1], [0, 0, 1, 1], [], []>} : vector<2x16xf32>, vector<16x64xf32>, vector<2x64xf32> -> vector<2x64xf32>
    %131 = arith.maximumf %127, %130 : vector<2x64xf32>
    %c2_127 = arith.constant 2 : index
    %c0_128 = arith.constant 0 : index
    %c0_129 = arith.constant 0 : index
    %132 = vector.load %arg15[%c2_127, %c0_128, %c0_129] : memref<8x2x16xf32, #tpu.memory_space<vmem>>, vector<1x2x16xf32>
    %133 = vector.shape_cast %132 : vector<1x2x16xf32> to vector<2x16xf32>
    %cst_130 = arith.constant dense<0.000000e+00> : vector<2x64xf32>
    %134 = tpu.matmul %133, %123, %cst_130 {dimension_numbers = #tpu.dot_dimension_numbers<[1], [0], [0], [1], [0, 0, 1, 1], [], []>} : vector<2x16xf32>, vector<16x64xf32>, vector<2x64xf32> -> vector<2x64xf32>
    %135 = arith.maximumf %131, %134 : vector<2x64xf32>
    %c3_131 = arith.constant 3 : index
    %c0_132 = arith.constant 0 : index
    %c0_133 = arith.constant 0 : index
    %136 = vector.load %arg15[%c3_131, %c0_132, %c0_133] : memref<8x2x16xf32, #tpu.memory_space<vmem>>, vector<1x2x16xf32>
    %137 = vector.shape_cast %136 : vector<1x2x16xf32> to vector<2x16xf32>
    %cst_134 = arith.constant dense<0.000000e+00> : vector<2x64xf32>
    %138 = tpu.matmul %137, %123, %cst_134 {dimension_numbers = #tpu.dot_dimension_numbers<[1], [0], [0], [1], [0, 0, 1, 1], [], []>} : vector<2x16xf32>, vector<16x64xf32>, vector<2x64xf32> -> vector<2x64xf32>
    %139 = arith.maximumf %135, %138 : vector<2x64xf32>
    %c0_135 = arith.constant 0 : index
    %c0_136 = arith.constant 0 : index
    %140 = vector.load %arg16[%c0_135, %c0_136] : memref<1x64xf32, #tpu.memory_space<vmem>>, vector<1x64xf32>
    %141 = vector.broadcast %140 : vector<1x64xf32> to vector<2x64xf32>
    %142 = arith.mulf %139, %141 : vector<2x64xf32>
    %c0_137 = arith.constant 0 : index
    %c0_138 = arith.constant 0 : index
    %143 = vector.load %arg17[%c0_137, %c0_138] : memref<1x64xf32, #tpu.memory_space<vmem>>, vector<1x64xf32>
    %144 = vector.broadcast %143 : vector<1x64xf32> to vector<2x64xf32>
    %145 = arith.addf %142, %144 : vector<2x64xf32>
    %c0_139 = arith.constant 0 : index
    %c0_140 = arith.constant 0 : index
    %c0_141 = arith.constant 0 : index
    %146 = vector.load %arg18[%c0_139, %c0_140, %c0_141] : memref<2x64x100xf32, #tpu.memory_space<vmem>>, vector<1x64x100xf32>
    %147 = vector.shape_cast %146 : vector<1x64x100xf32> to vector<64x100xf32>
    %cst_142 = arith.constant dense<0.000000e+00> : vector<2x100xf32>
    %148 = tpu.matmul %145, %147, %cst_142 {dimension_numbers = #tpu.dot_dimension_numbers<[1], [0], [0], [1], [0, 0, 1, 1], [], []>} : vector<2x64xf32>, vector<64x100xf32>, vector<2x100xf32> -> vector<2x100xf32>
    %149 = vector.broadcast %124 : vector<1x100xf32> to vector<2x100xf32>
    %150 = arith.addf %149, %148 : vector<2x100xf32>
    %c4 = arith.constant 4 : index
    %c0_143 = arith.constant 0 : index
    %c0_144 = arith.constant 0 : index
    %151 = vector.load %arg15[%c4, %c0_143, %c0_144] : memref<8x2x16xf32, #tpu.memory_space<vmem>>, vector<1x2x16xf32>
    %152 = vector.shape_cast %151 : vector<1x2x16xf32> to vector<2x16xf32>
    %cst_145 = arith.constant dense<0.000000e+00> : vector<2x64xf32>
    %153 = tpu.matmul %152, %123, %cst_145 {dimension_numbers = #tpu.dot_dimension_numbers<[1], [0], [0], [1], [0, 0, 1, 1], [], []>} : vector<2x16xf32>, vector<16x64xf32>, vector<2x64xf32> -> vector<2x64xf32>
    %c5 = arith.constant 5 : index
    %c0_146 = arith.constant 0 : index
    %c0_147 = arith.constant 0 : index
    %154 = vector.load %arg15[%c5, %c0_146, %c0_147] : memref<8x2x16xf32, #tpu.memory_space<vmem>>, vector<1x2x16xf32>
    %155 = vector.shape_cast %154 : vector<1x2x16xf32> to vector<2x16xf32>
    %cst_148 = arith.constant dense<0.000000e+00> : vector<2x64xf32>
    %156 = tpu.matmul %155, %123, %cst_148 {dimension_numbers = #tpu.dot_dimension_numbers<[1], [0], [0], [1], [0, 0, 1, 1], [], []>} : vector<2x16xf32>, vector<16x64xf32>, vector<2x64xf32> -> vector<2x64xf32>
    %157 = arith.maximumf %153, %156 : vector<2x64xf32>
    %c6 = arith.constant 6 : index
    %c0_149 = arith.constant 0 : index
    %c0_150 = arith.constant 0 : index
    %158 = vector.load %arg15[%c6, %c0_149, %c0_150] : memref<8x2x16xf32, #tpu.memory_space<vmem>>, vector<1x2x16xf32>
    %159 = vector.shape_cast %158 : vector<1x2x16xf32> to vector<2x16xf32>
    %cst_151 = arith.constant dense<0.000000e+00> : vector<2x64xf32>
    %160 = tpu.matmul %159, %123, %cst_151 {dimension_numbers = #tpu.dot_dimension_numbers<[1], [0], [0], [1], [0, 0, 1, 1], [], []>} : vector<2x16xf32>, vector<16x64xf32>, vector<2x64xf32> -> vector<2x64xf32>
    %161 = arith.maximumf %157, %160 : vector<2x64xf32>
    %c7 = arith.constant 7 : index
    %c0_152 = arith.constant 0 : index
    %c0_153 = arith.constant 0 : index
    %162 = vector.load %arg15[%c7, %c0_152, %c0_153] : memref<8x2x16xf32, #tpu.memory_space<vmem>>, vector<1x2x16xf32>
    %163 = vector.shape_cast %162 : vector<1x2x16xf32> to vector<2x16xf32>
    %cst_154 = arith.constant dense<0.000000e+00> : vector<2x64xf32>
    %164 = tpu.matmul %163, %123, %cst_154 {dimension_numbers = #tpu.dot_dimension_numbers<[1], [0], [0], [1], [0, 0, 1, 1], [], []>} : vector<2x16xf32>, vector<16x64xf32>, vector<2x64xf32> -> vector<2x64xf32>
    %165 = arith.maximumf %161, %164 : vector<2x64xf32>
    %c0_155 = arith.constant 0 : index
    %c0_156 = arith.constant 0 : index
    %166 = vector.load %arg16[%c0_155, %c0_156] : memref<1x64xf32, #tpu.memory_space<vmem>>, vector<1x64xf32>
    %167 = vector.broadcast %166 : vector<1x64xf32> to vector<2x64xf32>
    %168 = arith.mulf %165, %167 : vector<2x64xf32>
    %c0_157 = arith.constant 0 : index
    %c0_158 = arith.constant 0 : index
    %169 = vector.load %arg17[%c0_157, %c0_158] : memref<1x64xf32, #tpu.memory_space<vmem>>, vector<1x64xf32>
    %170 = vector.broadcast %169 : vector<1x64xf32> to vector<2x64xf32>
    %171 = arith.addf %168, %170 : vector<2x64xf32>
    %c1_159 = arith.constant 1 : index
    %c0_160 = arith.constant 0 : index
    %c0_161 = arith.constant 0 : index
    %172 = vector.load %arg18[%c1_159, %c0_160, %c0_161] : memref<2x64x100xf32, #tpu.memory_space<vmem>>, vector<1x64x100xf32>
    %173 = vector.shape_cast %172 : vector<1x64x100xf32> to vector<64x100xf32>
    %cst_162 = arith.constant dense<0.000000e+00> : vector<2x100xf32>
    %174 = tpu.matmul %171, %173, %cst_162 {dimension_numbers = #tpu.dot_dimension_numbers<[1], [0], [0], [1], [0, 0, 1, 1], [], []>} : vector<2x64xf32>, vector<64x100xf32>, vector<2x100xf32> -> vector<2x100xf32>
    %175 = arith.addf %150, %174 : vector<2x100xf32>
    %cst_163 = arith.constant 0.000000e+00 : f32
    %176 = vector.broadcast %cst_163 : f32 to vector<2x100xf32>
    %177 = arith.maximumf %175, %176 : vector<2x100xf32>
    %c0_164 = arith.constant 0 : index
    %c0_165 = arith.constant 0 : index
    %178 = vector.load %arg20[%c0_164, %c0_165] : memref<100x100xf32, #tpu.memory_space<vmem>>, vector<100x100xf32>
    %cst_166 = arith.constant dense<0.000000e+00> : vector<2x100xf32>
    %179 = tpu.matmul %177, %178, %cst_166 {dimension_numbers = #tpu.dot_dimension_numbers<[1], [0], [0], [1], [0, 0, 1, 1], [], []>} : vector<2x100xf32>, vector<100x100xf32>, vector<2x100xf32> -> vector<2x100xf32>
    %c0_167 = arith.constant 0 : index
    %c0_168 = arith.constant 0 : index
    %180 = vector.load %arg21[%c0_167, %c0_168] : memref<1x100xf32, #tpu.memory_space<vmem>>, vector<1x100xf32>
    %181 = vector.broadcast %180 : vector<1x100xf32> to vector<2x100xf32>
    %182 = arith.addf %179, %181 : vector<2x100xf32>
    %cst_169 = arith.constant 0.000000e+00 : f32
    %183 = vector.broadcast %cst_169 : f32 to vector<2x100xf32>
    %184 = arith.subf %183, %182 : vector<2x100xf32>
    %185 = math.exp %184 : vector<2x100xf32>
    %cst_170 = arith.constant 1.000000e+00 : f32
    %186 = vector.broadcast %cst_170 : f32 to vector<2x100xf32>
    %187 = arith.addf %186, %185 : vector<2x100xf32>
    %cst_171 = arith.constant 1.000000e+00 : f32
    %188 = vector.broadcast %cst_171 : f32 to vector<2x100xf32>
    %189 = arith.divf %188, %187 : vector<2x100xf32>
    %c0_172 = arith.constant 0 : index
    %c0_173 = arith.constant 0 : index
    %190 = vector.load %arg22[%c0_172, %c0_173] : memref<100x4xf32, #tpu.memory_space<vmem>>, vector<100x4xf32>
    %cst_174 = arith.constant dense<0.000000e+00> : vector<2x4xf32>
    %191 = tpu.matmul %189, %190, %cst_174 {dimension_numbers = #tpu.dot_dimension_numbers<[1], [0], [0], [1], [0, 0, 1, 1], [], []>} : vector<2x100xf32>, vector<100x4xf32>, vector<2x4xf32> -> vector<2x4xf32>
    %c0_175 = arith.constant 0 : index
    %c0_176 = arith.constant 0 : index
    %192 = vector.load %arg23[%c0_175, %c0_176] : memref<1x4xf32, #tpu.memory_space<vmem>>, vector<1x4xf32>
    %193 = vector.broadcast %192 : vector<1x4xf32> to vector<2x4xf32>
    %194 = arith.addf %191, %193 : vector<2x4xf32>
    %c0_177 = arith.constant 0 : index
    %c0_178 = arith.constant 0 : index
    %c0_179 = arith.constant 0 : index
    %195 = vector.load %arg24[%c0_177, %c0_178, %c0_179] : memref<1x2x4xf32, #tpu.memory_space<vmem>>, vector<1x2x4xf32>
    %196 = vector.shape_cast %195 : vector<1x2x4xf32> to vector<2x4xf32>
    %197 = vector.shape_cast %194 : vector<2x4xf32> to vector<1x2x4xf32>
    tpu.vector_store %arg24[%c0_177, %c0_178, %c0_179], %197 {strides = array<i32>} : memref<1x2x4xf32, #tpu.memory_space<vmem>>, vector<1x2x4xf32>,
    return
  }
  func.func @transform_0(%arg0: i32) -> (i32, i32, i32, i32) {
    %c0_i32 = arith.constant 0 : i32
    %c0_i32_0 = arith.constant 0 : i32
    %c0_i32_1 = arith.constant 0 : i32
    %c0_i32_2 = arith.constant 0 : i32
    return %arg0, %c0_i32, %c0_i32_0, %c0_i32_1 : i32, i32, i32, i32
  }
  func.func @transform_1(%arg0: i32) -> (i32, i32) {
    %c0_i32 = arith.constant 0 : i32
    %c0_i32_0 = arith.constant 0 : i32
    %c0_i32_1 = arith.constant 0 : i32
    return %c0_i32, %c0_i32_0 : i32, i32
  }
  func.func @transform_2(%arg0: i32) -> (i32, i32) {
    %c0_i32 = arith.constant 0 : i32
    %c0_i32_0 = arith.constant 0 : i32
    %c0_i32_1 = arith.constant 0 : i32
    return %c0_i32, %c0_i32_0 : i32, i32
  }
  func.func @transform_3(%arg0: i32) -> (i32, i32) {
    %c0_i32 = arith.constant 0 : i32
    %c0_i32_0 = arith.constant 0 : i32
    %c0_i32_1 = arith.constant 0 : i32
    return %c0_i32, %c0_i32_0 : i32, i32
  }
  func.func @transform_4(%arg0: i32) -> (i32, i32) {
    %c0_i32 = arith.constant 0 : i32
    %c0_i32_0 = arith.constant 0 : i32
    %c0_i32_1 = arith.constant 0 : i32
    return %c0_i32, %c0_i32_0 : i32, i32
  }
  func.func @transform_5(%arg0: i32) -> (i32, i32, i32) {
    %c0_i32 = arith.constant 0 : i32
    %c0_i32_0 = arith.constant 0 : i32
    %c0_i32_1 = arith.constant 0 : i32
    %c0_i32_2 = arith.constant 0 : i32
    return %c0_i32, %c0_i32_0, %c0_i32_1 : i32, i32, i32
  }
  func.func @transform_6(%arg0: i32) -> (i32, i32, i32) {
    %c0_i32 = arith.constant 0 : i32
    %c0_i32_0 = arith.constant 0 : i32
    %c0_i32_1 = arith.constant 0 : i32
    %c0_i32_2 = arith.constant 0 : i32
    return %c0_i32, %c0_i32_0, %c0_i32_1 : i32, i32, i32
  }
  func.func @transform_7(%arg0: i32) -> (i32, i32) {
    %c0_i32 = arith.constant 0 : i32
    %c0_i32_0 = arith.constant 0 : i32
    %c0_i32_1 = arith.constant 0 : i32
    return %c0_i32, %c0_i32_0 : i32, i32
  }
  func.func @transform_8(%arg0: i32) -> (i32, i32, i32) {
    %c0_i32 = arith.constant 0 : i32
    %c0_i32_0 = arith.constant 0 : i32
    %c0_i32_1 = arith.constant 0 : i32
    %c0_i32_2 = arith.constant 0 : i32
    return %c0_i32, %c0_i32_0, %c0_i32_1 : i32, i32, i32
  }
  func.func @transform_9(%arg0: i32) -> (i32, i32) {
    %c0_i32 = arith.constant 0 : i32
    %c0_i32_0 = arith.constant 0 : i32
    %c0_i32_1 = arith.constant 0 : i32
    return %c0_i32, %c0_i32_0 : i32, i32
  }
  func.func @transform_10(%arg0: i32) -> (i32, i32) {
    %c0_i32 = arith.constant 0 : i32
    %c0_i32_0 = arith.constant 0 : i32
    %c0_i32_1 = arith.constant 0 : i32
    return %c0_i32, %c0_i32_0 : i32, i32
  }
  func.func @transform_11(%arg0: i32) -> (i32, i32, i32) {
    %c0_i32 = arith.constant 0 : i32
    %c0_i32_0 = arith.constant 0 : i32
    %c0_i32_1 = arith.constant 0 : i32
    %c0_i32_2 = arith.constant 0 : i32
    return %c0_i32, %c0_i32_0, %c0_i32_1 : i32, i32, i32
  }
  func.func @transform_12(%arg0: i32) -> (i32, i32, i32) {
    %c0_i32 = arith.constant 0 : i32
    %c0_i32_0 = arith.constant 0 : i32
    %c0_i32_1 = arith.constant 0 : i32
    %c0_i32_2 = arith.constant 0 : i32
    return %c0_i32, %c0_i32_0, %c0_i32_1 : i32, i32, i32
  }
  func.func @transform_13(%arg0: i32) -> (i32, i32) {
    %c0_i32 = arith.constant 0 : i32
    %c0_i32_0 = arith.constant 0 : i32
    %c0_i32_1 = arith.constant 0 : i32
    return %c0_i32, %c0_i32_0 : i32, i32
  }
  func.func @transform_14(%arg0: i32) -> (i32, i32, i32) {
    %c0_i32 = arith.constant 0 : i32
    %c0_i32_0 = arith.constant 0 : i32
    %c0_i32_1 = arith.constant 0 : i32
    %c0_i32_2 = arith.constant 0 : i32
    return %c0_i32, %c0_i32_0, %c0_i32_1 : i32, i32, i32
  }
  func.func @transform_15(%arg0: i32) -> (i32, i32) {
    %c0_i32 = arith.constant 0 : i32
    %c0_i32_0 = arith.constant 0 : i32
    %c0_i32_1 = arith.constant 0 : i32
    return %c0_i32, %c0_i32_0 : i32, i32
  }
  func.func @transform_16(%arg0: i32) -> (i32, i32) {
    %c0_i32 = arith.constant 0 : i32
    %c0_i32_0 = arith.constant 0 : i32
    %c0_i32_1 = arith.constant 0 : i32
    return %c0_i32, %c0_i32_0 : i32, i32
  }
  func.func @transform_17(%arg0: i32) -> (i32, i32, i32) {
    %c0_i32 = arith.constant 0 : i32
    %c0_i32_0 = arith.constant 0 : i32
    %c0_i32_1 = arith.constant 0 : i32
    %c0_i32_2 = arith.constant 0 : i32
    return %c0_i32, %c0_i32_0, %c0_i32_1 : i32, i32, i32
  }
  func.func @transform_18(%arg0: i32) -> (i32, i32) {
    %c0_i32 = arith.constant 0 : i32
    %c0_i32_0 = arith.constant 0 : i32
    %c0_i32_1 = arith.constant 0 : i32
    return %c0_i32, %c0_i32_0 : i32, i32
  }
  func.func @transform_19(%arg0: i32) -> (i32, i32) {
    %c0_i32 = arith.constant 0 : i32
    %c0_i32_0 = arith.constant 0 : i32
    %c0_i32_1 = arith.constant 0 : i32
    return %c0_i32, %c0_i32_0 : i32, i32
  }
  func.func @transform_20(%arg0: i32) -> (i32, i32) {
    %c0_i32 = arith.constant 0 : i32
    %c0_i32_0 = arith.constant 0 : i32
    %c0_i32_1 = arith.constant 0 : i32
    return %c0_i32, %c0_i32_0 : i32, i32
  }
  func.func @transform_21(%arg0: i32) -> (i32, i32) {
    %c0_i32 = arith.constant 0 : i32
    %c0_i32_0 = arith.constant 0 : i32
    %c0_i32_1 = arith.constant 0 : i32
    return %c0_i32, %c0_i32_0 : i32, i32
  }
  func.func @transform_22(%arg0: i32) -> (i32, i32) {
    %c0_i32 = arith.constant 0 : i32
    %c0_i32_0 = arith.constant 0 : i32
    %c0_i32_1 = arith.constant 0 : i32
    return %c0_i32, %c0_i32_0 : i32, i32
  }
  func.func @transform_23(%arg0: i32) -> (i32, i32, i32) {
    %c0_i32 = arith.constant 0 : i32
    %c0_i32_0 = arith.constant 0 : i32
    %c0_i32_1 = arith.constant 0 : i32
    return %arg0, %c0_i32, %c0_i32_0 : i32, i32, i32
  }
}

</mosaic_0001>

<llo_original>
// kernel: siamese_forward.1
$region0: #{siamese_forward.1}
  #allocation0 [shape = 'u32[]', space=smem, size = 0x4, offset = 0x4, fixed_abs, tag = 'smem constant byte address 0x4 - core index']
  #allocation1 [shape = 'u32[72,128]{1,0:T(1,128)}', space=vmem, size = 0x9000, scoped, tag = 'internal scratch']
  %s0 = inlined_call_operand.vmem [shape: f32[2,4,120,88], index: 0, kind: input, shape index: {}]
  %s1 = inlined_call_operand.vmem [shape: f32[88,16], index: 1, kind: input, shape index: {}]
  %s2 = inlined_call_operand.vmem [shape: f32[1,16], index: 2, kind: input, shape index: {}]
  %s3 = inlined_call_operand.vmem [shape: f32[1,16], index: 3, kind: input, shape index: {}]
  %s4 = inlined_call_operand.vmem [shape: f32[1,16], index: 4, kind: input, shape index: {}]
  %s5 = inlined_call_operand.vmem [shape: f32[4,64,120], index: 5, kind: input, shape index: {}]
  %s6 = inlined_call_operand.vmem [shape: f32[4,16,32], index: 6, kind: input, shape index: {}]
  %s7 = inlined_call_operand.vmem [shape: f32[1,32], index: 7, kind: input, shape index: {}]
  %s8 = inlined_call_operand.vmem [shape: f32[4,16,64], index: 8, kind: input, shape index: {}]
  %s9 = inlined_call_operand.vmem [shape: f32[1,32], index: 9, kind: input, shape index: {}]
  %s10 = inlined_call_operand.vmem [shape: f32[1,32], index: 10, kind: input, shape index: {}]
  %s11 = inlined_call_operand.vmem [shape: f32[4,16,16], index: 11, kind: input, shape index: {}]
  %s12 = inlined_call_operand.vmem [shape: f32[4,32,64], index: 12, kind: input, shape index: {}]
  %s13 = inlined_call_operand.vmem [shape: f32[1,64], index: 13, kind: input, shape index: {}]
  %s14 = inlined_call_operand.vmem [shape: f32[8,2,16], index: 14, kind: input, shape index: {}]
  %s15 = inlined_call_operand.vmem [shape: f32[1,64], index: 15, kind: input, shape index: {}]
  %s16 = inlined_call_operand.vmem [shape: f32[1,64], index: 16, kind: input, shape index: {}]
  %s17 = inlined_call_operand.vmem [shape: f32[2,64,100], index: 17, kind: input, shape index: {}]
  %s18 = inlined_call_operand.vmem [shape: f32[1,100], index: 18, kind: input, shape index: {}]
  %s19 = inlined_call_operand.vmem [shape: f32[100,100], index: 19, kind: input, shape index: {}]
  %s20 = inlined_call_operand.vmem [shape: f32[1,100], index: 20, kind: input, shape index: {}]
  %s21 = inlined_call_operand.vmem [shape: f32[100,4], index: 21, kind: input, shape index: {}]
  %s22 = inlined_call_operand.vmem [shape: f32[1,4], index: 22, kind: input, shape index: {}]
  %s23 = inlined_call_operand.vmem [shape: f32[2,2,4], index: 23, kind: output, shape index: {}]
  %s24 = sld [smem:[#allocation0]]
  $region125: #{siamese_forward.1} parent=0
    _
  %s26 = ssub.s32 1, %s24
  %s27 = scalar_select 0, %s26, %s24
  loop: start=0, step=1, limit=4
  $region2: #{siamese_forward.1} parent=0 // loop_pre_header
    _
  $region3: #{siamese_forward.1} parent=0 // loop_header
    %s29 = sphi 0, %s33
    %p30 = scmp.ge.s32.totalorder %s29, 4
    %s39 = sphi 0, %s41
    %s42 = sphi 0, %s39
    %s43 = sphi 0, %s42
    %s59 = sphi 0, %s43
    %s63 = sphi 0, %s63
    %s65 = sphi 0, %s63
    %s66 = sphi 0, %s65
    %s80 = sphi 0, %s66
    %s84 = sphi 0, %s84
    %s86 = sphi 0, %s84
    %s87 = sphi 0, %s86
    %s101 = sphi 0, %s87
    %s105 = sphi 0, %s105
    %s107 = sphi 0, %s105
    %s108 = sphi 0, %s107
    %s122 = sphi 0, %s108
    %s126 = sphi 0, %s126
    %s128 = sphi 0, %s126
    %s129 = sphi 0, %s128
    %s143 = sphi 0, %s129
    %s147 = sphi 0, %s147
    %s149 = sphi 0, %s147
    %s150 = sphi 0, %s149
    %s164 = sphi 0, %s150
    %s168 = sphi 0, %s168
    %s170 = sphi 0, %s168
    %s171 = sphi 0, %s170
    %s185 = sphi 0, %s171
    %s189 = sphi 0, %s189
    %s191 = sphi 0, %s189
    %s192 = sphi 0, %s191
    %s206 = sphi 0, %s192
    %s210 = sphi 0, %s210
    %s212 = sphi 0, %s210
    %s213 = sphi 0, %s212
    %s227 = sphi 0, %s213
    %s231 = sphi 0, %s231
    %s233 = sphi 0, %s231
    %s234 = sphi 0, %s233
    %s248 = sphi 0, %s234
    %s252 = sphi 0, %s252
    %s254 = sphi 0, %s252
    %s255 = sphi 0, %s254
    %s269 = sphi 0, %s255
    %s273 = sphi 0, %s273
    %s275 = sphi 0, %s273
    %s276 = sphi 0, %s275
    %s290 = sphi 0, %s276
    %s294 = sphi 0, %s294
    %s296 = sphi 0, %s294
    %s297 = sphi 0, %s296
    %s311 = sphi 0, %s297
    %s315 = sphi 0, %s315
    %s317 = sphi 0, %s315
    %s318 = sphi 0, %s317
    %s332 = sphi 0, %s318
    %s336 = sphi 0, %s336
    %s338 = sphi 0, %s336
    %s339 = sphi 0, %s338
    %s353 = sphi 0, %s339
    %s357 = sphi 0, %s357
    %s359 = sphi 0, %s357
    %s360 = sphi 0, %s359
    %s374 = sphi 0, %s360
    %s378 = sphi 0, %s378
    %s380 = sphi 0, %s378
    %s381 = sphi 0, %s380
    %s395 = sphi 0, %s381
    %s399 = sphi 0, %s399
    %s401 = sphi 0, %s399
    %s402 = sphi 0, %s401
    %s416 = sphi 0, %s402
    %s420 = sphi 0, %s420
    %s422 = sphi 0, %s420
    %s423 = sphi 0, %s422
    %s437 = sphi 0, %s423
    %s441 = sphi 0, %s441
    %s443 = sphi 0, %s441
    %s444 = sphi 0, %s443
    %s458 = sphi 0, %s444
    %s462 = sphi 0, %s462
    %s464 = sphi 0, %s462
    %s465 = sphi 0, %s464
    %s479 = sphi 0, %s465
    %s483 = sphi 0, %s483
    %s485 = sphi 0, %s483
    %s486 = sphi 0, %s485
    %s500 = sphi 0, %s486
    %s504 = sphi 0, %s504
    %s506 = sphi 0, %s504
    %s507 = sphi 0, %s506
    %s521 = sphi 0, %s507
    %s527 = sphi 0, %s529
    %s530 = sphi 0, %s527
    %s531 = sphi 0, %s530
    %s547 = sphi 0, %s531
  $region4: #{siamese_forward.1} parent=0 // loop_header_branch
    %32 = sbr.rel (%p30) target = $region8
  $region5: #{siamese_forward.1} parent=0 // loop_body
    %s34 = ssub.s32 %s29, 1
    %s35 = ssub.s32 %s29, 2
    %s36 = sadd.s32 %s29, 1
    %s37 = ssub.s32 %s29, %s36
    %p38 = scmp.eq.s32.totalorder %s37, 0
    %s40 = sadd.s32 %s39, 1
    %s41 = scalar_select %p38, %s39, %s40
    %p44 = pneg %p38
    %p45 = scmp.eq.s32.totalorder %s29, 1
    %p46 = por %p44, %p45
    %p47 = scmp.ne.s32.totalorder %s39, %s42
    %p48 = scmp.eq.s32.totalorder %s29, 0
    %p49 = por %p47, %p48
    %p50 = scmp.ne.s32.totalorder %s39, %s42
    %p51 = scmp.eq.s32.totalorder %s34, 1
    %p52 = por %p50, %p51
    %p53 = scmp.ne.s32.totalorder %s42, %s43
    %p54 = scmp.eq.s32.totalorder %s34, 0
    %p55 = por %p53, %p54
    %p56 = scmp.ne.s32.totalorder %s42, %s43
    %p57 = scmp.eq.s32.totalorder %s35, 1
    %p58 = por %p56, %p57
    %p60 = scmp.ne.s32.totalorder %s43, %s59
    %p61 = scmp.eq.s32.totalorder %s35, 0
    %p62 = por %p60, %p61
    %s64 = sadd.s32 %s63, 1
    %p67 = scmp.eq.s32.totalorder %s29, 1
    %p68 = scmp.ne.s32.totalorder %s63, %s65
    %p69 = scmp.eq.s32.totalorder %s29, 0
    %p70 = por %p68, %p69
    %p71 = scmp.ne.s32.totalorder %s63, %s65
    %p72 = scmp.eq.s32.totalorder %s34, 1
    %p73 = por %p71, %p72
    %p74 = scmp.ne.s32.totalorder %s65, %s66
    %p75 = scmp.eq.s32.totalorder %s34, 0
    %p76 = por %p74, %p75
    %p77 = scmp.ne.s32.totalorder %s65, %s66
    %p78 = scmp.eq.s32.totalorder %s35, 1
    %p79 = por %p77, %p78
    %p81 = scmp.ne.s32.totalorder %s66, %s80
    %p82 = scmp.eq.s32.totalorder %s35, 0
    %p83 = por %p81, %p82
    %s85 = sadd.s32 %s84, 1
    %p88 = scmp.eq.s32.totalorder %s29, 1
    %p89 = scmp.ne.s32.totalorder %s84, %s86
    %p90 = scmp.eq.s32.totalorder %s29, 0
    %p91 = por %p89, %p90
    %p92 = scmp.ne.s32.totalorder %s84, %s86
    %p93 = scmp.eq.s32.totalorder %s34, 1
    %p94 = por %p92, %p93
    %p95 = scmp.ne.s32.totalorder %s86, %s87
    %p96 = scmp.eq.s32.totalorder %s34, 0
    %p97 = por %p95, %p96
    %p98 = scmp.ne.s32.totalorder %s86, %s87
    %p99 = scmp.eq.s32.totalorder %s35, 1
    %p100 = por %p98, %p99
    %p102 = scmp.ne.s32.totalorder %s87, %s101
    %p103 = scmp.eq.s32.totalorder %s35, 0
    %p104 = por %p102, %p103
    %s106 = sadd.s32 %s105, 1
    %p109 = scmp.eq.s32.totalorder %s29, 1
    %p110 = scmp.ne.s32.totalorder %s105, %s107
    %p111 = scmp.eq.s32.totalorder %s29, 0
    %p112 = por %p110, %p111
    %p113 = scmp.ne.s32.totalorder %s105, %s107
    %p114 = scmp.eq.s32.totalorder %s34, 1
    %p115 = por %p113, %p114
    %p116 = scmp.ne.s32.totalorder %s107, %s108
    %p117 = scmp.eq.s32.totalorder %s34, 0
    %p118 = por %p116, %p117
    %p119 = scmp.ne.s32.totalorder %s107, %s108
    %p120 = scmp.eq.s32.totalorder %s35, 1
    %p121 = por %p119, %p120
    %p123 = scmp.ne.s32.totalorder %s108, %s122
    %p124 = scmp.eq.s32.totalorder %s35, 0
    %p125 = por %p123, %p124
    %s127 = sadd.s32 %s126, 1
    %p130 = scmp.eq.s32.totalorder %s29, 1
    %p131 = scmp.ne.s32.totalorder %s126, %s128
    %p132 = scmp.eq.s32.totalorder %s29, 0
    %p133 = por %p131, %p132
    %p134 = scmp.ne.s32.totalorder %s126, %s128
    %p135 = scmp.eq.s32.totalorder %s34, 1
    %p136 = por %p134, %p135
    %p137 = scmp.ne.s32.totalorder %s128, %s129
    %p138 = scmp.eq.s32.totalorder %s34, 0
    %p139 = por %p137, %p138
    %p140 = scmp.ne.s32.totalorder %s128, %s129
    %p141 = scmp.eq.s32.totalorder %s35, 1
    %p142 = por %p140, %p141
    %p144 = scmp.ne.s32.totalorder %s129, %s143
    %p145 = scmp.eq.s32.totalorder %s35, 0
    %p146 = por %p144, %p145
    %s148 = sadd.s32 %s147, 1
    %p151 = scmp.eq.s32.totalorder %s29, 1
    %p152 = scmp.ne.s32.totalorder %s147, %s149
    %p153 = scmp.eq.s32.totalorder %s29, 0
    %p154 = por %p152, %p153
    %p155 = scmp.ne.s32.totalorder %s147, %s149
    %p156 = scmp.eq.s32.totalorder %s34, 1
    %p157 = por %p155, %p156
    %p158 = scmp.ne.s32.totalorder %s149, %s150
    %p159 = scmp.eq.s32.totalorder %s34, 0
    %p160 = por %p158, %p159
    %p161 = scmp.ne.s32.totalorder %s149, %s150
    %p162 = scmp.eq.s32.totalorder %s35, 1
    %p163 = por %p161, %p162
    %p165 = scmp.ne.s32.totalorder %s150, %s164
    %p166 = scmp.eq.s32.totalorder %s35, 0
    %p167 = por %p165, %p166
    %s169 = sadd.s32 %s168, 1
    %p172 = scmp.eq.s32.totalorder %s29, 1
    %p173 = scmp.ne.s32.totalorder %s168, %s170
    %p174 = scmp.eq.s32.totalorder %s29, 0
    %p175 = por %p173, %p174
    %p176 = scmp.ne.s32.totalorder %s168, %s170
    %p177 = scmp.eq.s32.totalorder %s34, 1
    %p178 = por %p176, %p177
    %p179 = scmp.ne.s32.totalorder %s170, %s171
    %p180 = scmp.eq.s32.totalorder %s34, 0
    %p181 = por %p179, %p180
    %p182 = scmp.ne.s32.totalorder %s170, %s171
    %p183 = scmp.eq.s32.totalorder %s35, 1
    %p184 = por %p182, %p183
    %p186 = scmp.ne.s32.totalorder %s171, %s185
    %p187 = scmp.eq.s32.totalorder %s35, 0
    %p188 = por %p186, %p187
    %s190 = sadd.s32 %s189, 1
    %p193 = scmp.eq.s32.totalorder %s29, 1
    %p194 = scmp.ne.s32.totalorder %s189, %s191
    %p195 = scmp.eq.s32.totalorder %s29, 0
    %p196 = por %p194, %p195
    %p197 = scmp.ne.s32.totalorder %s189, %s191
    %p198 = scmp.eq.s32.totalorder %s34, 1
    %p199 = por %p197, %p198
    %p200 = scmp.ne.s32.totalorder %s191, %s192
    %p201 = scmp.eq.s32.totalorder %s34, 0
    %p202 = por %p200, %p201
    %p203 = scmp.ne.s32.totalorder %s191, %s192
    %p204 = scmp.eq.s32.totalorder %s35, 1
    %p205 = por %p203, %p204
    %p207 = scmp.ne.s32.totalorder %s192, %s206
    %p208 = scmp.eq.s32.totalorder %s35, 0
    %p209 = por %p207, %p208
    %s211 = sadd.s32 %s210, 1
    %p214 = scmp.eq.s32.totalorder %s29, 1
    %p215 = scmp.ne.s32.totalorder %s210, %s212
    %p216 = scmp.eq.s32.totalorder %s29, 0
    %p217 = por %p215, %p216
    %p218 = scmp.ne.s32.totalorder %s210, %s212
    %p219 = scmp.eq.s32.totalorder %s34, 1
    %p220 = por %p218, %p219
    %p221 = scmp.ne.s32.totalorder %s212, %s213
    %p222 = scmp.eq.s32.totalorder %s34, 0
    %p223 = por %p221, %p222
    %p224 = scmp.ne.s32.totalorder %s212, %s213
    %p225 = scmp.eq.s32.totalorder %s35, 1
    %p226 = por %p224, %p225
    %p228 = scmp.ne.s32.totalorder %s213, %s227
    %p229 = scmp.eq.s32.totalorder %s35, 0
    %p230 = por %p228, %p229
    %s232 = sadd.s32 %s231, 1
    %p235 = scmp.eq.s32.totalorder %s29, 1
    %p236 = scmp.ne.s32.totalorder %s231, %s233
    %p237 = scmp.eq.s32.totalorder %s29, 0
    %p238 = por %p236, %p237
    %p239 = scmp.ne.s32.totalorder %s231, %s233
    %p240 = scmp.eq.s32.totalorder %s34, 1
    %p241 = por %p239, %p240
    %p242 = scmp.ne.s32.totalorder %s233, %s234
    %p243 = scmp.eq.s32.totalorder %s34, 0
    %p244 = por %p242, %p243
    %p245 = scmp.ne.s32.totalorder %s233, %s234
    %p246 = scmp.eq.s32.totalorder %s35, 1
    %p247 = por %p245, %p246
    %p249 = scmp.ne.s32.totalorder %s234, %s248
    %p250 = scmp.eq.s32.totalorder %s35, 0
    %p251 = por %p249, %p250
    %s253 = sadd.s32 %s252, 1
    %p256 = scmp.eq.s32.totalorder %s29, 1
    %p257 = scmp.ne.s32.totalorder %s252, %s254
    %p258 = scmp.eq.s32.totalorder %s29, 0
    %p259 = por %p257, %p258
    %p260 = scmp.ne.s32.totalorder %s252, %s254
    %p261 = scmp.eq.s32.totalorder %s34, 1
    %p262 = por %p260, %p261
    %p263 = scmp.ne.s32.totalorder %s254, %s255
    %p264 = scmp.eq.s32.totalorder %s34, 0
    %p265 = por %p263, %p264
    %p266 = scmp.ne.s32.totalorder %s254, %s255
    %p267 = scmp.eq.s32.totalorder %s35, 1
    %p268 = por %p266, %p267
    %p270 = scmp.ne.s32.totalorder %s255, %s269
    %p271 = scmp.eq.s32.totalorder %s35, 0
    %p272 = por %p270, %p271
    %s274 = sadd.s32 %s273, 1
    %p277 = scmp.eq.s32.totalorder %s29, 1
    %p278 = scmp.ne.s32.totalorder %s273, %s275
    %p279 = scmp.eq.s32.totalorder %s29, 0
    %p280 = por %p278, %p279
    %p281 = scmp.ne.s32.totalorder %s273, %s275
    %p282 = scmp.eq.s32.totalorder %s34, 1
    %p283 = por %p281, %p282
    %p284 = scmp.ne.s32.totalorder %s275, %s276
    %p285 = scmp.eq.s32.totalorder %s34, 0
    %p286 = por %p284, %p285
    %p287 = scmp.ne.s32.totalorder %s275, %s276
    %p288 = scmp.eq.s32.totalorder %s35, 1
    %p289 = por %p287, %p288
    %p291 = scmp.ne.s32.totalorder %s276, %s290
    %p292 = scmp.eq.s32.totalorder %s35, 0
    %p293 = por %p291, %p292
    %s295 = sadd.s32 %s294, 1
    %p298 = scmp.eq.s32.totalorder %s29, 1
    %p299 = scmp.ne.s32.totalorder %s294, %s296
    %p300 = scmp.eq.s32.totalorder %s29, 0
    %p301 = por %p299, %p300
    %p302 = scmp.ne.s32.totalorder %s294, %s296
    %p303 = scmp.eq.s32.totalorder %s34, 1
    %p304 = por %p302, %p303
    %p305 = scmp.ne.s32.totalorder %s296, %s297
    %p306 = scmp.eq.s32.totalorder %s34, 0
    %p307 = por %p305, %p306
    %p308 = scmp.ne.s32.totalorder %s296, %s297
    %p309 = scmp.eq.s32.totalorder %s35, 1
    %p310 = por %p308, %p309
    %p312 = scmp.ne.s32.totalorder %s297, %s311
    %p313 = scmp.eq.s32.totalorder %s35, 0
    %p314 = por %p312, %p313
    %s316 = sadd.s32 %s315, 1
    %p319 = scmp.eq.s32.totalorder %s29, 1
    %p320 = scmp.ne.s32.totalorder %s315, %s317
    %p321 = scmp.eq.s32.totalorder %s29, 0
    %p322 = por %p320, %p321
    %p323 = scmp.ne.s32.totalorder %s315, %s317
    %p324 = scmp.eq.s32.totalorder %s34, 1
    %p325 = por %p323, %p324
    %p326 = scmp.ne.s32.totalorder %s317, %s318
    %p327 = scmp.eq.s32.totalorder %s34, 0
    %p328 = por %p326, %p327
    %p329 = scmp.ne.s32.totalorder %s317, %s318
    %p330 = scmp.eq.s32.totalorder %s35, 1
    %p331 = por %p329, %p330
    %p333 = scmp.ne.s32.totalorder %s318, %s332
    %p334 = scmp.eq.s32.totalorder %s35, 0
    %p335 = por %p333, %p334
    %s337 = sadd.s32 %s336, 1
    %p340 = scmp.eq.s32.totalorder %s29, 1
    %p341 = scmp.ne.s32.totalorder %s336, %s338
    %p342 = scmp.eq.s32.totalorder %s29, 0
    %p343 = por %p341, %p342
    %p344 = scmp.ne.s32.totalorder %s336, %s338
    %p345 = scmp.eq.s32.totalorder %s34, 1
    %p346 = por %p344, %p345
    %p347 = scmp.ne.s32.totalorder %s338, %s339
    %p348 = scmp.eq.s32.totalorder %s34, 0
    %p349 = por %p347, %p348
    %p350 = scmp.ne.s32.totalorder %s338, %s339
    %p351 = scmp.eq.s32.totalorder %s35, 1
    %p352 = por %p350, %p351
    %p354 = scmp.ne.s32.totalorder %s339, %s353
    %p355 = scmp.eq.s32.totalorder %s35, 0
    %p356 = por %p354, %p355
    %s358 = sadd.s32 %s357, 1
    %p361 = scmp.eq.s32.totalorder %s29, 1
    %p362 = scmp.ne.s32.totalorder %s357, %s359
    %p363 = scmp.eq.s32.totalorder %s29, 0
    %p364 = por %p362, %p363
    %p365 = scmp.ne.s32.totalorder %s357, %s359
    %p366 = scmp.eq.s32.totalorder %s34, 1
    %p367 = por %p365, %p366
    %p368 = scmp.ne.s32.totalorder %s359, %s360
    %p369 = scmp.eq.s32.totalorder %s34, 0
    %p370 = por %p368, %p369
    %p371 = scmp.ne.s32.totalorder %s359, %s360
    %p372 = scmp.eq.s32.totalorder %s35, 1
    %p373 = por %p371, %p372
    %p375 = scmp.ne.s32.totalorder %s360, %s374
    %p376 = scmp.eq.s32.totalorder %s35, 0
    %p377 = por %p375, %p376
    %s379 = sadd.s32 %s378, 1
    %p382 = scmp.eq.s32.totalorder %s29, 1
    %p383 = scmp.ne.s32.totalorder %s378, %s380
    %p384 = scmp.eq.s32.totalorder %s29, 0
    %p385 = por %p383, %p384
    %p386 = scmp.ne.s32.totalorder %s378, %s380
    %p387 = scmp.eq.s32.totalorder %s34, 1
    %p388 = por %p386, %p387
    %p389 = scmp.ne.s32.totalorder %s380, %s381
    %p390 = scmp.eq.s32.totalorder %s34, 0
    %p391 = por %p389, %p390
    %p392 = scmp.ne.s32.totalorder %s380, %s381
    %p393 = scmp.eq.s32.totalorder %s35, 1
    %p394 = por %p392, %p393
    %p396 = scmp.ne.s32.totalorder %s381, %s395
    %p397 = scmp.eq.s32.totalorder %s35, 0
    %p398 = por %p396, %p397
    %s400 = sadd.s32 %s399, 1
    %p403 = scmp.eq.s32.totalorder %s29, 1
    %p404 = scmp.ne.s32.totalorder %s399, %s401
    %p405 = scmp.eq.s32.totalorder %s29, 0
    %p406 = por %p404, %p405
    %p407 = scmp.ne.s32.totalorder %s399, %s401
    %p408 = scmp.eq.s32.totalorder %s34, 1
    %p409 = por %p407, %p408
    %p410 = scmp.ne.s32.totalorder %s401, %s402
    %p411 = scmp.eq.s32.totalorder %s34, 0
    %p412 = por %p410, %p411
    %p413 = scmp.ne.s32.totalorder %s401, %s402
    %p414 = scmp.eq.s32.totalorder %s35, 1
    %p415 = por %p413, %p414
    %p417 = scmp.ne.s32.totalorder %s402, %s416
    %p418 = scmp.eq.s32.totalorder %s35, 0
    %p419 = por %p417, %p418
    %s421 = sadd.s32 %s420, 1
    %p424 = scmp.eq.s32.totalorder %s29, 1
    %p425 = scmp.ne.s32.totalorder %s420, %s422
    %p426 = scmp.eq.s32.totalorder %s29, 0
    %p427 = por %p425, %p426
    %p428 = scmp.ne.s32.totalorder %s420, %s422
    %p429 = scmp.eq.s32.totalorder %s34, 1
    %p430 = por %p428, %p429
    %p431 = scmp.ne.s32.totalorder %s422, %s423
    %p432 = scmp.eq.s32.totalorder %s34, 0
    %p433 = por %p431, %p432
    %p434 = scmp.ne.s32.totalorder %s422, %s423
    %p435 = scmp.eq.s32.totalorder %s35, 1
    %p436 = por %p434, %p435
    %p438 = scmp.ne.s32.totalorder %s423, %s437
    %p439 = scmp.eq.s32.totalorder %s35, 0
    %p440 = por %p438, %p439
    %s442 = sadd.s32 %s441, 1
    %p445 = scmp.eq.s32.totalorder %s29, 1
    %p446 = scmp.ne.s32.totalorder %s441, %s443
    %p447 = scmp.eq.s32.totalorder %s29, 0
    %p448 = por %p446, %p447
    %p449 = scmp.ne.s32.totalorder %s441, %s443
    %p450 = scmp.eq.s32.totalorder %s34, 1
    %p451 = por %p449, %p450
    %p452 = scmp.ne.s32.totalorder %s443, %s444
    %p453 = scmp.eq.s32.totalorder %s34, 0
    %p454 = por %p452, %p453
    %p455 = scmp.ne.s32.totalorder %s443, %s444
    %p456 = scmp.eq.s32.totalorder %s35, 1
    %p457 = por %p455, %p456
    %p459 = scmp.ne.s32.totalorder %s444, %s458
    %p460 = scmp.eq.s32.totalorder %s35, 0
    %p461 = por %p459, %p460
    %s463 = sadd.s32 %s462, 1
    %p466 = scmp.eq.s32.totalorder %s29, 1
    %p467 = scmp.ne.s32.totalorder %s462, %s464
    %p468 = scmp.eq.s32.totalorder %s29, 0
    %p469 = por %p467, %p468
    %p470 = scmp.ne.s32.totalorder %s462, %s464
    %p471 = scmp.eq.s32.totalorder %s34, 1
    %p472 = por %p470, %p471
    %p473 = scmp.ne.s32.totalorder %s464, %s465
    %p474 = scmp.eq.s32.totalorder %s34, 0
    %p475 = por %p473, %p474
    %p476 = scmp.ne.s32.totalorder %s464, %s465
    %p477 = scmp.eq.s32.totalorder %s35, 1
    %p478 = por %p476, %p477
    %p480 = scmp.ne.s32.totalorder %s465, %s479
    %p481 = scmp.eq.s32.totalorder %s35, 0
    %p482 = por %p480, %p481
    %s484 = sadd.s32 %s483, 1
    %p487 = scmp.eq.s32.totalorder %s29, 1
    %p488 = scmp.ne.s32.totalorder %s483, %s485
    %p489 = scmp.eq.s32.totalorder %s29, 0
    %p490 = por %p488, %p489
    %p491 = scmp.ne.s32.totalorder %s483, %s485
    %p492 = scmp.eq.s32.totalorder %s34, 1
    %p493 = por %p491, %p492
    %p494 = scmp.ne.s32.totalorder %s485, %s486
    %p495 = scmp.eq.s32.totalorder %s34, 0
    %p496 = por %p494, %p495
    %p497 = scmp.ne.s32.totalorder %s485, %s486
    %p498 = scmp.eq.s32.totalorder %s35, 1
    %p499 = por %p497, %p498
    %p501 = scmp.ne.s32.totalorder %s486, %s500
    %p502 = scmp.eq.s32.totalorder %s35, 0
    %p503 = por %p501, %p502
    %s505 = sadd.s32 %s504, 1
    %p508 = scmp.eq.s32.totalorder %s29, 1
    %p509 = scmp.ne.s32.totalorder %s504, %s506
    %p510 = scmp.eq.s32.totalorder %s29, 0
    %p511 = por %p509, %p510
    %p512 = scmp.ne.s32.totalorder %s504, %s506
    %p513 = scmp.eq.s32.totalorder %s34, 1
    %p514 = por %p512, %p513
    %p515 = scmp.ne.s32.totalorder %s506, %s507
    %p516 = scmp.eq.s32.totalorder %s34, 0
    %p517 = por %p515, %p516
    %p518 = scmp.ne.s32.totalorder %s506, %s507
    %p519 = scmp.eq.s32.totalorder %s35, 1
    %p520 = por %p518, %p519
    %p522 = scmp.ne.s32.totalorder %s507, %s521
    %p523 = scmp.eq.s32.totalorder %s35, 0
    %p524 = por %p522, %p523
    %s525 = ssub.s32 %s29, %s36
    %p526 = scmp.eq.s32.totalorder %s525, 0
    %s528 = sadd.s32 %s527, 1
    %s529 = scalar_select %p526, %s527, %s528
    %p532 = pneg %p526
    %p533 = scmp.eq.s32.totalorder %s29, 1
    %p534 = por %p532, %p533
    %p535 = scmp.ne.s32.totalorder %s527, %s530
    %p536 = scmp.eq.s32.totalorder %s29, 0
    %p537 = por %p535, %p536
    %p538 = scmp.ne.s32.totalorder %s527, %s530
    %p539 = scmp.eq.s32.totalorder %s34, 1
    %p540 = por %p538, %p539
    %p541 = scmp.ne.s32.totalorder %s530, %s531
    %p542 = scmp.eq.s32.totalorder %s34, 0
    %p543 = por %p541, %p542
    %p544 = scmp.ne.s32.totalorder %s530, %s531
    %p545 = scmp.eq.s32.totalorder %s35, 1
    %p546 = por %p544, %p545
    %p548 = scmp.ne.s32.totalorder %s531, %s547
    %p549 = scmp.eq.s32.totalorder %s35, 0
    %p550 = por %p548, %p549
    %p551 = scmp.le.s32.totalorder 1, %s29
    %p552 = scmp.lt.s32.totalorder %s29, 3
    %p553 = pnand %p551, %p552
    %p554 = pneg %p553
    // Predicated region
    $region9: #{siamese_forward.1} parent=5 // pred_check
      _
    $region10: #{siamese_forward.1} parent=5 // pred_check_branch
      %556 = sbr.rel (%p553) target = $region12
    $region11: #{siamese_forward.1} parent=5 // pred_region
      %s557 = ssub.s32 %s29, 1
      // Predicated region
      $region13: #{siamese_forward.1} parent=11 // pred_check
        %p558 = pneg %p76
      $region14: #{siamese_forward.1} parent=11 // pred_check_branch
        %560 = sbr.rel (%p558) target = $region16
      $region15: #{siamese_forward.1} parent=11 // pred_region
        _
      $region16: #{siamese_forward.1} parent=11 // pred_fallthru
        _
      // Predicated region
      $region17: #{siamese_forward.1} parent=11 // pred_check
        %p561 = pneg %p97
      $region18: #{siamese_forward.1} parent=11 // pred_check_branch
        %563 = sbr.rel (%p561) target = $region20
      $region19: #{siamese_forward.1} parent=11 // pred_region
        _
      $region20: #{siamese_forward.1} parent=11 // pred_fallthru
        _
      // Predicated region
      $region21: #{siamese_forward.1} parent=11 // pred_check
        %p564 = pneg %p118
      $region22: #{siamese_forward.1} parent=11 // pred_check_branch
        %566 = sbr.rel (%p564) target = $region24
      $region23: #{siamese_forward.1} parent=11 // pred_region
        _
      $region24: #{siamese_forward.1} parent=11 // pred_fallthru
        _
      // Predicated region
      $region25: #{siamese_forward.1} parent=11 // pred_check
        %p567 = pneg %p139
      $region26: #{siamese_forward.1} parent=11 // pred_check_branch
        %569 = sbr.rel (%p567) target = $region28
      $region27: #{siamese_forward.1} parent=11 // pred_region
        _
      $region28: #{siamese_forward.1} parent=11 // pred_fallthru
        _
      // Predicated region
      $region29: #{siamese_forward.1} parent=11 // pred_check
        %p570 = pneg %p160
      $region30: #{siamese_forward.1} parent=11 // pred_check_branch
        %572 = sbr.rel (%p570) target = $region32
      $region31: #{siamese_forward.1} parent=11 // pred_region
        _
      $region32: #{siamese_forward.1} parent=11 // pred_fallthru
        _
      // Predicated region
      $region33: #{siamese_forward.1} parent=11 // pred_check
        %p573 = pneg %p181
      $region34: #{siamese_forward.1} parent=11 // pred_check_branch
        %575 = sbr.rel (%p573) target = $region36
      $region35: #{siamese_forward.1} parent=11 // pred_region
        _
      $region36: #{siamese_forward.1} parent=11 // pred_fallthru
        _
      // Predicated region
      $region37: #{siamese_forward.1} parent=11 // pred_check
        %p576 = pneg %p202
      $region38: #{siamese_forward.1} parent=11 // pred_check_branch
        %578 = sbr.rel (%p576) target = $region40
      $region39: #{siamese_forward.1} parent=11 // pred_region
        _
      $region40: #{siamese_forward.1} parent=11 // pred_fallthru
        _
      // Predicated region
      $region41: #{siamese_forward.1} parent=11 // pred_check
        %p579 = pneg %p223
      $region42: #{siamese_forward.1} parent=11 // pred_check_branch
        %581 = sbr.rel (%p579) target = $region44
      $region43: #{siamese_forward.1} parent=11 // pred_region
        _
      $region44: #{siamese_forward.1} parent=11 // pred_fallthru
        _
      // Predicated region
      $region45: #{siamese_forward.1} parent=11 // pred_check
        %p582 = pneg %p244
      $region46: #{siamese_forward.1} parent=11 // pred_check_branch
        %584 = sbr.rel (%p582) target = $region48
      $region47: #{siamese_forward.1} parent=11 // pred_region
        _
      $region48: #{siamese_forward.1} parent=11 // pred_fallthru
        _
      // Predicated region
      $region49: #{siamese_forward.1} parent=11 // pred_check
        %p585 = pneg %p265
      $region50: #{siamese_forward.1} parent=11 // pred_check_branch
        %587 = sbr.rel (%p585) target = $region52
      $region51: #{siamese_forward.1} parent=11 // pred_region
        _
      $region52: #{siamese_forward.1} parent=11 // pred_fallthru
        _
      // Predicated region
      $region53: #{siamese_forward.1} parent=11 // pred_check
        %p588 = pneg %p286
      $region54: #{siamese_forward.1} parent=11 // pred_check_branch
        %590 = sbr.rel (%p588) target = $region56
      $region55: #{siamese_forward.1} parent=11 // pred_region
        _
      $region56: #{siamese_forward.1} parent=11 // pred_fallthru
        _
      // Predicated region
      $region57: #{siamese_forward.1} parent=11 // pred_check
        %p591 = pneg %p307
      $region58: #{siamese_forward.1} parent=11 // pred_check_branch
        %593 = sbr.rel (%p591) target = $region60
      $region59: #{siamese_forward.1} parent=11 // pred_region
        _
      $region60: #{siamese_forward.1} parent=11 // pred_fallthru
        _
      // Predicated region
      $region61: #{siamese_forward.1} parent=11 // pred_check
        %p594 = pneg %p328
      $region62: #{siamese_forward.1} parent=11 // pred_check_branch
        %596 = sbr.rel (%p594) target = $region64
      $region63: #{siamese_forward.1} parent=11 // pred_region
        _
      $region64: #{siamese_forward.1} parent=11 // pred_fallthru
        _
      // Predicated region
      $region65: #{siamese_forward.1} parent=11 // pred_check
        %p597 = pneg %p349
      $region66: #{siamese_forward.1} parent=11 // pred_check_branch
        %599 = sbr.rel (%p597) target = $region68
      $region67: #{siamese_forward.1} parent=11 // pred_region
        _
      $region68: #{siamese_forward.1} parent=11 // pred_fallthru
        _
      // Predicated region
      $region69: #{siamese_forward.1} parent=11 // pred_check
        %p600 = pneg %p370
      $region70: #{siamese_forward.1} parent=11 // pred_check_branch
        %602 = sbr.rel (%p600) target = $region72
      $region71: #{siamese_forward.1} parent=11 // pred_region
        _
      $region72: #{siamese_forward.1} parent=11 // pred_fallthru
        _
      // Predicated region
      $region73: #{siamese_forward.1} parent=11 // pred_check
        %p603 = pneg %p391
      $region74: #{siamese_forward.1} parent=11 // pred_check_branch
        %605 = sbr.rel (%p603) target = $region76
      $region75: #{siamese_forward.1} parent=11 // pred_region
        _
      $region76: #{siamese_forward.1} parent=11 // pred_fallthru
        _
      // Predicated region
      $region77: #{siamese_forward.1} parent=11 // pred_check
        %p606 = pneg %p412
      $region78: #{siamese_forward.1} parent=11 // pred_check_branch
        %608 = sbr.rel (%p606) target = $region80
      $region79: #{siamese_forward.1} parent=11 // pred_region
        _
      $region80: #{siamese_forward.1} parent=11 // pred_fallthru
        _
      // Predicated region
      $region81: #{siamese_forward.1} parent=11 // pred_check
        %p609 = pneg %p433
      $region82: #{siamese_forward.1} parent=11 // pred_check_branch
        %611 = sbr.rel (%p609) target = $region84
      $region83: #{siamese_forward.1} parent=11 // pred_region
        _
      $region84: #{siamese_forward.1} parent=11 // pred_fallthru
        _
      // Predicated region
      $region85: #{siamese_forward.1} parent=11 // pred_check
        %p612 = pneg %p454
      $region86: #{siamese_forward.1} parent=11 // pred_check_branch
        %614 = sbr.rel (%p612) target = $region88
      $region87: #{siamese_forward.1} parent=11 // pred_region
        _
      $region88: #{siamese_forward.1} parent=11 // pred_fallthru
        _
      // Predicated region
      $region89: #{siamese_forward.1} parent=11 // pred_check
        %p615 = pneg %p475
      $region90: #{siamese_forward.1} parent=11 // pred_check_branch
        %617 = sbr.rel (%p615) target = $region92
      $region91: #{siamese_forward.1} parent=11 // pred_region
        _
      $region92: #{siamese_forward.1} parent=11 // pred_fallthru
        _
      // Predicated region
      $region93: #{siamese_forward.1} parent=11 // pred_check
        %p618 = pneg %p496
      $region94: #{siamese_forward.1} parent=11 // pred_check_branch
        %620 = sbr.rel (%p618) target = $region96
      $region95: #{siamese_forward.1} parent=11 // pred_region
        _
      $region96: #{siamese_forward.1} parent=11 // pred_fallthru
        _
      // Predicated region
      $region97: #{siamese_forward.1} parent=11 // pred_check
        %p621 = pneg %p517
      $region98: #{siamese_forward.1} parent=11 // pred_check_branch
        %623 = sbr.rel (%p621) target = $region100
      $region99: #{siamese_forward.1} parent=11 // pred_region
        _
      $region100: #{siamese_forward.1} parent=11 // pred_fallthru
        _
    $region12: #{siamese_forward.1} parent=5 // pred_fallthru
      _
    %p624 = scmp.lt.s32.totalorder %s29, 2
    // Predicated region
    $region101: #{siamese_forward.1} parent=5 // pred_check
      %p625 = pneg %p624
    $region102: #{siamese_forward.1} parent=5 // pred_check_branch
      %627 = sbr.rel (%p625) target = $region104
    $region103: #{siamese_forward.1} parent=5 // pred_region
      // Predicated region
      $region105: #{siamese_forward.1} parent=103 // pred_check
        %p628 = pneg %p49
      $region106: #{siamese_forward.1} parent=103 // pred_check_branch
        %630 = sbr.rel (%p628) target = $region108
      $region107: #{siamese_forward.1} parent=103 // pred_region
        %p631 = scmp.lt.s32.totalorder %s29, 1
        %s632 = scalar_select %p631, %s29, 1
        %s633 = smul.addr %s632, 60
        %s634 = smul.addr %s633, 8
        %s635 = scalar_lea.vmem %s0, %s634
      $region108: #{siamese_forward.1} parent=103 // pred_fallthru
        _
    $region104: #{siamese_forward.1} parent=5 // pred_fallthru
      _
    %p636 = scmp.le.s32.totalorder 1, %s29
    %p637 = scmp.lt.s32.totalorder %s29, 3
    %p638 = pnand %p636, %p637
    %p639 = pneg %p638
    // Predicated region
    $region109: #{siamese_forward.1} parent=5 // pred_check
      _
    $region110: #{siamese_forward.1} parent=5 // pred_check_branch
      %641 = sbr.rel (%p638) target = $region112
    $region111: #{siamese_forward.1} parent=5 // pred_region
      %s642 = ssub.s32 %s29, 1
      %p643 = scmp.lt.s32.totalorder %s34, 1
      %s644 = scalar_select %p643, %s34, 1
      %s645 = smul.addr %s644, 60
      %s646 = smul.addr %s645, 8
      %s647 = scalar_lea.vmem %s0, %s646
      %p648 = pneg %p55
      %p649 = pneg %p52
      %p650 = pneg %p76
      %p651 = pneg %p73
      %p652 = pneg %p97
      %p653 = pneg %p94
      %p654 = pneg %p118
      %p655 = pneg %p115
      %p656 = pneg %p139
      %p657 = pneg %p136
      %p658 = pneg %p160
      %p659 = pneg %p157
      %p660 = pneg %p181
      %p661 = pneg %p178
      %p662 = pneg %p202
      %p663 = pneg %p199
      %p664 = pneg %p223
      %p665 = pneg %p220
      %p666 = pneg %p244
      %p667 = pneg %p241
      %p668 = pneg %p265
      %p669 = pneg %p262
      %p670 = pneg %p286
      %p671 = pneg %p283
      %p672 = pneg %p307
      %p673 = pneg %p304
      %p674 = pneg %p328
      %p675 = pneg %p325
      %p676 = pneg %p349
      %p677 = pneg %p346
      %p678 = pneg %p370
      %p679 = pneg %p367
      %p680 = pneg %p391
      %p681 = pneg %p388
      %p682 = pneg %p412
      %p683 = pneg %p409
      %p684 = pneg %p433
      %p685 = pneg %p430
      %p686 = pneg %p454
      %p687 = pneg %p451
      %p688 = pneg %p475
      %p689 = pneg %p472
      %p690 = pneg %p496
      %p691 = pneg %p493
      %p692 = pneg %p517
      %p693 = pneg %p514
      %p694 = pneg %p543
      %p695 = pneg %p540
      %p696 = scmp.lt.s32.totalorder %s34, 1
      %s697 = scalar_select %p696, %s34, 1
      %s698 = smul.addr %s697, 2
      %s699 = scalar_lea.vmem %s23, %s698
      %p700 = scmp.lt.s32.totalorder %s34, 1
      %s701 = scalar_select %p700, %s34, 1
      %s702 = smul.addr %s701, 60
      %s703 = smul.addr %s702, 8
      %s704 = scalar_lea.vmem %s0, %s703
      %p705 = scmp.lt.s32.totalorder %s34, 1
      %s706 = scalar_select %p705, %s34, 1
      %s707 = smul.addr %s706, 2
      %s708 = scalar_lea.vmem %s23, %s707
      %v709 = vld [vmem:[%s1] sm:$0xff]
      %v710 = vld [vmem:[%s1 + $0x8] sm:$0xff]
      %v711 = vld [vmem:[%s1 + $0x10] sm:$0xff]
      %v712 = vld [vmem:[%s1 + $0x18] sm:$0xff]
      %v713 = vld [vmem:[%s1 + $0x20] sm:$0xff]
      %v714 = vld [vmem:[%s1 + $0x28] sm:$0xff]
      %v715 = vld [vmem:[%s1 + $0x30] sm:$0xff]
      %v716 = vld [vmem:[%s1 + $0x38] sm:$0xff]
      %v717 = vld [vmem:[%s1 + $0x40] sm:$0xff]
      %v718 = vld [vmem:[%s1 + $0x48] sm:$0xff]
      %v719 = vld [vmem:[%s1 + $0x50] sm:$0xff]
      %v720 = vld [vmem:[%s2] sm:$0x1]
      %v721 = vld [vmem:[%s704] sm:$0xff]
      %v722 = vld [vmem:[%s704 + $0x8] sm:$0xff]
      %v723 = vld [vmem:[%s704 + $0x10] sm:$0xff]
      %v724 = vld [vmem:[%s704 + $0x18] sm:$0xff]
      %v725 = vld [vmem:[%s704 + $0x20] sm:$0xff]
      %v726 = vld [vmem:[%s704 + $0x28] sm:$0xff]
      %v727 = vld [vmem:[%s704 + $0x30] sm:$0xff]
      %v728 = vld [vmem:[%s704 + $0x38] sm:$0xff]
      %v729 = vld [vmem:[%s704 + $0x40] sm:$0xff]
      %v730 = vld [vmem:[%s704 + $0x48] sm:$0xff]
      %v731 = vld [vmem:[%s704 + $0x50] sm:$0xff]
      %v732 = vld [vmem:[%s704 + $0x58] sm:$0xff]
      %v733 = vld [vmem:[%s704 + $0x60] sm:$0xff]
      %v734 = vld [vmem:[%s704 + $0x68] sm:$0xff]
      %v735 = vld [vmem:[%s704 + $0x70] sm:$0xff]
      %v737 = vperm.slane %v720, 0
      %vm739 = vcmask 719872
      %v741 = vsel %vm739, %v721, 0
      %v744 = vsel %vm739, %v722, 0
      %v747 = vsel %vm739, %v723, 0
      %v750 = vsel %vm739, %v724, 0
      %v753 = vsel %vm739, %v725, 0
      %v756 = vsel %vm739, %v726, 0
      %v759 = vsel %vm739, %v727, 0
      %v762 = vsel %vm739, %v728, 0
      %v765 = vsel %vm739, %v729, 0
      %v768 = vsel %vm739, %v730, 0
      %v771 = vsel %vm739, %v731, 0
      %v774 = vsel %vm739, %v732, 0
      %v777 = vsel %vm739, %v733, 0
      %v780 = vsel %vm739, %v734, 0
      %v783 = vsel %vm739, %v735, 0
      %785 = vmatpush.msra.mxu0 0.0
      %786 = vmatpush.msra.mxu0 0.0
      %787 = vmatpush.msra.mxu0 0.0
      %788 = vmatpush.msra.mxu0 0.0
      %789 = vmatpush.msra.mxu0 0.0
      %790 = vmatpush.msra.mxu0 %v719
      %791 = vmatpush.msra.mxu0 %v718
      %792 = vmatpush.msra.mxu0 %v717
      %793 = vmatpush.msra.mxu0 %v716
      %794 = vmatpush.msra.mxu0 %v715
      %795 = vmatpush.msra.mxu0 %v714
      %796 = vmatpush.msra.mxu0 %v713
      %797 = vmatpush.msra.mxu0 %v712
      %798 = vmatpush.msra.mxu0 %v711
      %799 = vmatpush.msra.mxu0 %v710
      %800 = vmatpush.msra.mxu0 %v709
      %801 = vmatmul.f32.gmra.mxu0 %v741
      %v802 = vpop.f32.mrf.mxu0
      %v803 = vadd.f32 %v737, %v802
      %804 = vmatmul.f32.gmra.mxu0 %v744
      %v805 = vpop.f32.mrf.mxu0
      %v806 = vadd.f32 %v737, %v805
      %807 = vmatmul.f32.gmra.mxu0 %v747
      %v808 = vpop.f32.mrf.mxu0
      %v809 = vadd.f32 %v737, %v808
      %810 = vmatmul.f32.gmra.mxu0 %v750
      %v811 = vpop.f32.mrf.mxu0
      %v812 = vadd.f32 %v737, %v811
      %813 = vmatmul.f32.gmra.mxu0 %v753
      %v814 = vpop.f32.mrf.mxu0
      %v815 = vadd.f32 %v737, %v814
      %816 = vmatmul.f32.gmra.mxu0 %v756
      %v817 = vpop.f32.mrf.mxu0
      %v818 = vadd.f32 %v737, %v817
      %819 = vmatmul.f32.gmra.mxu0 %v759
      %v820 = vpop.f32.mrf.mxu0
      %v821 = vadd.f32 %v737, %v820
      %822 = vmatmul.f32.gmra.mxu0 %v762
      %v823 = vpop.f32.mrf.mxu0
      %v824 = vadd.f32 %v737, %v823
      %825 = vmatmul.f32.gmra.mxu0 %v765
      %v826 = vpop.f32.mrf.mxu0
      %v827 = vadd.f32 %v737, %v826
      %828 = vmatmul.f32.gmra.mxu0 %v768
      %v829 = vpop.f32.mrf.mxu0
      %v830 = vadd.f32 %v737, %v829
      %831 = vmatmul.f32.gmra.mxu0 %v771
      %v832 = vpop.f32.mrf.mxu0
      %v833 = vadd.f32 %v737, %v832
      %834 = vmatmul.f32.gmra.mxu0 %v774
      %v835 = vpop.f32.mrf.mxu0
      %v836 = vadd.f32 %v737, %v835
      %837 = vmatmul.f32.gmra.mxu0 %v777
      %v838 = vpop.f32.mrf.mxu0
      %v839 = vadd.f32 %v737, %v838
      %840 = vmatmul.f32.gmra.mxu0 %v780
      %v841 = vpop.f32.mrf.mxu0
      %v842 = vadd.f32 %v737, %v841
      %843 = vmatmul.f32.gmra.mxu0 %v783
      %v844 = vpop.f32.mrf.mxu0
      %v845 = vadd.f32 %v737, %v844
      %846 = vdwg.mxu0
      %v847 = vmax.f32 %v803, 0.0
      %v848 = vmax.f32 %v806, 0.0
      %v849 = vmax.f32 %v809, 0.0
      %v850 = vmax.f32 %v812, 0.0
      %v851 = vmax.f32 %v815, 0.0
      %v852 = vmax.f32 %v818, 0.0
      %v853 = vmax.f32 %v821, 0.0
      %v854 = vmax.f32 %v824, 0.0
      %v855 = vmax.f32 %v827, 0.0
      %v856 = vmax.f32 %v830, 0.0
      %v857 = vmax.f32 %v833, 0.0
      %v858 = vmax.f32 %v836, 0.0
      %v859 = vmax.f32 %v839, 0.0
      %v860 = vmax.f32 %v842, 0.0
      %v861 = vmax.f32 %v845, 0.0
      %s862 = scalar_lea.vmem %s704, 120
      %v863 = vld [vmem:[%s862] sm:$0xff]
      %v864 = vld [vmem:[%s862 + $0x8] sm:$0xff]
      %v865 = vld [vmem:[%s862 + $0x10] sm:$0xff]
      %v866 = vld [vmem:[%s862 + $0x18] sm:$0xff]
      %v867 = vld [vmem:[%s862 + $0x20] sm:$0xff]
      %v868 = vld [vmem:[%s862 + $0x28] sm:$0xff]
      %v869 = vld [vmem:[%s862 + $0x30] sm:$0xff]
      %v870 = vld [vmem:[%s862 + $0x38] sm:$0xff]
      %v871 = vld [vmem:[%s862 + $0x40] sm:$0xff]
      %v872 = vld [vmem:[%s862 + $0x48] sm:$0xff]
      %v873 = vld [vmem:[%s862 + $0x50] sm:$0xff]
      %v874 = vld [vmem:[%s862 + $0x58] sm:$0xff]
      %v875 = vld [vmem:[%s862 + $0x60] sm:$0xff]
      %v876 = vld [vmem:[%s862 + $0x68] sm:$0xff]
      %v877 = vld [vmem:[%s862 + $0x70] sm:$0xff]
      %v879 = vsel %vm739, %v863, 0
      %v882 = vsel %vm739, %v864, 0
      %v885 = vsel %vm739, %v865, 0
      %v888 = vsel %vm739, %v866, 0
      %v891 = vsel %vm739, %v867, 0
      %v894 = vsel %vm739, %v868, 0
      %v897 = vsel %vm739, %v869, 0
      %v900 = vsel %vm739, %v870, 0
      %v903 = vsel %vm739, %v871, 0
      %v906 = vsel %vm739, %v872, 0
      %v909 = vsel %vm739, %v873, 0
      %v912 = vsel %vm739, %v874, 0
      %v915 = vsel %vm739, %v875, 0
      %v918 = vsel %vm739, %v876, 0
      %v921 = vsel %vm739, %v877, 0
      %923 = vmatpush.msra.mxu0 0.0
      %924 = vmatpush.msra.mxu0 0.0
      %925 = vmatpush.msra.mxu0 0.0
      %926 = vmatpush.msra.mxu0 0.0
      %927 = vmatpush.msra.mxu0 0.0
      %928 = vmatpush.msra.mxu0 %v719
      %929 = vmatpush.msra.mxu0 %v718
      %930 = vmatpush.msra.mxu0 %v717
      %931 = vmatpush.msra.mxu0 %v716
      %932 = vmatpush.msra.mxu0 %v715
      %933 = vmatpush.msra.mxu0 %v714
      %934 = vmatpush.msra.mxu0 %v713
      %935 = vmatpush.msra.mxu0 %v712
      %936 = vmatpush.msra.mxu0 %v711
      %937 = vmatpush.msra.mxu0 %v710
      %938 = vmatpush.msra.mxu0 %v709
      %939 = vmatmul.f32.gmra.mxu0 %v879
      %v940 = vpop.f32.mrf.mxu0
      %v941 = vadd.f32 %v737, %v940
      %942 = vmatmul.f32.gmra.mxu0 %v882
      %v943 = vpop.f32.mrf.mxu0
      %v944 = vadd.f32 %v737, %v943
      %945 = vmatmul.f32.gmra.mxu0 %v885
      %v946 = vpop.f32.mrf.mxu0
      %v947 = vadd.f32 %v737, %v946
      %948 = vmatmul.f32.gmra.mxu0 %v888
      %v949 = vpop.f32.mrf.mxu0
      %v950 = vadd.f32 %v737, %v949
      %951 = vmatmul.f32.gmra.mxu0 %v891
      %v952 = vpop.f32.mrf.mxu0
      %v953 = vadd.f32 %v737, %v952
      %954 = vmatmul.f32.gmra.mxu0 %v894
      %v955 = vpop.f32.mrf.mxu0
      %v956 = vadd.f32 %v737, %v955
      %957 = vmatmul.f32.gmra.mxu0 %v897
      %v958 = vpop.f32.mrf.mxu0
      %v959 = vadd.f32 %v737, %v958
      %960 = vmatmul.f32.gmra.mxu0 %v900
      %v961 = vpop.f32.mrf.mxu0
      %v962 = vadd.f32 %v737, %v961
      %963 = vmatmul.f32.gmra.mxu0 %v903
      %v964 = vpop.f32.mrf.mxu0
      %v965 = vadd.f32 %v737, %v964
      %966 = vmatmul.f32.gmra.mxu0 %v906
      %v967 = vpop.f32.mrf.mxu0
      %v968 = vadd.f32 %v737, %v967
      %969 = vmatmul.f32.gmra.mxu0 %v909
      %v970 = vpop.f32.mrf.mxu0
      %v971 = vadd.f32 %v737, %v970
      %972 = vmatmul.f32.gmra.mxu0 %v912
      %v973 = vpop.f32.mrf.mxu0
      %v974 = vadd.f32 %v737, %v973
      %975 = vmatmul.f32.gmra.mxu0 %v915
      %v976 = vpop.f32.mrf.mxu0
      %v977 = vadd.f32 %v737, %v976
      %978 = vmatmul.f32.gmra.mxu0 %v918
      %v979 = vpop.f32.mrf.mxu0
      %v980 = vadd.f32 %v737, %v979
      %981 = vmatmul.f32.gmra.mxu0 %v921
      %v982 = vpop.f32.mrf.mxu0
      %v983 = vadd.f32 %v737, %v982
      %984 = vdwg.mxu0
      %v985 = vmax.f32 %v941, 0.0
      %v986 = vmax.f32 %v944, 0.0
      %v987 = vmax.f32 %v947, 0.0
      %v988 = vmax.f32 %v950, 0.0
      %v989 = vmax.f32 %v953, 0.0
      %v990 = vmax.f32 %v956, 0.0
      %v991 = vmax.f32 %v959, 0.0
      %v992 = vmax.f32 %v962, 0.0
      %v993 = vmax.f32 %v965, 0.0
      %v994 = vmax.f32 %v968, 0.0
      %v995 = vmax.f32 %v971, 0.0
      %v996 = vmax.f32 %v974, 0.0
      %v997 = vmax.f32 %v977, 0.0
      %v998 = vmax.f32 %v980, 0.0
      %v999 = vmax.f32 %v983, 0.0
      %v1000 = vmax.f32 %v847, %v985
      %v1001 = vmax.f32 %v848, %v986
      %v1002 = vmax.f32 %v849, %v987
      %v1003 = vmax.f32 %v850, %v988
      %v1004 = vmax.f32 %v851, %v989
      %v1005 = vmax.f32 %v852, %v990
      %v1006 = vmax.f32 %v853, %v991
      %v1007 = vmax.f32 %v854, %v992
      %v1008 = vmax.f32 %v855, %v993
      %v1009 = vmax.f32 %v856, %v994
      %v1010 = vmax.f32 %v857, %v995
      %v1011 = vmax.f32 %v858, %v996
      %v1012 = vmax.f32 %v859, %v997
      %v1013 = vmax.f32 %v860, %v998
      %v1014 = vmax.f32 %v861, %v999
      %s1015 = scalar_lea.vmem %s704, 240
      %v1016 = vld [vmem:[%s1015] sm:$0xff]
      %v1017 = vld [vmem:[%s1015 + $0x8] sm:$0xff]
      %v1018 = vld [vmem:[%s1015 + $0x10] sm:$0xff]
      %v1019 = vld [vmem:[%s1015 + $0x18] sm:$0xff]
      %v1020 = vld [vmem:[%s1015 + $0x20] sm:$0xff]
      %v1021 = vld [vmem:[%s1015 + $0x28] sm:$0xff]
      %v1022 = vld [vmem:[%s1015 + $0x30] sm:$0xff]
      %v1023 = vld [vmem:[%s1015 + $0x38] sm:$0xff]
      %v1024 = vld [vmem:[%s1015 + $0x40] sm:$0xff]
      %v1025 = vld [vmem:[%s1015 + $0x48] sm:$0xff]
      %v1026 = vld [vmem:[%s1015 + $0x50] sm:$0xff]
      %v1027 = vld [vmem:[%s1015 + $0x58] sm:$0xff]
      %v1028 = vld [vmem:[%s1015 + $0x60] sm:$0xff]
      %v1029 = vld [vmem:[%s1015 + $0x68] sm:$0xff]
      %v1030 = vld [vmem:[%s1015 + $0x70] sm:$0xff]
      %v1032 = vsel %vm739, %v1016, 0
      %v1035 = vsel %vm739, %v1017, 0
      %v1038 = vsel %vm739, %v1018, 0
      %v1041 = vsel %vm739, %v1019, 0
      %v1044 = vsel %vm739, %v1020, 0
      %v1047 = vsel %vm739, %v1021, 0
      %v1050 = vsel %vm739, %v1022, 0
      %v1053 = vsel %vm739, %v1023, 0
      %v1056 = vsel %vm739, %v1024, 0
      %v1059 = vsel %vm739, %v1025, 0
      %v1062 = vsel %vm739, %v1026, 0
      %v1065 = vsel %vm739, %v1027, 0
      %v1068 = vsel %vm739, %v1028, 0
      %v1071 = vsel %vm739, %v1029, 0
      %v1074 = vsel %vm739, %v1030, 0
      %1076 = vmatpush.msra.mxu0 0.0
      %1077 = vmatpush.msra.mxu0 0.0
      %1078 = vmatpush.msra.mxu0 0.0
      %1079 = vmatpush.msra.mxu0 0.0
      %1080 = vmatpush.msra.mxu0 0.0
      %1081 = vmatpush.msra.mxu0 %v719
      %1082 = vmatpush.msra.mxu0 %v718
      %1083 = vmatpush.msra.mxu0 %v717
      %1084 = vmatpush.msra.mxu0 %v716
      %1085 = vmatpush.msra.mxu0 %v715
      %1086 = vmatpush.msra.mxu0 %v714
      %1087 = vmatpush.msra.mxu0 %v713
      %1088 = vmatpush.msra.mxu0 %v712
      %1089 = vmatpush.msra.mxu0 %v711
      %1090 = vmatpush.msra.mxu0 %v710
      %1091 = vmatpush.msra.mxu0 %v709
      %1092 = vmatmul.f32.gmra.mxu0 %v1032
      %v1093 = vpop.f32.mrf.mxu0
      %v1094 = vadd.f32 %v737, %v1093
      %1095 = vmatmul.f32.gmra.mxu0 %v1035
      %v1096 = vpop.f32.mrf.mxu0
      %v1097 = vadd.f32 %v737, %v1096
      %1098 = vmatmul.f32.gmra.mxu0 %v1038
      %v1099 = vpop.f32.mrf.mxu0
      %v1100 = vadd.f32 %v737, %v1099
      %1101 = vmatmul.f32.gmra.mxu0 %v1041
      %v1102 = vpop.f32.mrf.mxu0
      %v1103 = vadd.f32 %v737, %v1102
      %1104 = vmatmul.f32.gmra.mxu0 %v1044
      %v1105 = vpop.f32.mrf.mxu0
      %v1106 = vadd.f32 %v737, %v1105
      %1107 = vmatmul.f32.gmra.mxu0 %v1047
      %v1108 = vpop.f32.mrf.mxu0
      %v1109 = vadd.f32 %v737, %v1108
      %1110 = vmatmul.f32.gmra.mxu0 %v1050
      %v1111 = vpop.f32.mrf.mxu0
      %v1112 = vadd.f32 %v737, %v1111
      %1113 = vmatmul.f32.gmra.mxu0 %v1053
      %v1114 = vpop.f32.mrf.mxu0
      %v1115 = vadd.f32 %v737, %v1114
      %1116 = vmatmul.f32.gmra.mxu0 %v1056
      %v1117 = vpop.f32.mrf.mxu0
      %v1118 = vadd.f32 %v737, %v1117
      %1119 = vmatmul.f32.gmra.mxu0 %v1059
      %v1120 = vpop.f32.mrf.mxu0
      %v1121 = vadd.f32 %v737, %v1120
      %1122 = vmatmul.f32.gmra.mxu0 %v1062
      %v1123 = vpop.f32.mrf.mxu0
      %v1124 = vadd.f32 %v737, %v1123
      %1125 = vmatmul.f32.gmra.mxu0 %v1065
      %v1126 = vpop.f32.mrf.mxu0
      %v1127 = vadd.f32 %v737, %v1126
      %1128 = vmatmul.f32.gmra.mxu0 %v1068
      %v1129 = vpop.f32.mrf.mxu0
      %v1130 = vadd.f32 %v737, %v1129
      %1131 = vmatmul.f32.gmra.mxu0 %v1071
      %v1132 = vpop.f32.mrf.mxu0
      %v1133 = vadd.f32 %v737, %v1132
      %1134 = vmatmul.f32.gmra.mxu0 %v1074
      %v1135 = vpop.f32.mrf.mxu0
      %v1136 = vadd.f32 %v737, %v1135
      %1137 = vdwg.mxu0
      %v1138 = vmax.f32 %v1094, 0.0
      %v1139 = vmax.f32 %v1097, 0.0
      %v1140 = vmax.f32 %v1100, 0.0
      %v1141 = vmax.f32 %v1103, 0.0
      %v1142 = vmax.f32 %v1106, 0.0
      %v1143 = vmax.f32 %v1109, 0.0
      %v1144 = vmax.f32 %v1112, 0.0
      %v1145 = vmax.f32 %v1115, 0.0
      %v1146 = vmax.f32 %v1118, 0.0
      %v1147 = vmax.f32 %v1121, 0.0
      %v1148 = vmax.f32 %v1124, 0.0
      %v1149 = vmax.f32 %v1127, 0.0
      %v1150 = vmax.f32 %v1130, 0.0
      %v1151 = vmax.f32 %v1133, 0.0
      %v1152 = vmax.f32 %v1136, 0.0
      %v1153 = vmax.f32 %v1000, %v1138
      %v1154 = vmax.f32 %v1001, %v1139
      %v1155 = vmax.f32 %v1002, %v1140
      %v1156 = vmax.f32 %v1003, %v1141
      %v1157 = vmax.f32 %v1004, %v1142
      %v1158 = vmax.f32 %v1005, %v1143
      %v1159 = vmax.f32 %v1006, %v1144
      %v1160 = vmax.f32 %v1007, %v1145
      %v1161 = vmax.f32 %v1008, %v1146
      %v1162 = vmax.f32 %v1009, %v1147
      %v1163 = vmax.f32 %v1010, %v1148
      %v1164 = vmax.f32 %v1011, %v1149
      %v1165 = vmax.f32 %v1012, %v1150
      %v1166 = vmax.f32 %v1013, %v1151
      %v1167 = vmax.f32 %v1014, %v1152
      %s1168 = scalar_lea.vmem %s704, 360
      %v1169 = vld [vmem:[%s1168] sm:$0xff]
      %v1170 = vld [vmem:[%s1168 + $0x8] sm:$0xff]
      %v1171 = vld [vmem:[%s1168 + $0x10] sm:$0xff]
      %v1172 = vld [vmem:[%s1168 + $0x18] sm:$0xff]
      %v1173 = vld [vmem:[%s1168 + $0x20] sm:$0xff]
      %v1174 = vld [vmem:[%s1168 + $0x28] sm:$0xff]
      %v1175 = vld [vmem:[%s1168 + $0x30] sm:$0xff]
      %v1176 = vld [vmem:[%s1168 + $0x38] sm:$0xff]
      %v1177 = vld [vmem:[%s1168 + $0x40] sm:$0xff]
      %v1178 = vld [vmem:[%s1168 + $0x48] sm:$0xff]
      %v1179 = vld [vmem:[%s1168 + $0x50] sm:$0xff]
      %v1180 = vld [vmem:[%s1168 + $0x58] sm:$0xff]
      %v1181 = vld [vmem:[%s1168 + $0x60] sm:$0xff]
      %v1182 = vld [vmem:[%s1168 + $0x68] sm:$0xff]
      %v1183 = vld [vmem:[%s1168 + $0x70] sm:$0xff]
      %v1185 = vsel %vm739, %v1169, 0
      %v1188 = vsel %vm739, %v1170, 0
      %v1191 = vsel %vm739, %v1171, 0
      %v1194 = vsel %vm739, %v1172, 0
      %v1197 = vsel %vm739, %v1173, 0
      %v1200 = vsel %vm739, %v1174, 0
      %v1203 = vsel %vm739, %v1175, 0
      %v1206 = vsel %vm739, %v1176, 0
      %v1209 = vsel %vm739, %v1177, 0
      %v1212 = vsel %vm739, %v1178, 0
      %v1215 = vsel %vm739, %v1179, 0
      %v1218 = vsel %vm739, %v1180, 0
      %v1221 = vsel %vm739, %v1181, 0
      %v1224 = vsel %vm739, %v1182, 0
      %v1227 = vsel %vm739, %v1183, 0
      %1229 = vmatpush.msra.mxu0 0.0
      %1230 = vmatpush.msra.mxu0 0.0
      %1231 = vmatpush.msra.mxu0 0.0
      %1232 = vmatpush.msra.mxu0 0.0
      %1233 = vmatpush.msra.mxu0 0.0
      %1234 = vmatpush.msra.mxu0 %v719
      %1235 = vmatpush.msra.mxu0 %v718
      %1236 = vmatpush.msra.mxu0 %v717
      %1237 = vmatpush.msra.mxu0 %v716
      %1238 = vmatpush.msra.mxu0 %v715
      %1239 = vmatpush.msra.mxu0 %v714
      %1240 = vmatpush.msra.mxu0 %v713
      %1241 = vmatpush.msra.mxu0 %v712
      %1242 = vmatpush.msra.mxu0 %v711
      %1243 = vmatpush.msra.mxu0 %v710
      %1244 = vmatpush.msra.mxu0 %v709
      %1245 = vmatmul.f32.gmra.mxu0 %v1185
      %v1246 = vpop.f32.mrf.mxu0
      %v1247 = vadd.f32 %v737, %v1246
      %1248 = vmatmul.f32.gmra.mxu0 %v1188
      %v1249 = vpop.f32.mrf.mxu0
      %v1250 = vadd.f32 %v737, %v1249
      %1251 = vmatmul.f32.gmra.mxu0 %v1191
      %v1252 = vpop.f32.mrf.mxu0
      %v1253 = vadd.f32 %v737, %v1252
      %1254 = vmatmul.f32.gmra.mxu0 %v1194
      %v1255 = vpop.f32.mrf.mxu0
      %v1256 = vadd.f32 %v737, %v1255
      %1257 = vmatmul.f32.gmra.mxu0 %v1197
      %v1258 = vpop.f32.mrf.mxu0
      %v1259 = vadd.f32 %v737, %v1258
      %1260 = vmatmul.f32.gmra.mxu0 %v1200
      %v1261 = vpop.f32.mrf.mxu0
      %v1262 = vadd.f32 %v737, %v1261
      %1263 = vmatmul.f32.gmra.mxu0 %v1203
      %v1264 = vpop.f32.mrf.mxu0
      %v1265 = vadd.f32 %v737, %v1264
      %1266 = vmatmul.f32.gmra.mxu0 %v1206
      %v1267 = vpop.f32.mrf.mxu0
      %v1268 = vadd.f32 %v737, %v1267
      %1269 = vmatmul.f32.gmra.mxu0 %v1209
      %v1270 = vpop.f32.mrf.mxu0
      %v1271 = vadd.f32 %v737, %v1270
      %1272 = vmatmul.f32.gmra.mxu0 %v1212
      %v1273 = vpop.f32.mrf.mxu0
      %v1274 = vadd.f32 %v737, %v1273
      %1275 = vmatmul.f32.gmra.mxu0 %v1215
      %v1276 = vpop.f32.mrf.mxu0
      %v1277 = vadd.f32 %v737, %v1276
      %1278 = vmatmul.f32.gmra.mxu0 %v1218
      %v1279 = vpop.f32.mrf.mxu0
      %v1280 = vadd.f32 %v737, %v1279
      %1281 = vmatmul.f32.gmra.mxu0 %v1221
      %v1282 = vpop.f32.mrf.mxu0
      %v1283 = vadd.f32 %v737, %v1282
      %1284 = vmatmul.f32.gmra.mxu0 %v1224
      %v1285 = vpop.f32.mrf.mxu0
      %v1286 = vadd.f32 %v737, %v1285
      %1287 = vmatmul.f32.gmra.mxu0 %v1227
      %v1288 = vpop.f32.mrf.mxu0
      %v1289 = vadd.f32 %v737, %v1288
      %1290 = vdwg.mxu0
      %v1291 = vmax.f32 %v1247, 0.0
      %v1292 = vmax.f32 %v1250, 0.0
      %v1293 = vmax.f32 %v1253, 0.0
      %v1294 = vmax.f32 %v1256, 0.0
      %v1295 = vmax.f32 %v1259, 0.0
      %v1296 = vmax.f32 %v1262, 0.0
      %v1297 = vmax.f32 %v1265, 0.0
      %v1298 = vmax.f32 %v1268, 0.0
      %v1299 = vmax.f32 %v1271, 0.0
      %v1300 = vmax.f32 %v1274, 0.0
      %v1301 = vmax.f32 %v1277, 0.0
      %v1302 = vmax.f32 %v1280, 0.0
      %v1303 = vmax.f32 %v1283, 0.0
      %v1304 = vmax.f32 %v1286, 0.0
      %v1305 = vmax.f32 %v1289, 0.0
      %v1306 = vmax.f32 %v1153, %v1291
      %v1307 = vmax.f32 %v1154, %v1292
      %v1308 = vmax.f32 %v1155, %v1293
      %v1309 = vmax.f32 %v1156, %v1294
      %v1310 = vmax.f32 %v1157, %v1295
      %v1311 = vmax.f32 %v1158, %v1296
      %v1312 = vmax.f32 %v1159, %v1297
      %v1313 = vmax.f32 %v1160, %v1298
      %v1314 = vmax.f32 %v1161, %v1299
      %v1315 = vmax.f32 %v1162, %v1300
      %v1316 = vmax.f32 %v1163, %v1301
      %v1317 = vmax.f32 %v1164, %v1302
      %v1318 = vmax.f32 %v1165, %v1303
      %v1319 = vmax.f32 %v1166, %v1304
      %v1320 = vmax.f32 %v1167, %v1305
      %v1321 = vld [vmem:[%s3] sm:$0x1]
      %v1323 = vperm.slane %v1321, 0
      %v1325 = vmul.f32 %v1306, %v1323
      %v1326 = vmul.f32 %v1307, %v1323
      %v1327 = vmul.f32 %v1308, %v1323
      %v1328 = vmul.f32 %v1309, %v1323
      %v1329 = vmul.f32 %v1310, %v1323
      %v1330 = vmul.f32 %v1311, %v1323
      %v1331 = vmul.f32 %v1312, %v1323
      %v1332 = vmul.f32 %v1313, %v1323
      %v1333 = vmul.f32 %v1314, %v1323
      %v1334 = vmul.f32 %v1315, %v1323
      %v1335 = vmul.f32 %v1316, %v1323
      %v1336 = vmul.f32 %v1317, %v1323
      %v1337 = vmul.f32 %v1318, %v1323
      %v1338 = vmul.f32 %v1319, %v1323
      %v1339 = vmul.f32 %v1320, %v1323
      %v1340 = vld [vmem:[%s4] sm:$0x1]
      %v1342 = vperm.slane %v1340, 0
      %v1344 = vadd.f32 %v1325, %v1342
      %v1345 = vadd.f32 %v1326, %v1342
      %v1346 = vadd.f32 %v1327, %v1342
      %v1347 = vadd.f32 %v1328, %v1342
      %v1348 = vadd.f32 %v1329, %v1342
      %v1349 = vadd.f32 %v1330, %v1342
      %v1350 = vadd.f32 %v1331, %v1342
      %v1351 = vadd.f32 %v1332, %v1342
      %v1352 = vadd.f32 %v1333, %v1342
      %v1353 = vadd.f32 %v1334, %v1342
      %v1354 = vadd.f32 %v1335, %v1342
      %v1355 = vadd.f32 %v1336, %v1342
      %v1356 = vadd.f32 %v1337, %v1342
      %v1357 = vadd.f32 %v1338, %v1342
      %v1358 = vadd.f32 %v1339, %v1342
      %v1359 = vld [vmem:[%s7] sm:$0x1]
      %v1360 = vld [vmem:[%s5] sm:$0xff]
      %v1361 = vld [vmem:[%s5 + $0x8] sm:$0xff]
      %v1362 = vld [vmem:[%s5 + $0x10] sm:$0xff]
      %v1363 = vld [vmem:[%s5 + $0x18] sm:$0xff]
      %v1364 = vld [vmem:[%s5 + $0x20] sm:$0xff]
      %v1365 = vld [vmem:[%s5 + $0x28] sm:$0xff]
      %v1366 = vld [vmem:[%s5 + $0x30] sm:$0xff]
      %v1367 = vld [vmem:[%s5 + $0x38] sm:$0xff]
      %vm1368 = vcmask 982016
      %v1370 = vsel %vm1368, %v1360, 0
      %v1373 = vsel %vm1368, %v1361, 0
      %v1376 = vsel %vm1368, %v1362, 0
      %v1379 = vsel %vm1368, %v1363, 0
      %v1382 = vsel %vm1368, %v1364, 0
      %v1385 = vsel %vm1368, %v1365, 0
      %v1388 = vsel %vm1368, %v1366, 0
      %v1391 = vsel %vm1368, %v1367, 0
      %1393 = vmatpush.msra.mxu0 0.0
      %1394 = vmatpush.msra.mxu0 %v1358
      %1395 = vmatpush.msra.mxu0 %v1357
      %1396 = vmatpush.msra.mxu0 %v1356
      %1397 = vmatpush.msra.mxu0 %v1355
      %1398 = vmatpush.msra.mxu0 %v1354
      %1399 = vmatpush.msra.mxu0 %v1353
      %1400 = vmatpush.msra.mxu0 %v1352
      %1401 = vmatpush.msra.mxu0 %v1351
      %1402 = vmatpush.msra.mxu0 %v1350
      %1403 = vmatpush.msra.mxu0 %v1349
      %1404 = vmatpush.msra.mxu0 %v1348
      %1405 = vmatpush.msra.mxu0 %v1347
      %1406 = vmatpush.msra.mxu0 %v1346
      %1407 = vmatpush.msra.mxu0 %v1345
      %1408 = vmatpush.msra.mxu0 %v1344
      %1409 = vmatmul.f32.gmra.mxu0 %v1370
      %v1410 = vpop.f32.mrf.mxu0
      %v1411 = vadd.f32 0.0, %v1410
      %1412 = vmatmul.f32.gmra.mxu0 %v1373
      %v1413 = vpop.f32.mrf.mxu0
      %v1414 = vadd.f32 0.0, %v1413
      %1415 = vmatmul.f32.gmra.mxu0 %v1376
      %v1416 = vpop.f32.mrf.mxu0
      %v1417 = vadd.f32 0.0, %v1416
      %1418 = vmatmul.f32.gmra.mxu0 %v1379
      %v1419 = vpop.f32.mrf.mxu0
      %v1420 = vadd.f32 0.0, %v1419
      %1421 = vmatmul.f32.gmra.mxu0 %v1382
      %v1422 = vpop.f32.mrf.mxu0
      %v1423 = vadd.f32 0.0, %v1422
      %1424 = vmatmul.f32.gmra.mxu0 %v1385
      %v1425 = vpop.f32.mrf.mxu0
      %v1426 = vadd.f32 0.0, %v1425
      %1427 = vmatmul.f32.gmra.mxu0 %v1388
      %v1428 = vpop.f32.mrf.mxu0
      %v1429 = vadd.f32 0.0, %v1428
      %1430 = vmatmul.f32.gmra.mxu0 %v1391
      %v1431 = vpop.f32.mrf.mxu0
      %v1432 = vadd.f32 0.0, %v1431
      %1433 = vdwg.mxu0
      %v1434 = vld [vmem:[%s6] sm:$0xff]
      %v1435 = vld [vmem:[%s6 + $0x8] sm:$0xff]
      %vm1436 = vcmask 130048
      %v1438 = vsel %vm1436, %v1411, 0
      %v1441 = vsel %vm1436, %v1414, 0
      %v1444 = vsel %vm1436, %v1417, 0
      %v1447 = vsel %vm1436, %v1420, 0
      %v1450 = vsel %vm1436, %v1423, 0
      %v1453 = vsel %vm1436, %v1426, 0
      %v1456 = vsel %vm1436, %v1429, 0
      %v1459 = vsel %vm1436, %v1432, 0
      %1461 = vmatpush.msra.mxu0 0.0
      %1462 = vmatpush.msra.mxu0 0.0
      %1463 = vmatpush.msra.mxu0 0.0
      %1464 = vmatpush.msra.mxu0 0.0
      %1465 = vmatpush.msra.mxu0 0.0
      %1466 = vmatpush.msra.mxu0 0.0
      %1467 = vmatpush.msra.mxu0 0.0
      %1468 = vmatpush.msra.mxu0 0.0
      %1469 = vmatpush.msra.mxu0 0.0
      %1470 = vmatpush.msra.mxu0 0.0
      %1471 = vmatpush.msra.mxu0 0.0
      %1472 = vmatpush.msra.mxu0 0.0
      %1473 = vmatpush.msra.mxu0 0.0
      %1474 = vmatpush.msra.mxu0 0.0
      %1475 = vmatpush.msra.mxu0 %v1435
      %1476 = vmatpush.msra.mxu0 %v1434
      %1477 = vmatmul.f32.gmra.mxu0 %v1438
      %v1478 = vpop.f32.mrf.mxu0
      %v1479 = vadd.f32 0.0, %v1478
      %1480 = vmatmul.f32.gmra.mxu0 %v1441
      %v1481 = vpop.f32.mrf.mxu0
      %v1482 = vadd.f32 0.0, %v1481
      %1483 = vmatmul.f32.gmra.mxu0 %v1444
      %v1484 = vpop.f32.mrf.mxu0
      %v1485 = vadd.f32 0.0, %v1484
      %1486 = vmatmul.f32.gmra.mxu0 %v1447
      %v1487 = vpop.f32.mrf.mxu0
      %v1488 = vadd.f32 0.0, %v1487
      %1489 = vmatmul.f32.gmra.mxu0 %v1450
      %v1490 = vpop.f32.mrf.mxu0
      %v1491 = vadd.f32 0.0, %v1490
      %1492 = vmatmul.f32.gmra.mxu0 %v1453
      %v1493 = vpop.f32.mrf.mxu0
      %v1494 = vadd.f32 0.0, %v1493
      %1495 = vmatmul.f32.gmra.mxu0 %v1456
      %v1496 = vpop.f32.mrf.mxu0
      %v1497 = vadd.f32 0.0, %v1496
      %1498 = vmatmul.f32.gmra.mxu0 %v1459
      %v1499 = vpop.f32.mrf.mxu0
      %v1500 = vadd.f32 0.0, %v1499
      %1501 = vdwg.mxu0
      %v1503 = vperm.slane %v1359, 0
      %v1505 = vadd.f32 %v1503, %v1479
      %v1506 = vadd.f32 %v1503, %v1482
      %v1507 = vadd.f32 %v1503, %v1485
      %v1508 = vadd.f32 %v1503, %v1488
      %v1509 = vadd.f32 %v1503, %v1491
      %v1510 = vadd.f32 %v1503, %v1494
      %v1511 = vadd.f32 %v1503, %v1497
      %v1512 = vadd.f32 %v1503, %v1500
      %s1513 = scalar_lea.vmem %s5, 64
      %v1514 = vld [vmem:[%s1513] sm:$0xff]
      %v1515 = vld [vmem:[%s1513 + $0x8] sm:$0xff]
      %v1516 = vld [vmem:[%s1513 + $0x10] sm:$0xff]
      %v1517 = vld [vmem:[%s1513 + $0x18] sm:$0xff]
      %v1518 = vld [vmem:[%s1513 + $0x20] sm:$0xff]
      %v1519 = vld [vmem:[%s1513 + $0x28] sm:$0xff]
      %v1520 = vld [vmem:[%s1513 + $0x30] sm:$0xff]
      %v1521 = vld [vmem:[%s1513 + $0x38] sm:$0xff]
      %v1523 = vsel %vm1368, %v1514, 0
      %v1526 = vsel %vm1368, %v1515, 0
      %v1529 = vsel %vm1368, %v1516, 0
      %v1532 = vsel %vm1368, %v1517, 0
      %v1535 = vsel %vm1368, %v1518, 0
      %v1538 = vsel %vm1368, %v1519, 0
      %v1541 = vsel %vm1368, %v1520, 0
      %v1544 = vsel %vm1368, %v1521, 0
      %1546 = vmatpush.msra.mxu0 0.0
      %1547 = vmatpush.msra.mxu0 %v1358
      %1548 = vmatpush.msra.mxu0 %v1357
      %1549 = vmatpush.msra.mxu0 %v1356
      %1550 = vmatpush.msra.mxu0 %v1355
      %1551 = vmatpush.msra.mxu0 %v1354
      %1552 = vmatpush.msra.mxu0 %v1353
      %1553 = vmatpush.msra.mxu0 %v1352
      %1554 = vmatpush.msra.mxu0 %v1351
      %1555 = vmatpush.msra.mxu0 %v1350
      %1556 = vmatpush.msra.mxu0 %v1349
      %1557 = vmatpush.msra.mxu0 %v1348
      %1558 = vmatpush.msra.mxu0 %v1347
      %1559 = vmatpush.msra.mxu0 %v1346
      %1560 = vmatpush.msra.mxu0 %v1345
      %1561 = vmatpush.msra.mxu0 %v1344
      %1562 = vmatmul.f32.gmra.mxu0 %v1523
      %v1563 = vpop.f32.mrf.mxu0
      %v1564 = vadd.f32 0.0, %v1563
      %1565 = vmatmul.f32.gmra.mxu0 %v1526
      %v1566 = vpop.f32.mrf.mxu0
      %v1567 = vadd.f32 0.0, %v1566
      %1568 = vmatmul.f32.gmra.mxu0 %v1529
      %v1569 = vpop.f32.mrf.mxu0
      %v1570 = vadd.f32 0.0, %v1569
      %1571 = vmatmul.f32.gmra.mxu0 %v1532
      %v1572 = vpop.f32.mrf.mxu0
      %v1573 = vadd.f32 0.0, %v1572
      %1574 = vmatmul.f32.gmra.mxu0 %v1535
      %v1575 = vpop.f32.mrf.mxu0
      %v1576 = vadd.f32 0.0, %v1575
      %1577 = vmatmul.f32.gmra.mxu0 %v1538
      %v1578 = vpop.f32.mrf.mxu0
      %v1579 = vadd.f32 0.0, %v1578
      %1580 = vmatmul.f32.gmra.mxu0 %v1541
      %v1581 = vpop.f32.mrf.mxu0
      %v1582 = vadd.f32 0.0, %v1581
      %1583 = vmatmul.f32.gmra.mxu0 %v1544
      %v1584 = vpop.f32.mrf.mxu0
      %v1585 = vadd.f32 0.0, %v1584
      %1586 = vdwg.mxu0
      %s1587 = scalar_lea.vmem %s6, 16
      %v1588 = vld [vmem:[%s1587] sm:$0xff]
      %v1589 = vld [vmem:[%s1587 + $0x8] sm:$0xff]
      %v1591 = vsel %vm1436, %v1564, 0
      %v1594 = vsel %vm1436, %v1567, 0
      %v1597 = vsel %vm1436, %v1570, 0
      %v1600 = vsel %vm1436, %v1573, 0
      %v1603 = vsel %vm1436, %v1576, 0
      %v1606 = vsel %vm1436, %v1579, 0
      %v1609 = vsel %vm1436, %v1582, 0
      %v1612 = vsel %vm1436, %v1585, 0
      %1614 = vmatpush.msra.mxu0 0.0
      %1615 = vmatpush.msra.mxu0 0.0
      %1616 = vmatpush.msra.mxu0 0.0
      %1617 = vmatpush.msra.mxu0 0.0
      %1618 = vmatpush.msra.mxu0 0.0
      %1619 = vmatpush.msra.mxu0 0.0
      %1620 = vmatpush.msra.mxu0 0.0
      %1621 = vmatpush.msra.mxu0 0.0
      %1622 = vmatpush.msra.mxu0 0.0
      %1623 = vmatpush.msra.mxu0 0.0
      %1624 = vmatpush.msra.mxu0 0.0
      %1625 = vmatpush.msra.mxu0 0.0
      %1626 = vmatpush.msra.mxu0 0.0
      %1627 = vmatpush.msra.mxu0 0.0
      %1628 = vmatpush.msra.mxu0 %v1589
      %1629 = vmatpush.msra.mxu0 %v1588
      %1630 = vmatmul.f32.gmra.mxu0 %v1591
      %v1631 = vpop.f32.mrf.mxu0
      %v1632 = vadd.f32 0.0, %v1631
      %1633 = vmatmul.f32.gmra.mxu0 %v1594
      %v1634 = vpop.f32.mrf.mxu0
      %v1635 = vadd.f32 0.0, %v1634
      %1636 = vmatmul.f32.gmra.mxu0 %v1597
      %v1637 = vpop.f32.mrf.mxu0
      %v1638 = vadd.f32 0.0, %v1637
      %1639 = vmatmul.f32.gmra.mxu0 %v1600
      %v1640 = vpop.f32.mrf.mxu0
      %v1641 = vadd.f32 0.0, %v1640
      %1642 = vmatmul.f32.gmra.mxu0 %v1603
      %v1643 = vpop.f32.mrf.mxu0
      %v1644 = vadd.f32 0.0, %v1643
      %1645 = vmatmul.f32.gmra.mxu0 %v1606
      %v1646 = vpop.f32.mrf.mxu0
      %v1647 = vadd.f32 0.0, %v1646
      %1648 = vmatmul.f32.gmra.mxu0 %v1609
      %v1649 = vpop.f32.mrf.mxu0
      %v1650 = vadd.f32 0.0, %v1649
      %1651 = vmatmul.f32.gmra.mxu0 %v1612
      %v1652 = vpop.f32.mrf.mxu0
      %v1653 = vadd.f32 0.0, %v1652
      %1654 = vdwg.mxu0
      %v1655 = vadd.f32 %v1505, %v1632
      %v1656 = vadd.f32 %v1506, %v1635
      %v1657 = vadd.f32 %v1507, %v1638
      %v1658 = vadd.f32 %v1508, %v1641
      %v1659 = vadd.f32 %v1509, %v1644
      %v1660 = vadd.f32 %v1510, %v1647
      %v1661 = vadd.f32 %v1511, %v1650
      %v1662 = vadd.f32 %v1512, %v1653
      %s1663 = scalar_lea.vmem %s5, 128
      %v1664 = vld [vmem:[%s1663] sm:$0xff]
      %v1665 = vld [vmem:[%s1663 + $0x8] sm:$0xff]
      %v1666 = vld [vmem:[%s1663 + $0x10] sm:$0xff]
      %v1667 = vld [vmem:[%s1663 + $0x18] sm:$0xff]
      %v1668 = vld [vmem:[%s1663 + $0x20] sm:$0xff]
      %v1669 = vld [vmem:[%s1663 + $0x28] sm:$0xff]
      %v1670 = vld [vmem:[%s1663 + $0x30] sm:$0xff]
      %v1671 = vld [vmem:[%s1663 + $0x38] sm:$0xff]
      %v1673 = vsel %vm1368, %v1664, 0
      %v1676 = vsel %vm1368, %v1665, 0
      %v1679 = vsel %vm1368, %v1666, 0
      %v1682 = vsel %vm1368, %v1667, 0
      %v1685 = vsel %vm1368, %v1668, 0
      %v1688 = vsel %vm1368, %v1669, 0
      %v1691 = vsel %vm1368, %v1670, 0
      %v1694 = vsel %vm1368, %v1671, 0
      %1696 = vmatpush.msra.mxu0 0.0
      %1697 = vmatpush.msra.mxu0 %v1358
      %1698 = vmatpush.msra.mxu0 %v1357
      %1699 = vmatpush.msra.mxu0 %v1356
      %1700 = vmatpush.msra.mxu0 %v1355
      %1701 = vmatpush.msra.mxu0 %v1354
      %1702 = vmatpush.msra.mxu0 %v1353
      %1703 = vmatpush.msra.mxu0 %v1352
      %1704 = vmatpush.msra.mxu0 %v1351
      %1705 = vmatpush.msra.mxu0 %v1350
      %1706 = vmatpush.msra.mxu0 %v1349
      %1707 = vmatpush.msra.mxu0 %v1348
      %1708 = vmatpush.msra.mxu0 %v1347
      %1709 = vmatpush.msra.mxu0 %v1346
      %1710 = vmatpush.msra.mxu0 %v1345
      %1711 = vmatpush.msra.mxu0 %v1344
      %1712 = vmatmul.f32.gmra.mxu0 %v1673
      %v1713 = vpop.f32.mrf.mxu0
      %v1714 = vadd.f32 0.0, %v1713
      %1715 = vmatmul.f32.gmra.mxu0 %v1676
      %v1716 = vpop.f32.mrf.mxu0
      %v1717 = vadd.f32 0.0, %v1716
      %1718 = vmatmul.f32.gmra.mxu0 %v1679
      %v1719 = vpop.f32.mrf.mxu0
      %v1720 = vadd.f32 0.0, %v1719
      %1721 = vmatmul.f32.gmra.mxu0 %v1682
      %v1722 = vpop.f32.mrf.mxu0
      %v1723 = vadd.f32 0.0, %v1722
      %1724 = vmatmul.f32.gmra.mxu0 %v1685
      %v1725 = vpop.f32.mrf.mxu0
      %v1726 = vadd.f32 0.0, %v1725
      %1727 = vmatmul.f32.gmra.mxu0 %v1688
      %v1728 = vpop.f32.mrf.mxu0
      %v1729 = vadd.f32 0.0, %v1728
      %1730 = vmatmul.f32.gmra.mxu0 %v1691
      %v1731 = vpop.f32.mrf.mxu0
      %v1732 = vadd.f32 0.0, %v1731
      %1733 = vmatmul.f32.gmra.mxu0 %v1694
      %v1734 = vpop.f32.mrf.mxu0
      %v1735 = vadd.f32 0.0, %v1734
      %1736 = vdwg.mxu0
      %s1737 = scalar_lea.vmem %s6, 32
      %v1738 = vld [vmem:[%s1737] sm:$0xff]
      %v1739 = vld [vmem:[%s1737 + $0x8] sm:$0xff]
      %v1741 = vsel %vm1436, %v1714, 0
      %v1744 = vsel %vm1436, %v1717, 0
      %v1747 = vsel %vm1436, %v1720, 0
      %v1750 = vsel %vm1436, %v1723, 0
      %v1753 = vsel %vm1436, %v1726, 0
      %v1756 = vsel %vm1436, %v1729, 0
      %v1759 = vsel %vm1436, %v1732, 0
      %v1762 = vsel %vm1436, %v1735, 0
      %1764 = vmatpush.msra.mxu0 0.0
      %1765 = vmatpush.msra.mxu0 0.0
      %1766 = vmatpush.msra.mxu0 0.0
      %1767 = vmatpush.msra.mxu0 0.0
      %1768 = vmatpush.msra.mxu0 0.0
      %1769 = vmatpush.msra.mxu0 0.0
      %1770 = vmatpush.msra.mxu0 0.0
      %1771 = vmatpush.msra.mxu0 0.0
      %1772 = vmatpush.msra.mxu0 0.0
      %1773 = vmatpush.msra.mxu0 0.0
      %1774 = vmatpush.msra.mxu0 0.0
      %1775 = vmatpush.msra.mxu0 0.0
      %1776 = vmatpush.msra.mxu0 0.0
      %1777 = vmatpush.msra.mxu0 0.0
      %1778 = vmatpush.msra.mxu0 %v1739
      %1779 = vmatpush.msra.mxu0 %v1738
      %1780 = vmatmul.f32.gmra.mxu0 %v1741
      %v1781 = vpop.f32.mrf.mxu0
      %v1782 = vadd.f32 0.0, %v1781
      %1783 = vmatmul.f32.gmra.mxu0 %v1744
      %v1784 = vpop.f32.mrf.mxu0
      %v1785 = vadd.f32 0.0, %v1784
      %1786 = vmatmul.f32.gmra.mxu0 %v1747
      %v1787 = vpop.f32.mrf.mxu0
      %v1788 = vadd.f32 0.0, %v1787
      %1789 = vmatmul.f32.gmra.mxu0 %v1750
      %v1790 = vpop.f32.mrf.mxu0
      %v1791 = vadd.f32 0.0, %v1790
      %1792 = vmatmul.f32.gmra.mxu0 %v1753
      %v1793 = vpop.f32.mrf.mxu0
      %v1794 = vadd.f32 0.0, %v1793
      %1795 = vmatmul.f32.gmra.mxu0 %v1756
      %v1796 = vpop.f32.mrf.mxu0
      %v1797 = vadd.f32 0.0, %v1796
      %1798 = vmatmul.f32.gmra.mxu0 %v1759
      %v1799 = vpop.f32.mrf.mxu0
      %v1800 = vadd.f32 0.0, %v1799
      %1801 = vmatmul.f32.gmra.mxu0 %v1762
      %v1802 = vpop.f32.mrf.mxu0
      %v1803 = vadd.f32 0.0, %v1802
      %1804 = vdwg.mxu0
      %v1805 = vadd.f32 %v1655, %v1782
      %v1806 = vadd.f32 %v1656, %v1785
      %v1807 = vadd.f32 %v1657, %v1788
      %v1808 = vadd.f32 %v1658, %v1791
      %v1809 = vadd.f32 %v1659, %v1794
      %v1810 = vadd.f32 %v1660, %v1797
      %v1811 = vadd.f32 %v1661, %v1800
      %v1812 = vadd.f32 %v1662, %v1803
      %s1813 = scalar_lea.vmem %s5, 192
      %v1814 = vld [vmem:[%s1813] sm:$0xff]
      %v1815 = vld [vmem:[%s1813 + $0x8] sm:$0xff]
      %v1816 = vld [vmem:[%s1813 + $0x10] sm:$0xff]
      %v1817 = vld [vmem:[%s1813 + $0x18] sm:$0xff]
      %v1818 = vld [vmem:[%s1813 + $0x20] sm:$0xff]
      %v1819 = vld [vmem:[%s1813 + $0x28] sm:$0xff]
      %v1820 = vld [vmem:[%s1813 + $0x30] sm:$0xff]
      %v1821 = vld [vmem:[%s1813 + $0x38] sm:$0xff]
      %v1823 = vsel %vm1368, %v1814, 0
      %v1826 = vsel %vm1368, %v1815, 0
      %v1829 = vsel %vm1368, %v1816, 0
      %v1832 = vsel %vm1368, %v1817, 0
      %v1835 = vsel %vm1368, %v1818, 0
      %v1838 = vsel %vm1368, %v1819, 0
      %v1841 = vsel %vm1368, %v1820, 0
      %v1844 = vsel %vm1368, %v1821, 0
      %1846 = vmatpush.msra.mxu0 0.0
      %1847 = vmatpush.msra.mxu0 %v1358
      %1848 = vmatpush.msra.mxu0 %v1357
      %1849 = vmatpush.msra.mxu0 %v1356
      %1850 = vmatpush.msra.mxu0 %v1355
      %1851 = vmatpush.msra.mxu0 %v1354
      %1852 = vmatpush.msra.mxu0 %v1353
      %1853 = vmatpush.msra.mxu0 %v1352
      %1854 = vmatpush.msra.mxu0 %v1351
      %1855 = vmatpush.msra.mxu0 %v1350
      %1856 = vmatpush.msra.mxu0 %v1349
      %1857 = vmatpush.msra.mxu0 %v1348
      %1858 = vmatpush.msra.mxu0 %v1347
      %1859 = vmatpush.msra.mxu0 %v1346
      %1860 = vmatpush.msra.mxu0 %v1345
      %1861 = vmatpush.msra.mxu0 %v1344
      %1862 = vmatmul.f32.gmra.mxu0 %v1823
      %v1863 = vpop.f32.mrf.mxu0
      %v1864 = vadd.f32 0.0, %v1863
      %1865 = vmatmul.f32.gmra.mxu0 %v1826
      %v1866 = vpop.f32.mrf.mxu0
      %v1867 = vadd.f32 0.0, %v1866
      %1868 = vmatmul.f32.gmra.mxu0 %v1829
      %v1869 = vpop.f32.mrf.mxu0
      %v1870 = vadd.f32 0.0, %v1869
      %1871 = vmatmul.f32.gmra.mxu0 %v1832
      %v1872 = vpop.f32.mrf.mxu0
      %v1873 = vadd.f32 0.0, %v1872
      %1874 = vmatmul.f32.gmra.mxu0 %v1835
      %v1875 = vpop.f32.mrf.mxu0
      %v1876 = vadd.f32 0.0, %v1875
      %1877 = vmatmul.f32.gmra.mxu0 %v1838
      %v1878 = vpop.f32.mrf.mxu0
      %v1879 = vadd.f32 0.0, %v1878
      %1880 = vmatmul.f32.gmra.mxu0 %v1841
      %v1881 = vpop.f32.mrf.mxu0
      %v1882 = vadd.f32 0.0, %v1881
      %1883 = vmatmul.f32.gmra.mxu0 %v1844
      %v1884 = vpop.f32.mrf.mxu0
      %v1885 = vadd.f32 0.0, %v1884
      %1886 = vdwg.mxu0
      %s1887 = scalar_lea.vmem %s6, 48
      %v1888 = vld [vmem:[%s1887] sm:$0xff]
      %v1889 = vld [vmem:[%s1887 + $0x8] sm:$0xff]
      %v1891 = vsel %vm1436, %v1864, 0
      %v1894 = vsel %vm1436, %v1867, 0
      %v1897 = vsel %vm1436, %v1870, 0
      %v1900 = vsel %vm1436, %v1873, 0
      %v1903 = vsel %vm1436, %v1876, 0
      %v1906 = vsel %vm1436, %v1879, 0
      %v1909 = vsel %vm1436, %v1882, 0
      %v1912 = vsel %vm1436, %v1885, 0
      %1914 = vmatpush.msra.mxu0 0.0
      %1915 = vmatpush.msra.mxu0 0.0
      %1916 = vmatpush.msra.mxu0 0.0
      %1917 = vmatpush.msra.mxu0 0.0
      %1918 = vmatpush.msra.mxu0 0.0
      %1919 = vmatpush.msra.mxu0 0.0
      %1920 = vmatpush.msra.mxu0 0.0
      %1921 = vmatpush.msra.mxu0 0.0
      %1922 = vmatpush.msra.mxu0 0.0
      %1923 = vmatpush.msra.mxu0 0.0
      %1924 = vmatpush.msra.mxu0 0.0
      %1925 = vmatpush.msra.mxu0 0.0
      %1926 = vmatpush.msra.mxu0 0.0
      %1927 = vmatpush.msra.mxu0 0.0
      %1928 = vmatpush.msra.mxu0 %v1889
      %1929 = vmatpush.msra.mxu0 %v1888
      %1930 = vmatmul.f32.gmra.mxu0 %v1891
      %v1931 = vpop.f32.mrf.mxu0
      %v1932 = vadd.f32 0.0, %v1931
      %1933 = vmatmul.f32.gmra.mxu0 %v1894
      %v1934 = vpop.f32.mrf.mxu0
      %v1935 = vadd.f32 0.0, %v1934
      %1936 = vmatmul.f32.gmra.mxu0 %v1897
      %v1937 = vpop.f32.mrf.mxu0
      %v1938 = vadd.f32 0.0, %v1937
      %1939 = vmatmul.f32.gmra.mxu0 %v1900
      %v1940 = vpop.f32.mrf.mxu0
      %v1941 = vadd.f32 0.0, %v1940
      %1942 = vmatmul.f32.gmra.mxu0 %v1903
      %v1943 = vpop.f32.mrf.mxu0
      %v1944 = vadd.f32 0.0, %v1943
      %1945 = vmatmul.f32.gmra.mxu0 %v1906
      %v1946 = vpop.f32.mrf.mxu0
      %v1947 = vadd.f32 0.0, %v1946
      %1948 = vmatmul.f32.gmra.mxu0 %v1909
      %v1949 = vpop.f32.mrf.mxu0
      %v1950 = vadd.f32 0.0, %v1949
      %1951 = vmatmul.f32.gmra.mxu0 %v1912
      %v1952 = vpop.f32.mrf.mxu0
      %v1953 = vadd.f32 0.0, %v1952
      %1954 = vdwg.mxu0
      %v1955 = vadd.f32 %v1805, %v1932
      %v1956 = vadd.f32 %v1806, %v1935
      %v1957 = vadd.f32 %v1807, %v1938
      %v1958 = vadd.f32 %v1808, %v1941
      %v1959 = vadd.f32 %v1809, %v1944
      %v1960 = vadd.f32 %v1810, %v1947
      %v1961 = vadd.f32 %v1811, %v1950
      %v1962 = vadd.f32 %v1812, %v1953
      %v1963 = vmax.f32 %v1955, 0.0
      %v1964 = vmax.f32 %v1956, 0.0
      %v1965 = vmax.f32 %v1957, 0.0
      %v1966 = vmax.f32 %v1958, 0.0
      %v1967 = vmax.f32 %v1959, 0.0
      %v1968 = vmax.f32 %v1960, 0.0
      %v1969 = vmax.f32 %v1961, 0.0
      %v1970 = vmax.f32 %v1962, 0.0
      %v1971 = vld [vmem:[%s8] sm:$0xff]
      %v1972 = vld [vmem:[%s8 + $0x8] sm:$0xff]
      %vm1973 = vcmask 523264
      %v1975 = vsel %vm1973, %v1971, 0
      %v1978 = vsel %vm1973, %v1972, 0
      %1980 = vmatpush.msra.mxu0 0.0
      %1981 = vmatpush.msra.mxu0 0.0
      %1982 = vmatpush.msra.mxu0 0.0
      %1983 = vmatpush.msra.mxu0 0.0
      %1984 = vmatpush.msra.mxu0 0.0
      %1985 = vmatpush.msra.mxu0 0.0
      %1986 = vmatpush.msra.mxu0 0.0
      %1987 = vmatpush.msra.mxu0 0.0
      %1988 = vmatpush.msra.mxu0 %v1970
      %1989 = vmatpush.msra.mxu0 %v1969
      %1990 = vmatpush.msra.mxu0 %v1968
      %1991 = vmatpush.msra.mxu0 %v1967
      %1992 = vmatpush.msra.mxu0 %v1966
      %1993 = vmatpush.msra.mxu0 %v1965
      %1994 = vmatpush.msra.mxu0 %v1964
      %1995 = vmatpush.msra.mxu0 %v1963
      %1996 = vmatmul.f32.gmra.mxu0 %v1975
      %v1997 = vpop.f32.mrf.mxu0
      %v1998 = vadd.f32 0.0, %v1997
      %1999 = vmatmul.f32.gmra.mxu0 %v1978
      %v2000 = vpop.f32.mrf.mxu0
      %v2001 = vadd.f32 0.0, %v2000
      %2002 = vdwg.mxu0
      %s2003 = scalar_lea.vmem %s8, 16
      %v2004 = vld [vmem:[%s2003] sm:$0xff]
      %v2005 = vld [vmem:[%s2003 + $0x8] sm:$0xff]
      %v2007 = vsel %vm1973, %v2004, 0
      %v2010 = vsel %vm1973, %v2005, 0
      %2012 = vmatpush.msra.mxu0 0.0
      %2013 = vmatpush.msra.mxu0 0.0
      %2014 = vmatpush.msra.mxu0 0.0
      %2015 = vmatpush.msra.mxu0 0.0
      %2016 = vmatpush.msra.mxu0 0.0
      %2017 = vmatpush.msra.mxu0 0.0
      %2018 = vmatpush.msra.mxu0 0.0
      %2019 = vmatpush.msra.mxu0 0.0
      %2020 = vmatpush.msra.mxu0 %v1970
      %2021 = vmatpush.msra.mxu0 %v1969
      %2022 = vmatpush.msra.mxu0 %v1968
      %2023 = vmatpush.msra.mxu0 %v1967
      %2024 = vmatpush.msra.mxu0 %v1966
      %2025 = vmatpush.msra.mxu0 %v1965
      %2026 = vmatpush.msra.mxu0 %v1964
      %2027 = vmatpush.msra.mxu0 %v1963
      %2028 = vmatmul.f32.gmra.mxu0 %v2007
      %v2029 = vpop.f32.mrf.mxu0
      %v2030 = vadd.f32 0.0, %v2029
      %2031 = vmatmul.f32.gmra.mxu0 %v2010
      %v2032 = vpop.f32.mrf.mxu0
      %v2033 = vadd.f32 0.0, %v2032
      %2034 = vdwg.mxu0
      %v2035 = vmax.f32 %v1998, %v2030
      %v2036 = vmax.f32 %v2001, %v2033
      %s2037 = scalar_lea.vmem %s8, 32
      %v2038 = vld [vmem:[%s2037] sm:$0xff]
      %v2039 = vld [vmem:[%s2037 + $0x8] sm:$0xff]
      %v2041 = vsel %vm1973, %v2038, 0
      %v2044 = vsel %vm1973, %v2039, 0
      %2046 = vmatpush.msra.mxu0 0.0
      %2047 = vmatpush.msra.mxu0 0.0
      %2048 = vmatpush.msra.mxu0 0.0
      %2049 = vmatpush.msra.mxu0 0.0
      %2050 = vmatpush.msra.mxu0 0.0
      %2051 = vmatpush.msra.mxu0 0.0
      %2052 = vmatpush.msra.mxu0 0.0
      %2053 = vmatpush.msra.mxu0 0.0
      %2054 = vmatpush.msra.mxu0 %v1970
      %2055 = vmatpush.msra.mxu0 %v1969
      %2056 = vmatpush.msra.mxu0 %v1968
      %2057 = vmatpush.msra.mxu0 %v1967
      %2058 = vmatpush.msra.mxu0 %v1966
      %2059 = vmatpush.msra.mxu0 %v1965
      %2060 = vmatpush.msra.mxu0 %v1964
      %2061 = vmatpush.msra.mxu0 %v1963
      %2062 = vmatmul.f32.gmra.mxu0 %v2041
      %v2063 = vpop.f32.mrf.mxu0
      %v2064 = vadd.f32 0.0, %v2063
      %2065 = vmatmul.f32.gmra.mxu0 %v2044
      %v2066 = vpop.f32.mrf.mxu0
      %v2067 = vadd.f32 0.0, %v2066
      %2068 = vdwg.mxu0
      %v2069 = vmax.f32 %v2035, %v2064
      %v2070 = vmax.f32 %v2036, %v2067
      %s2071 = scalar_lea.vmem %s8, 48
      %v2072 = vld [vmem:[%s2071] sm:$0xff]
      %v2073 = vld [vmem:[%s2071 + $0x8] sm:$0xff]
      %v2075 = vsel %vm1973, %v2072, 0
      %v2078 = vsel %vm1973, %v2073, 0
      %2080 = vmatpush.msra.mxu0 0.0
      %2081 = vmatpush.msra.mxu0 0.0
      %2082 = vmatpush.msra.mxu0 0.0
      %2083 = vmatpush.msra.mxu0 0.0
      %2084 = vmatpush.msra.mxu0 0.0
      %2085 = vmatpush.msra.mxu0 0.0
      %2086 = vmatpush.msra.mxu0 0.0
      %2087 = vmatpush.msra.mxu0 0.0
      %2088 = vmatpush.msra.mxu0 %v1970
      %2089 = vmatpush.msra.mxu0 %v1969
      %2090 = vmatpush.msra.mxu0 %v1968
      %2091 = vmatpush.msra.mxu0 %v1967
      %2092 = vmatpush.msra.mxu0 %v1966
      %2093 = vmatpush.msra.mxu0 %v1965
      %2094 = vmatpush.msra.mxu0 %v1964
      %2095 = vmatpush.msra.mxu0 %v1963
      %2096 = vmatmul.f32.gmra.mxu0 %v2075
      %v2097 = vpop.f32.mrf.mxu0
      %v2098 = vadd.f32 0.0, %v2097
      %2099 = vmatmul.f32.gmra.mxu0 %v2078
      %v2100 = vpop.f32.mrf.mxu0
      %v2101 = vadd.f32 0.0, %v2100
      %2102 = vdwg.mxu0
      %v2103 = vmax.f32 %v2069, %v2098
      %v2104 = vmax.f32 %v2070, %v2101
      %v2105 = vld [vmem:[%s9] sm:$0x1]
      %v2107 = vperm.slane %v2105, 0
      %v2109 = vmul.f32 %v2103, %v2107
      %v2110 = vmul.f32 %v2104, %v2107
      %v2111 = vld [vmem:[%s10] sm:$0x1]
      %v2113 = vperm.slane %v2111, 0
      %v2115 = vadd.f32 %v2109, %v2113
      %v2116 = vadd.f32 %v2110, %v2113
      %v2117 = vld [vmem:[%s13] sm:$0x1]
      %v2118 = vld [vmem:[%s11] sm:$0xff]
      %v2119 = vld [vmem:[%s11 + $0x8] sm:$0xff]
      %v2121 = vsel %vm1436, %v2118, 0
      %v2124 = vsel %vm1436, %v2119, 0
      %2126 = vmatpush.msra.mxu0 0.0
      %2127 = vmatpush.msra.mxu0 0.0
      %2128 = vmatpush.msra.mxu0 0.0
      %2129 = vmatpush.msra.mxu0 0.0
      %2130 = vmatpush.msra.mxu0 0.0
      %2131 = vmatpush.msra.mxu0 0.0
      %2132 = vmatpush.msra.mxu0 0.0
      %2133 = vmatpush.msra.mxu0 0.0
      %2134 = vmatpush.msra.mxu0 0.0
      %2135 = vmatpush.msra.mxu0 0.0
      %2136 = vmatpush.msra.mxu0 0.0
      %2137 = vmatpush.msra.mxu0 0.0
      %2138 = vmatpush.msra.mxu0 0.0
      %2139 = vmatpush.msra.mxu0 0.0
      %2140 = vmatpush.msra.mxu0 %v2116
      %2141 = vmatpush.msra.mxu0 %v2115
      %2142 = vmatmul.f32.gmra.mxu0 %v2121
      %v2143 = vpop.f32.mrf.mxu0
      %v2144 = vadd.f32 0.0, %v2143
      %2145 = vmatmul.f32.gmra.mxu0 %v2124
      %v2146 = vpop.f32.mrf.mxu0
      %v2147 = vadd.f32 0.0, %v2146
      %2148 = vdwg.mxu0
      %v2149 = vld [vmem:[%s12] sm:$0xff]
      %v2150 = vld [vmem:[%s12 + $0x8] sm:$0xff]
      %v2151 = vld [vmem:[%s12 + $0x10] sm:$0xff]
      %v2152 = vld [vmem:[%s12 + $0x18] sm:$0xff]
      %vm2153 = vcmask 261120
      %v2155 = vsel %vm2153, %v2144, 0
      %v2158 = vsel %vm2153, %v2147, 0
      %2160 = vmatpush.msra.mxu0 0.0
      %2161 = vmatpush.msra.mxu0 0.0
      %2162 = vmatpush.msra.mxu0 0.0
      %2163 = vmatpush.msra.mxu0 0.0
      %2164 = vmatpush.msra.mxu0 0.0
      %2165 = vmatpush.msra.mxu0 0.0
      %2166 = vmatpush.msra.mxu0 0.0
      %2167 = vmatpush.msra.mxu0 0.0
      %2168 = vmatpush.msra.mxu0 0.0
      %2169 = vmatpush.msra.mxu0 0.0
      %2170 = vmatpush.msra.mxu0 0.0
      %2171 = vmatpush.msra.mxu0 0.0
      %2172 = vmatpush.msra.mxu0 %v2152
      %2173 = vmatpush.msra.mxu0 %v2151
      %2174 = vmatpush.msra.mxu0 %v2150
      %2175 = vmatpush.msra.mxu0 %v2149
      %2176 = vmatmul.f32.gmra.mxu0 %v2155
      %v2177 = vpop.f32.mrf.mxu0
      %v2178 = vadd.f32 0.0, %v2177
      %2179 = vmatmul.f32.gmra.mxu0 %v2158
      %v2180 = vpop.f32.mrf.mxu0
      %v2181 = vadd.f32 0.0, %v2180
      %2182 = vdwg.mxu0
      %v2184 = vperm.slane %v2117, 0
      %v2186 = vadd.f32 %v2184, %v2178
      %v2187 = vadd.f32 %v2184, %v2181
      %s2188 = scalar_lea.vmem %s11, 16
      %v2189 = vld [vmem:[%s2188] sm:$0xff]
      %v2190 = vld [vmem:[%s2188 + $0x8] sm:$0xff]
      %v2192 = vsel %vm1436, %v2189, 0
      %v2195 = vsel %vm1436, %v2190, 0
      %2197 = vmatpush.msra.mxu0 0.0
      %2198 = vmatpush.msra.mxu0 0.0
      %2199 = vmatpush.msra.mxu0 0.0
      %2200 = vmatpush.msra.mxu0 0.0
      %2201 = vmatpush.msra.mxu0 0.0
      %2202 = vmatpush.msra.mxu0 0.0
      %2203 = vmatpush.msra.mxu0 0.0
      %2204 = vmatpush.msra.mxu0 0.0
      %2205 = vmatpush.msra.mxu0 0.0
      %2206 = vmatpush.msra.mxu0 0.0
      %2207 = vmatpush.msra.mxu0 0.0
      %2208 = vmatpush.msra.mxu0 0.0
      %2209 = vmatpush.msra.mxu0 0.0
      %2210 = vmatpush.msra.mxu0 0.0
      %2211 = vmatpush.msra.mxu0 %v2116
      %2212 = vmatpush.msra.mxu0 %v2115
      %2213 = vmatmul.f32.gmra.mxu0 %v2192
      %v2214 = vpop.f32.mrf.mxu0
      %v2215 = vadd.f32 0.0, %v2214
      %2216 = vmatmul.f32.gmra.mxu0 %v2195
      %v2217 = vpop.f32.mrf.mxu0
      %v2218 = vadd.f32 0.0, %v2217
      %2219 = vdwg.mxu0
      %s2220 = scalar_lea.vmem %s12, 32
      %v2221 = vld [vmem:[%s2220] sm:$0xff]
      %v2222 = vld [vmem:[%s2220 + $0x8] sm:$0xff]
      %v2223 = vld [vmem:[%s2220 + $0x10] sm:$0xff]
      %v2224 = vld [vmem:[%s2220 + $0x18] sm:$0xff]
      %v2226 = vsel %vm2153, %v2215, 0
      %v2229 = vsel %vm2153, %v2218, 0
      %2231 = vmatpush.msra.mxu0 0.0
      %2232 = vmatpush.msra.mxu0 0.0
      %2233 = vmatpush.msra.mxu0 0.0
      %2234 = vmatpush.msra.mxu0 0.0
      %2235 = vmatpush.msra.mxu0 0.0
      %2236 = vmatpush.msra.mxu0 0.0
      %2237 = vmatpush.msra.mxu0 0.0
      %2238 = vmatpush.msra.mxu0 0.0
      %2239 = vmatpush.msra.mxu0 0.0
      %2240 = vmatpush.msra.mxu0 0.0
      %2241 = vmatpush.msra.mxu0 0.0
      %2242 = vmatpush.msra.mxu0 0.0
      %2243 = vmatpush.msra.mxu0 %v2224
      %2244 = vmatpush.msra.mxu0 %v2223
      %2245 = vmatpush.msra.mxu0 %v2222
      %2246 = vmatpush.msra.mxu0 %v2221
      %2247 = vmatmul.f32.gmra.mxu0 %v2226
      %v2248 = vpop.f32.mrf.mxu0
      %v2249 = vadd.f32 0.0, %v2248
      %2250 = vmatmul.f32.gmra.mxu0 %v2229
      %v2251 = vpop.f32.mrf.mxu0
      %v2252 = vadd.f32 0.0, %v2251
      %2253 = vdwg.mxu0
      %v2254 = vadd.f32 %v2186, %v2249
      %v2255 = vadd.f32 %v2187, %v2252
      %s2256 = scalar_lea.vmem %s11, 32
      %v2257 = vld [vmem:[%s2256] sm:$0xff]
      %v2258 = vld [vmem:[%s2256 + $0x8] sm:$0xff]
      %v2260 = vsel %vm1436, %v2257, 0
      %v2263 = vsel %vm1436, %v2258, 0
      %2265 = vmatpush.msra.mxu0 0.0
      %2266 = vmatpush.msra.mxu0 0.0
      %2267 = vmatpush.msra.mxu0 0.0
      %2268 = vmatpush.msra.mxu0 0.0
      %2269 = vmatpush.msra.mxu0 0.0
      %2270 = vmatpush.msra.mxu0 0.0
      %2271 = vmatpush.msra.mxu0 0.0
      %2272 = vmatpush.msra.mxu0 0.0
      %2273 = vmatpush.msra.mxu0 0.0
      %2274 = vmatpush.msra.mxu0 0.0
      %2275 = vmatpush.msra.mxu0 0.0
      %2276 = vmatpush.msra.mxu0 0.0
      %2277 = vmatpush.msra.mxu0 0.0
      %2278 = vmatpush.msra.mxu0 0.0
      %2279 = vmatpush.msra.mxu0 %v2116
      %2280 = vmatpush.msra.mxu0 %v2115
      %2281 = vmatmul.f32.gmra.mxu0 %v2260
      %v2282 = vpop.f32.mrf.mxu0
      %v2283 = vadd.f32 0.0, %v2282
      %2284 = vmatmul.f32.gmra.mxu0 %v2263
      %v2285 = vpop.f32.mrf.mxu0
      %v2286 = vadd.f32 0.0, %v2285
      %2287 = vdwg.mxu0
      %s2288 = scalar_lea.vmem %s12, 64
      %v2289 = vld [vmem:[%s2288] sm:$0xff]
      %v2290 = vld [vmem:[%s2288 + $0x8] sm:$0xff]
      %v2291 = vld [vmem:[%s2288 + $0x10] sm:$0xff]
      %v2292 = vld [vmem:[%s2288 + $0x18] sm:$0xff]
      %v2294 = vsel %vm2153, %v2283, 0
      %v2297 = vsel %vm2153, %v2286, 0
      %2299 = vmatpush.msra.mxu0 0.0
      %2300 = vmatpush.msra.mxu0 0.0
      %2301 = vmatpush.msra.mxu0 0.0
      %2302 = vmatpush.msra.mxu0 0.0
      %2303 = vmatpush.msra.mxu0 0.0
      %2304 = vmatpush.msra.mxu0 0.0
      %2305 = vmatpush.msra.mxu0 0.0
      %2306 = vmatpush.msra.mxu0 0.0
      %2307 = vmatpush.msra.mxu0 0.0
      %2308 = vmatpush.msra.mxu0 0.0
      %2309 = vmatpush.msra.mxu0 0.0
      %2310 = vmatpush.msra.mxu0 0.0
      %2311 = vmatpush.msra.mxu0 %v2292
      %2312 = vmatpush.msra.mxu0 %v2291
      %2313 = vmatpush.msra.mxu0 %v2290
      %2314 = vmatpush.msra.mxu0 %v2289
      %2315 = vmatmul.f32.gmra.mxu0 %v2294
      %v2316 = vpop.f32.mrf.mxu0
      %v2317 = vadd.f32 0.0, %v2316
      %2318 = vmatmul.f32.gmra.mxu0 %v2297
      %v2319 = vpop.f32.mrf.mxu0
      %v2320 = vadd.f32 0.0, %v2319
      %2321 = vdwg.mxu0
      %v2322 = vadd.f32 %v2254, %v2317
      %v2323 = vadd.f32 %v2255, %v2320
      %s2324 = scalar_lea.vmem %s11, 48
      %v2325 = vld [vmem:[%s2324] sm:$0xff]
      %v2326 = vld [vmem:[%s2324 + $0x8] sm:$0xff]
      %v2328 = vsel %vm1436, %v2325, 0
      %v2331 = vsel %vm1436, %v2326, 0
      %2333 = vmatpush.msra.mxu0 0.0
      %2334 = vmatpush.msra.mxu0 0.0
      %2335 = vmatpush.msra.mxu0 0.0
      %2336 = vmatpush.msra.mxu0 0.0
      %2337 = vmatpush.msra.mxu0 0.0
      %2338 = vmatpush.msra.mxu0 0.0
      %2339 = vmatpush.msra.mxu0 0.0
      %2340 = vmatpush.msra.mxu0 0.0
      %2341 = vmatpush.msra.mxu0 0.0
      %2342 = vmatpush.msra.mxu0 0.0
      %2343 = vmatpush.msra.mxu0 0.0
      %2344 = vmatpush.msra.mxu0 0.0
      %2345 = vmatpush.msra.mxu0 0.0
      %2346 = vmatpush.msra.mxu0 0.0
      %2347 = vmatpush.msra.mxu0 %v2116
      %2348 = vmatpush.msra.mxu0 %v2115
      %2349 = vmatmul.f32.gmra.mxu0 %v2328
      %v2350 = vpop.f32.mrf.mxu0
      %v2351 = vadd.f32 0.0, %v2350
      %2352 = vmatmul.f32.gmra.mxu0 %v2331
      %v2353 = vpop.f32.mrf.mxu0
      %v2354 = vadd.f32 0.0, %v2353
      %2355 = vdwg.mxu0
      %s2356 = scalar_lea.vmem %s12, 96
      %v2357 = vld [vmem:[%s2356] sm:$0xff]
      %v2358 = vld [vmem:[%s2356 + $0x8] sm:$0xff]
      %v2359 = vld [vmem:[%s2356 + $0x10] sm:$0xff]
      %v2360 = vld [vmem:[%s2356 + $0x18] sm:$0xff]
      %v2362 = vsel %vm2153, %v2351, 0
      %v2365 = vsel %vm2153, %v2354, 0
      %2367 = vmatpush.msra.mxu0 0.0
      %2368 = vmatpush.msra.mxu0 0.0
      %2369 = vmatpush.msra.mxu0 0.0
      %2370 = vmatpush.msra.mxu0 0.0
      %2371 = vmatpush.msra.mxu0 0.0
      %2372 = vmatpush.msra.mxu0 0.0
      %2373 = vmatpush.msra.mxu0 0.0
      %2374 = vmatpush.msra.mxu0 0.0
      %2375 = vmatpush.msra.mxu0 0.0
      %2376 = vmatpush.msra.mxu0 0.0
      %2377 = vmatpush.msra.mxu0 0.0
      %2378 = vmatpush.msra.mxu0 0.0
      %2379 = vmatpush.msra.mxu0 %v2360
      %2380 = vmatpush.msra.mxu0 %v2359
      %2381 = vmatpush.msra.mxu0 %v2358
      %2382 = vmatpush.msra.mxu0 %v2357
      %2383 = vmatmul.f32.gmra.mxu0 %v2362
      %v2384 = vpop.f32.mrf.mxu0
      %v2385 = vadd.f32 0.0, %v2384
      %2386 = vmatmul.f32.gmra.mxu0 %v2365
      %v2387 = vpop.f32.mrf.mxu0
      %v2388 = vadd.f32 0.0, %v2387
      %2389 = vdwg.mxu0
      %v2390 = vadd.f32 %v2322, %v2385
      %v2391 = vadd.f32 %v2323, %v2388
      %v2392 = vmax.f32 %v2390, 0.0
      %v2393 = vmax.f32 %v2391, 0.0
      %v2394 = vld [vmem:[%s18] sm:$0x1]
      %v2395 = vld [vmem:[%s14] sm:$0x3]
      %v2397 = vsel %vm1436, %v2395, 0
      %2399 = vmatpush.msra.mxu0 0.0
      %2400 = vmatpush.msra.mxu0 0.0
      %2401 = vmatpush.msra.mxu0 0.0
      %2402 = vmatpush.msra.mxu0 0.0
      %2403 = vmatpush.msra.mxu0 0.0
      %2404 = vmatpush.msra.mxu0 0.0
      %2405 = vmatpush.msra.mxu0 0.0
      %2406 = vmatpush.msra.mxu0 0.0
      %2407 = vmatpush.msra.mxu0 0.0
      %2408 = vmatpush.msra.mxu0 0.0
      %2409 = vmatpush.msra.mxu0 0.0
      %2410 = vmatpush.msra.mxu0 0.0
      %2411 = vmatpush.msra.mxu0 0.0
      %2412 = vmatpush.msra.mxu0 0.0
      %2413 = vmatpush.msra.mxu0 %v2393
      %2414 = vmatpush.msra.mxu0 %v2392
      %2415 = vmatmul.f32.gmra.mxu0 %v2397
      %v2416 = vpop.f32.mrf.mxu0
      %v2417 = vadd.f32 0.0, %v2416
      %2418 = vdwg.mxu0
      %s2419 = scalar_lea.vmem %s14, 2
      %v2420 = vld [vmem:[%s2419] sm:$0x3]
      %v2422 = vsel %vm1436, %v2420, 0
      %2424 = vmatpush.msra.mxu0 0.0
      %2425 = vmatpush.msra.mxu0 0.0
      %2426 = vmatpush.msra.mxu0 0.0
      %2427 = vmatpush.msra.mxu0 0.0
      %2428 = vmatpush.msra.mxu0 0.0
      %2429 = vmatpush.msra.mxu0 0.0
      %2430 = vmatpush.msra.mxu0 0.0
      %2431 = vmatpush.msra.mxu0 0.0
      %2432 = vmatpush.msra.mxu0 0.0
      %2433 = vmatpush.msra.mxu0 0.0
      %2434 = vmatpush.msra.mxu0 0.0
      %2435 = vmatpush.msra.mxu0 0.0
      %2436 = vmatpush.msra.mxu0 0.0
      %2437 = vmatpush.msra.mxu0 0.0
      %2438 = vmatpush.msra.mxu0 %v2393
      %2439 = vmatpush.msra.mxu0 %v2392
      %2440 = vmatmul.f32.gmra.mxu0 %v2422
      %v2441 = vpop.f32.mrf.mxu0
      %v2442 = vadd.f32 0.0, %v2441
      %2443 = vdwg.mxu0
      %v2444 = vmax.f32 %v2417, %v2442
      %s2445 = scalar_lea.vmem %s14, 4
      %v2446 = vld [vmem:[%s2445] sm:$0x3]
      %v2448 = vsel %vm1436, %v2446, 0
      %2450 = vmatpush.msra.mxu0 0.0
      %2451 = vmatpush.msra.mxu0 0.0
      %2452 = vmatpush.msra.mxu0 0.0
      %2453 = vmatpush.msra.mxu0 0.0
      %2454 = vmatpush.msra.mxu0 0.0
      %2455 = vmatpush.msra.mxu0 0.0
      %2456 = vmatpush.msra.mxu0 0.0
      %2457 = vmatpush.msra.mxu0 0.0
      %2458 = vmatpush.msra.mxu0 0.0
      %2459 = vmatpush.msra.mxu0 0.0
      %2460 = vmatpush.msra.mxu0 0.0
      %2461 = vmatpush.msra.mxu0 0.0
      %2462 = vmatpush.msra.mxu0 0.0
      %2463 = vmatpush.msra.mxu0 0.0
      %2464 = vmatpush.msra.mxu0 %v2393
      %2465 = vmatpush.msra.mxu0 %v2392
      %2466 = vmatmul.f32.gmra.mxu0 %v2448
      %v2467 = vpop.f32.mrf.mxu0
      %v2468 = vadd.f32 0.0, %v2467
      %2469 = vdwg.mxu0
      %v2470 = vmax.f32 %v2444, %v2468
      %s2471 = scalar_lea.vmem %s14, 6
      %v2472 = vld [vmem:[%s2471] sm:$0x3]
      %v2474 = vsel %vm1436, %v2472, 0
      %2476 = vmatpush.msra.mxu0 0.0
      %2477 = vmatpush.msra.mxu0 0.0
      %2478 = vmatpush.msra.mxu0 0.0
      %2479 = vmatpush.msra.mxu0 0.0
      %2480 = vmatpush.msra.mxu0 0.0
      %2481 = vmatpush.msra.mxu0 0.0
      %2482 = vmatpush.msra.mxu0 0.0
      %2483 = vmatpush.msra.mxu0 0.0
      %2484 = vmatpush.msra.mxu0 0.0
      %2485 = vmatpush.msra.mxu0 0.0
      %2486 = vmatpush.msra.mxu0 0.0
      %2487 = vmatpush.msra.mxu0 0.0
      %2488 = vmatpush.msra.mxu0 0.0
      %2489 = vmatpush.msra.mxu0 0.0
      %2490 = vmatpush.msra.mxu0 %v2393
      %2491 = vmatpush.msra.mxu0 %v2392
      %2492 = vmatmul.f32.gmra.mxu0 %v2474
      %v2493 = vpop.f32.mrf.mxu0
      %v2494 = vadd.f32 0.0, %v2493
      %2495 = vdwg.mxu0
      %v2496 = vmax.f32 %v2470, %v2494
      %v2497 = vld [vmem:[%s15] sm:$0x1]
      %v2499 = vperm.slane %v2497, 0
      %v2501 = vmul.f32 %v2496, %v2499
      %v2502 = vld [vmem:[%s16] sm:$0x1]
      %v2504 = vperm.slane %v2502, 0
      %v2506 = vadd.f32 %v2501, %v2504
      %v2507 = vld [vmem:[%s17] sm:$0xff]
      %v2508 = vld [vmem:[%s17 + $0x8] sm:$0xff]
      %v2509 = vld [vmem:[%s17 + $0x10] sm:$0xff]
      %v2510 = vld [vmem:[%s17 + $0x18] sm:$0xff]
      %v2511 = vld [vmem:[%s17 + $0x20] sm:$0xff]
      %v2512 = vld [vmem:[%s17 + $0x28] sm:$0xff]
      %v2513 = vld [vmem:[%s17 + $0x30] sm:$0xff]
      %v2514 = vld [vmem:[%s17 + $0x38] sm:$0xff]
      %v2516 = vsel %vm1973, %v2506, 0
      %2518 = vmatpush.msra.mxu0 0.0
      %2519 = vmatpush.msra.mxu0 0.0
      %2520 = vmatpush.msra.mxu0 0.0
      %2521 = vmatpush.msra.mxu0 0.0
      %2522 = vmatpush.msra.mxu0 0.0
      %2523 = vmatpush.msra.mxu0 0.0
      %2524 = vmatpush.msra.mxu0 0.0
      %2525 = vmatpush.msra.mxu0 0.0
      %2526 = vmatpush.msra.mxu0 %v2514
      %2527 = vmatpush.msra.mxu0 %v2513
      %2528 = vmatpush.msra.mxu0 %v2512
      %2529 = vmatpush.msra.mxu0 %v2511
      %2530 = vmatpush.msra.mxu0 %v2510
      %2531 = vmatpush.msra.mxu0 %v2509
      %2532 = vmatpush.msra.mxu0 %v2508
      %2533 = vmatpush.msra.mxu0 %v2507
      %2534 = vmatmul.f32.gmra.mxu0 %v2516
      %v2535 = vpop.f32.mrf.mxu0
      %v2536 = vadd.f32 0.0, %v2535
      %2537 = vdwg.mxu0
      %v2539 = vperm.slane %v2394, 0
      %v2541 = vadd.f32 %v2539, %v2536
      %s2542 = scalar_lea.vmem %s14, 8
      %v2543 = vld [vmem:[%s2542] sm:$0x3]
      %v2545 = vsel %vm1436, %v2543, 0
      %2547 = vmatpush.msra.mxu0 0.0
      %2548 = vmatpush.msra.mxu0 0.0
      %2549 = vmatpush.msra.mxu0 0.0
      %2550 = vmatpush.msra.mxu0 0.0
      %2551 = vmatpush.msra.mxu0 0.0
      %2552 = vmatpush.msra.mxu0 0.0
      %2553 = vmatpush.msra.mxu0 0.0
      %2554 = vmatpush.msra.mxu0 0.0
      %2555 = vmatpush.msra.mxu0 0.0
      %2556 = vmatpush.msra.mxu0 0.0
      %2557 = vmatpush.msra.mxu0 0.0
      %2558 = vmatpush.msra.mxu0 0.0
      %2559 = vmatpush.msra.mxu0 0.0
      %2560 = vmatpush.msra.mxu0 0.0
      %2561 = vmatpush.msra.mxu0 %v2393
      %2562 = vmatpush.msra.mxu0 %v2392
      %2563 = vmatmul.f32.gmra.mxu0 %v2545
      %v2564 = vpop.f32.mrf.mxu0
      %v2565 = vadd.f32 0.0, %v2564
      %2566 = vdwg.mxu0
      %s2567 = scalar_lea.vmem %s14, 10
      %v2568 = vld [vmem:[%s2567] sm:$0x3]
      %v2570 = vsel %vm1436, %v2568, 0
      %2572 = vmatpush.msra.mxu0 0.0
      %2573 = vmatpush.msra.mxu0 0.0
      %2574 = vmatpush.msra.mxu0 0.0
      %2575 = vmatpush.msra.mxu0 0.0
      %2576 = vmatpush.msra.mxu0 0.0
      %2577 = vmatpush.msra.mxu0 0.0
      %2578 = vmatpush.msra.mxu0 0.0
      %2579 = vmatpush.msra.mxu0 0.0
      %2580 = vmatpush.msra.mxu0 0.0
      %2581 = vmatpush.msra.mxu0 0.0
      %2582 = vmatpush.msra.mxu0 0.0
      %2583 = vmatpush.msra.mxu0 0.0
      %2584 = vmatpush.msra.mxu0 0.0
      %2585 = vmatpush.msra.mxu0 0.0
      %2586 = vmatpush.msra.mxu0 %v2393
      %2587 = vmatpush.msra.mxu0 %v2392
      %2588 = vmatmul.f32.gmra.mxu0 %v2570
      %v2589 = vpop.f32.mrf.mxu0
      %v2590 = vadd.f32 0.0, %v2589
      %2591 = vdwg.mxu0
      %v2592 = vmax.f32 %v2565, %v2590
      %s2593 = scalar_lea.vmem %s14, 12
      %v2594 = vld [vmem:[%s2593] sm:$0x3]
      %v2596 = vsel %vm1436, %v2594, 0
      %2598 = vmatpush.msra.mxu0 0.0
      %2599 = vmatpush.msra.mxu0 0.0
      %2600 = vmatpush.msra.mxu0 0.0
      %2601 = vmatpush.msra.mxu0 0.0
      %2602 = vmatpush.msra.mxu0 0.0
      %2603 = vmatpush.msra.mxu0 0.0
      %2604 = vmatpush.msra.mxu0 0.0
      %2605 = vmatpush.msra.mxu0 0.0
      %2606 = vmatpush.msra.mxu0 0.0
      %2607 = vmatpush.msra.mxu0 0.0
      %2608 = vmatpush.msra.mxu0 0.0
      %2609 = vmatpush.msra.mxu0 0.0
      %2610 = vmatpush.msra.mxu0 0.0
      %2611 = vmatpush.msra.mxu0 0.0
      %2612 = vmatpush.msra.mxu0 %v2393
      %2613 = vmatpush.msra.mxu0 %v2392
      %2614 = vmatmul.f32.gmra.mxu0 %v2596
      %v2615 = vpop.f32.mrf.mxu0
      %v2616 = vadd.f32 0.0, %v2615
      %2617 = vdwg.mxu0
      %v2618 = vmax.f32 %v2592, %v2616
      %s2619 = scalar_lea.vmem %s14, 14
      %v2620 = vld [vmem:[%s2619] sm:$0x3]
      %v2622 = vsel %vm1436, %v2620, 0
      %2624 = vmatpush.msra.mxu0 0.0
      %2625 = vmatpush.msra.mxu0 0.0
      %2626 = vmatpush.msra.mxu0 0.0
      %2627 = vmatpush.msra.mxu0 0.0
      %2628 = vmatpush.msra.mxu0 0.0
      %2629 = vmatpush.msra.mxu0 0.0
      %2630 = vmatpush.msra.mxu0 0.0
      %2631 = vmatpush.msra.mxu0 0.0
      %2632 = vmatpush.msra.mxu0 0.0
      %2633 = vmatpush.msra.mxu0 0.0
      %2634 = vmatpush.msra.mxu0 0.0
      %2635 = vmatpush.msra.mxu0 0.0
      %2636 = vmatpush.msra.mxu0 0.0
      %2637 = vmatpush.msra.mxu0 0.0
      %2638 = vmatpush.msra.mxu0 %v2393
      %2639 = vmatpush.msra.mxu0 %v2392
      %2640 = vmatmul.f32.gmra.mxu0 %v2622
      %v2641 = vpop.f32.mrf.mxu0
      %v2642 = vadd.f32 0.0, %v2641
      %2643 = vdwg.mxu0
      %v2644 = vmax.f32 %v2618, %v2642
      %v2645 = vmul.f32 %v2644, %v2499
      %v2646 = vadd.f32 %v2645, %v2504
      %s2647 = scalar_lea.vmem %s17, 64
      %v2648 = vld [vmem:[%s2647] sm:$0xff]
      %v2649 = vld [vmem:[%s2647 + $0x8] sm:$0xff]
      %v2650 = vld [vmem:[%s2647 + $0x10] sm:$0xff]
      %v2651 = vld [vmem:[%s2647 + $0x18] sm:$0xff]
      %v2652 = vld [vmem:[%s2647 + $0x20] sm:$0xff]
      %v2653 = vld [vmem:[%s2647 + $0x28] sm:$0xff]
      %v2654 = vld [vmem:[%s2647 + $0x30] sm:$0xff]
      %v2655 = vld [vmem:[%s2647 + $0x38] sm:$0xff]
      %v2657 = vsel %vm1973, %v2646, 0
      %2659 = vmatpush.msra.mxu0 0.0
      %2660 = vmatpush.msra.mxu0 0.0
      %2661 = vmatpush.msra.mxu0 0.0
      %2662 = vmatpush.msra.mxu0 0.0
      %2663 = vmatpush.msra.mxu0 0.0
      %2664 = vmatpush.msra.mxu0 0.0
      %2665 = vmatpush.msra.mxu0 0.0
      %2666 = vmatpush.msra.mxu0 0.0
      %2667 = vmatpush.msra.mxu0 %v2655
      %2668 = vmatpush.msra.mxu0 %v2654
      %2669 = vmatpush.msra.mxu0 %v2653
      %2670 = vmatpush.msra.mxu0 %v2652
      %2671 = vmatpush.msra.mxu0 %v2651
      %2672 = vmatpush.msra.mxu0 %v2650
      %2673 = vmatpush.msra.mxu0 %v2649
      %2674 = vmatpush.msra.mxu0 %v2648
      %2675 = vmatmul.f32.gmra.mxu0 %v2657
      %v2676 = vpop.f32.mrf.mxu0
      %v2677 = vadd.f32 0.0, %v2676
      %2678 = vdwg.mxu0
      %v2679 = vadd.f32 %v2541, %v2677
      %v2680 = vmax.f32 %v2679, 0.0
      %v2681 = vld [vmem:[%s19] sm:$0xff]
      %v2682 = vld [vmem:[%s19 + $0x8] sm:$0xff]
      %v2683 = vld [vmem:[%s19 + $0x10] sm:$0xff]
      %v2684 = vld [vmem:[%s19 + $0x18] sm:$0xff]
      %v2685 = vld [vmem:[%s19 + $0x20] sm:$0xff]
      %v2686 = vld [vmem:[%s19 + $0x28] sm:$0xff]
      %v2687 = vld [vmem:[%s19 + $0x30] sm:$0xff]
      %v2688 = vld [vmem:[%s19 + $0x38] sm:$0xff]
      %v2689 = vld [vmem:[%s19 + $0x40] sm:$0xff]
      %v2690 = vld [vmem:[%s19 + $0x48] sm:$0xff]
      %v2691 = vld [vmem:[%s19 + $0x50] sm:$0xff]
      %v2692 = vld [vmem:[%s19 + $0x58] sm:$0xff]
      %v2693 = vld [vmem:[%s19 + $0x60] sm:$0xf]
      %v2694 = vld [vmem:[%s20] sm:$0x1]
      %v2696 = vperm.slane %v2694, 0
      %vm2698 = vcmask 818176
      %v2700 = vsel %vm2698, %v2680, 0
      %vm2702 = vcmask 1043456
      %v2704 = vsel %vm2702, %v2693, 0
      %2706 = vmatpush.msra.mxu0 0.0
      %2707 = vmatpush.msra.mxu0 0.0
      %2708 = vmatpush.msra.mxu0 0.0
      %2709 = vmatpush.msra.mxu0 %v2704
      %2710 = vmatpush.msra.mxu0 %v2692
      %2711 = vmatpush.msra.mxu0 %v2691
      %2712 = vmatpush.msra.mxu0 %v2690
      %2713 = vmatpush.msra.mxu0 %v2689
      %2714 = vmatpush.msra.mxu0 %v2688
      %2715 = vmatpush.msra.mxu0 %v2687
      %2716 = vmatpush.msra.mxu0 %v2686
      %2717 = vmatpush.msra.mxu0 %v2685
      %2718 = vmatpush.msra.mxu0 %v2684
      %2719 = vmatpush.msra.mxu0 %v2683
      %2720 = vmatpush.msra.mxu0 %v2682
      %2721 = vmatpush.msra.mxu0 %v2681
      %2722 = vmatmul.f32.gmra.mxu0 %v2700
      %v2723 = vpop.f32.mrf.mxu0
      %v2724 = vadd.f32 %v2696, %v2723
      %2725 = vdwg.mxu0
      %v2726 = vsub.f32 0.0, %v2724
      %v2727 = vmul.f32 %v2726, 1.442695
      %v2728 = vpow.pop %v2727
      %v2729 = vadd.f32 %v2728, 1.0
      %v2730 = vrcp.pop %v2729
      %v2731 = vmul.f32 %v2729, %v2730
      %v2732 = vsub.f32 1.0, %v2731
      %v2733 = vmul.f32 %v2730, %v2732
      %v2734 = vadd.f32 %v2730, %v2733
      %vm2735 = vweird.f32 %v2729
      %vm2736 = vweird.f32 %v2730
      %vm2737 = vmor %vm2735, %vm2736
      %v2738 = vsel %vm2737, %v2730, %v2734
      %v2739 = vand.u32 2147483647, %v2729
      %vm2740 = vcmp.eq.f32.partialorder %v2739, 8.507059e+37
      %v2741 = vand.u32 %v2729, 2147483648
      %v2742 = vor.u32 1.1754944e-38, %v2741
      %v2743 = vsel %vm2740, %v2742, %v2738
      %v2744 = vmul.f32 1.0, %v2743
      %v2745 = vld [vmem:[%s21] sm:$0xff]
      %v2746 = vld [vmem:[%s21 + $0x8] sm:$0xff]
      %v2747 = vld [vmem:[%s21 + $0x10] sm:$0xff]
      %v2748 = vld [vmem:[%s21 + $0x18] sm:$0xff]
      %v2749 = vld [vmem:[%s21 + $0x20] sm:$0xff]
      %v2750 = vld [vmem:[%s21 + $0x28] sm:$0xff]
      %v2751 = vld [vmem:[%s21 + $0x30] sm:$0xff]
      %v2752 = vld [vmem:[%s21 + $0x38] sm:$0xff]
      %v2753 = vld [vmem:[%s21 + $0x40] sm:$0xff]
      %v2754 = vld [vmem:[%s21 + $0x48] sm:$0xff]
      %v2755 = vld [vmem:[%s21 + $0x50] sm:$0xff]
      %v2756 = vld [vmem:[%s21 + $0x58] sm:$0xff]
      %v2757 = vld [vmem:[%s21 + $0x60] sm:$0xf]
      %v2758 = vld [vmem:[%s22] sm:$0x1]
      %v2760 = vperm.slane %v2758, 0
      %v2763 = vsel %vm2698, %v2744, 0
      %v2766 = vsel %vm2702, %v2757, 0
      %2768 = vmatpush.msra.mxu0 0.0
      %2769 = vmatpush.msra.mxu0 0.0
      %2770 = vmatpush.msra.mxu0 0.0
      %2771 = vmatpush.msra.mxu0 %v2766
      %2772 = vmatpush.msra.mxu0 %v2756
      %2773 = vmatpush.msra.mxu0 %v2755
      %2774 = vmatpush.msra.mxu0 %v2754
      %2775 = vmatpush.msra.mxu0 %v2753
      %2776 = vmatpush.msra.mxu0 %v2752
      %2777 = vmatpush.msra.mxu0 %v2751
      %2778 = vmatpush.msra.mxu0 %v2750
      %2779 = vmatpush.msra.mxu0 %v2749
      %2780 = vmatpush.msra.mxu0 %v2748
      %2781 = vmatpush.msra.mxu0 %v2747
      %2782 = vmatpush.msra.mxu0 %v2746
      %2783 = vmatpush.msra.mxu0 %v2745
      %2784 = vmatmul.f32.gmra.mxu0 %v2763
      %v2785 = vpop.f32.mrf.mxu0
      %v2786 = vadd.f32 %v2760, %v2785
      %2787 = vdwg.mxu0
      %vm2788 = vcmask 25600
      %2789 = vst.msk [vmem:[%s708] sm:$0x3] %vm2788, %v2786
      %p2790 = scmp.lt.s32.totalorder %s34, 1
      %s2791 = scalar_select %p2790, %s34, 1
      %s2792 = smul.addr %s2791, 2
      %s2793 = scalar_lea.vmem %s23, %s2792
      // Predicated region
      $region113: #{siamese_forward.1} parent=111 // pred_check
        %p2794 = pneg %p540
      $region114: #{siamese_forward.1} parent=111 // pred_check_branch
        %2796 = sbr.rel (%p2794) target = $region116
      $region115: #{siamese_forward.1} parent=111 // pred_region
        _
      $region116: #{siamese_forward.1} parent=111 // pred_fallthru
        _
    $region112: #{siamese_forward.1} parent=5 // pred_fallthru
      _
    %p2797 = scmp.le.s32.totalorder 2, %s29
    // Predicated region
    $region117: #{siamese_forward.1} parent=5 // pred_check
      %p2798 = pneg %p2797
    $region118: #{siamese_forward.1} parent=5 // pred_check_branch
      %2800 = sbr.rel (%p2798) target = $region120
    $region119: #{siamese_forward.1} parent=5 // pred_region
      %s2801 = ssub.s32 %s29, 2
      // Predicated region
      $region121: #{siamese_forward.1} parent=119 // pred_check
        %p2802 = pneg %p546
      $region122: #{siamese_forward.1} parent=119 // pred_check_branch
        %2804 = sbr.rel (%p2802) target = $region124
      $region123: #{siamese_forward.1} parent=119 // pred_region
        %p2805 = scmp.lt.s32.totalorder %s35, 1
        %s2806 = scalar_select %p2805, %s35, 1
        %s2807 = smul.addr %s2806, 2
        %s2808 = scalar_lea.vmem %s23, %s2807
      $region124: #{siamese_forward.1} parent=119 // pred_fallthru
        _
    $region120: #{siamese_forward.1} parent=5 // pred_fallthru
      _
  $region6: #{siamese_forward.1} parent=0 // loop_footer
    %s33 = sadd.s32 1, %s29
  $region7: #{siamese_forward.1} parent=0 // loop_footer_branch
    %28 = sbr.rel target = $region3
  $region8: #{siamese_forward.1} parent=0 // loop_exit
    _

</llo_original>
